<compile_context>
chip_gen: v7x
topology: tpu7x:2x2x1
jax: 0.10.0
libtpu: 0.0.40
codegen_flags: <defaults>
</compile_context>

<pallas_src>
import functools

import jax
import jax.numpy as jnp
from jax.experimental import pallas as pl
from jax.experimental.pallas import tpu as pltpu

F32 = jnp.float32
BF16 = jnp.bfloat16
TQ_MAX = 256          # query-tile rows for attention score tiling


# ---------------------------------------------------------------------------
# helpers
# ---------------------------------------------------------------------------
def _const_spec(shape):
    nd = len(shape)
    return pl.BlockSpec(shape, lambda b, _z=(0,) * nd: _z)
    # TODO(synk): single-buffer these constant-index weight blocks
    # (pipeline_mode=pl.Buffered(1)) once confirmed supported, to save VMEM on v7x.


def _vmem_capacity():
    try:
        return int(pltpu.get_tpu_info().vmem_capacity_bytes)
    except Exception:
        return 64 << 20          # conservative default (v7x per-core VMEM)


def _pick_bt(batch, per_image_bytes, budget_bytes, cap=8):
    """Images per grid step: largest divisor of batch that fits the VMEM budget,
    capped, preferring a grid of >= 2 steps so v7x megacore gets both cores busy."""
    divisors = [d for d in range(1, min(batch, cap) + 1) if batch % d == 0]
    fitting = [d for d in divisors if d * per_image_bytes <= budget_bytes] or [1]
    multi = [d for d in fitting if batch // d >= 2]
    return max(multi) if multi else max(fitting)


def _layernorm(v, g, b, eps):
    mu = jnp.mean(v, axis=-1, keepdims=True)
    var = jnp.mean(jnp.square(v - mu), axis=-1, keepdims=True)
    return (v - mu) * jax.lax.rsqrt(var + eps) * g + b


def _shift2d(a, d, axis):
    """out[i] = a[i + d] along `axis` with zero fill, d in {-1, 0, 1}."""
    if d == 0:
        return a
    shp = list(a.shape)
    shp[axis] = 1
    z = jnp.zeros(shp, a.dtype)
    sl = [slice(None)] * a.ndim
    if d == 1:
        sl[axis] = slice(1, None)
        return jnp.concatenate([a[tuple(sl)], z], axis=axis)
    sl[axis] = slice(None, -1)
    return jnp.concatenate([z, a[tuple(sl)]], axis=axis)


def _dw3x3_residual(x4, w, bias):
    """x + depthwise3x3(x) + bias on an (bt, H, W, C) value (zero padded halo)."""
    acc = jnp.zeros_like(x4)
    for di in (-1, 0, 1):
        xh = _shift2d(x4, di, axis=1)
        for dj in (-1, 0, 1):
            acc = acc + _shift2d(xh, dj, axis=2) * w[di + 1, dj + 1]
    return x4 + acc + bias


# ---------------------------------------------------------------------------
# Kernel 1: fused GlobalBlock  (CPE + LN1 + MHSA + LN2 + MLP)
# ---------------------------------------------------------------------------
def _global_block_kernel(*refs, num_heads, eps, cpe, H, W, q_tile):
    if cpe:
        x_ref, cw_ref, cb_ref = refs[0], refs[1], refs[2]
        refs = refs[3:]
    else:
        x_ref = refs[0]
        refs = refs[1:]
    (n1g_ref, n1b_ref, wqkv_ref, bqkv_ref, wp_ref, bp_ref,
     n2g_ref, n2b_ref, w1_ref, b1_ref, w2_ref, b2_ref, o_ref) = refs

    bt, N, C = o_ref.shape
    nh = num_heads
    hd = C // nh
    M = bt * N
    scale = float(hd) ** -0.5

    x = x_ref[...].astype(F32)                                   # (bt, N, C)

    # ---- conditional positional encoding (depthwise 3x3, in-kernel halo) ----
    if cpe:
        x = _dw3x3_residual(x.reshape(bt, H, W, C),
                            cw_ref[...], cb_ref[0]).reshape(bt, N, C)

    x2 = x.reshape(M, C)                                         # residual stream, f32

    # ---- attention: LN1 -> one lane-dense (M,C)@(C,3C) QKV matmul ----
    xn = _layernorm(x2, n1g_ref[0], n1b_ref[0], eps)
    qkv = jnp.dot(xn.astype(BF16), wqkv_ref[...],
                  preferred_element_type=F32) + bqkv_ref[0]      # (M, 3C) f32
    q3 = (qkv[:, :C] * scale).reshape(bt, N, C)                  # scale kept in f32
    k3 = qkv[:, C:2 * C].reshape(bt, N, C)
    v3 = qkv[:, 2 * C:].reshape(bt, N, C)

    def split_heads(t):   # (bt, N, C) -> (bt*nh, N, hd): lane slices + leading concat
        parts = [t[:, :, h * hd:(h + 1) * hd][:, None] for h in range(nh)]
        return jnp.concatenate(parts, axis=1).reshape(bt * nh, N, hd)

    qh = split_heads(q3).astype(BF16)
    kh = split_heads(k3).astype(BF16)
    vh = split_heads(v3).astype(BF16)

    # query-tiled attention: at most (bt*nh, q_tile, N) scores live at once.
    # TODO(synk): for very large N move KV tiling onto a pipelined grid axis
    # (running max/sum) instead of this static in-kernel q-tile loop.
    ctx_parts = []
    for qs in range(0, N, q_tile):
        qe = min(qs + q_tile, N)
        s = jnp.einsum("bqd,bkd->bqk", qh[:, qs:qe], kh,
                       preferred_element_type=F32)               # (bt*nh, tq, N)
        s = jnp.exp(s - jnp.max(s, axis=-1, keepdims=True))
        p = s / jnp.sum(s, axis=-1, keepdims=True)               # exact softmax
        ctx_parts.append(jnp.einsum("bqk,bkd->bqd", p.astype(BF16), vh,
                                    preferred_element_type=F32))
    ctx = ctx_parts[0] if len(ctx_parts) == 1 else jnp.concatenate(ctx_parts, axis=1)

    # head merge (lane concat) + single (M,C)@(C,C) output projection
    ctx4 = ctx.reshape(bt, nh, N, hd)
    merged = jnp.concatenate([ctx4[:, h] for h in range(nh)], axis=-1).reshape(M, C)
    x2 = x2 + jnp.dot(merged.astype(BF16), wp_ref[...],
                      preferred_element_type=F32) + bp_ref[0]

    # ---- MLP (tanh-approx GELU -> EUP) ----
    xn2 = _layernorm(x2, n2g_ref[0], n2b_ref[0], eps)
    h1 = jnp.dot(xn2.astype(BF16), w1_ref[...], preferred_element_type=F32) + b1_ref[0]
    h1 = 0.5 * h1 * (1.0 + jnp.tanh(0.7978845608028654 *
                                    (h1 + 0.044715 * h1 * h1 * h1)))
    h2 = jnp.dot(h1.astype(BF16), w2_ref[...], preferred_element_type=F32) + b2_ref[0]

    o_ref[...] = (x2 + h2).reshape(bt, N, C).astype(o_ref.dtype)


def global_block_forward(act, p, *, H, W, num_heads, cpe_per_block, eps=1e-5):
    """act: (B, N, C) flattened-NHWC activation; returns (B, N, C) bf16."""
    B, N, C = act.shape
    assert C % num_heads == 0, "dim must be divisible by num_heads"
    nh = num_heads
    hidden = p["fc1_w"].shape[1]

    wqkv = p["qkv_w"].astype(BF16)                               # (C, 3C)
    bqkv = p.get("qkv_b")
    if bqkv is None:
        bqkv = jnp.zeros((3 * C,), F32)
    bqkv = bqkv.reshape(1, 3 * C).astype(F32)
    wp = p["proj_w"].astype(BF16)
    w1 = p["fc1_w"].astype(BF16)
    w2 = p["fc2_w"].astype(BF16)

    q_tile = N if N <= TQ_MAX else TQ_MAX

    # VMEM budget -> images per grid step (bt); prefer grid >= 2 for v7x megacore.
    vmem_cap = _vmem_capacity()
    weight_bytes = 2 * (3 * C * C + C * C + 2 * C * hidden) + 4 * (8 * C + hidden)
    per_image = (N * C * 10                    # x f32 + io bf16 blocks + residual
                 + N * 3 * C * 4               # qkv f32
                 + 3 * N * C * 2               # q/k/v head-batched bf16
                 + nh * q_tile * N * 4 * 2     # score tile + exp
                 + N * C * 4 * 2               # ctx + merged
                 + N * hidden * 4 * 2)         # MLP hidden
    budget = max(int(0.6 * vmem_cap) - 2 * weight_bytes, per_image)
    bt = _pick_bt(B, per_image, budget)
    vmem_limit = int(min(vmem_cap - (8 << 20),
                         max(16 << 20, 2 * bt * per_image + 2 * weight_bytes
                             + (4 << 20))))

    args = [act.astype(BF16)]
    in_specs = [pl.BlockSpec((bt, N, C), lambda b: (b, 0, 0))]
    if cpe_per_block:
        args += [p["conv_w"], p["conv_b"]]
        in_specs += [_const_spec((3, 3, C)), _const_spec((1, C))]
    args += [p["n1_g"], p["n1_b"], wqkv, bqkv, wp, p["proj_b"],
             p["n2_g"], p["n2_b"], w1, p["fc1_b"], w2, p["fc2_b"]]
    in_specs += [_const_spec((1, C)), _const_spec((1, C)),
                 _const_spec((C, 3 * C)), _const_spec((1, 3 * C)),
                 _const_spec((C, C)), _const_spec((1, C)),
                 _const_spec((1, C)), _const_spec((1, C)),
                 _const_spec((C, hidden)), _const_spec((1, hidden)),
                 _const_spec((hidden, C)), _const_spec((1, C))]

    kernel = functools.partial(_global_block_kernel, num_heads=nh, eps=eps,
                               cpe=cpe_per_block, H=H, W=W, q_tile=q_tile)
    return pl.pallas_call(
        kernel,
        out_shape=jax.ShapeDtypeStruct((B, N, C), BF16),
        grid=(B // bt,),
        in_specs=in_specs,
        out_specs=pl.BlockSpec((bt, N, C), lambda b: (b, 0, 0)),
        compiler_params=pltpu.CompilerParams(
            dimension_semantics=("parallel",),
            vmem_limit_bytes=vmem_limit),
    )(*args)


# ---------------------------------------------------------------------------
# Kernel 2: PatchMerging 'conv3_2' (+ folded eval BN, + fused cpe_per_stage)
# ---------------------------------------------------------------------------
def _patch_merge_kernel(*refs, cpe, Ho, Wo):
    if cpe:
        (xee_ref, xeo_ref, xoe_ref, xoo_ref, w_ref, sc_ref, sh_ref,
         cw_ref, cb_ref, o_ref) = refs
    else:
        (xee_ref, xeo_ref, xoe_ref, xoo_ref, w_ref, sc_ref, sh_ref, o_ref) = refs
    bt, Npm, Cout = o_ref.shape
    Cin = xee_ref.shape[-1]
    M = bt * Npm

    xee, xeo = xee_ref[...], xeo_ref[...]
    xoe, xoo = xoe_ref[...], xoo_ref[...]

    def down(a):   # input row 2*ho-1  -> odd-parity array at index ho-1 (zero pad)
        return _shift2d(a, -1, axis=1)

    def right(a):  # input col 2*wo-1  -> odd-parity array at index wo-1 (zero pad)
        return _shift2d(a, -1, axis=2)

    # 9 stride-2 conv taps rebuilt from the 4 parity planes (no HBM im2col).
    taps = ((0, 0, right(down(xoo))), (0, 1, down(xoe)), (0, 2, down(xoo)),
            (1, 0, right(xeo)),       (1, 1, xee),       (1, 2, xeo),
            (2, 0, right(xoo)),       (2, 1, xoe),       (2, 2, xoo))
    acc = jnp.zeros((M, Cout), F32)
    for ki, kj, t in taps:
        acc = acc + jnp.dot(t.reshape(M, Cin), w_ref[ki, kj],
                            preferred_element_type=F32)
    y = acc * sc_ref[0] + sh_ref[0]            # conv bias + eval-mode BN folded

    if cpe:                                    # fused cpe_per_stage
        y = _dw3x3_residual(y.reshape(bt, Ho, Wo, Cout),
                            cw_ref[...], cb_ref[0]).reshape(M, Cout)

    o_ref[...] = y.reshape(bt, Npm, Cout).astype(o_ref.dtype)


def patch_merging_forward(act, p, *, H, W, cpe_per_stage, bn_eps=1e-5):
    """act: (B, N, Cin) flattened-NHWC; returns (B, Cout, H//2, W//2) NCHW f32."""
    # TODO(synk): only the 'conv3_2' merging way is implemented ('conv2_2'/avgpool not).
    B, N, Cin = act.shape
    assert N == H * W and H % 2 == 0 and W % 2 == 0, "patch merging expects even H, W"
    Cout = p["conv_w"].shape[-1]
    Ho, Wo = H // 2, W // 2
    Npm = Ho * Wo

    x4 = act.reshape(B, H, W, Cin).astype(BF16)
    # even/odd parity split: ~1x activation traffic of layout plumbing (vs 9x im2col)
    xee = x4[:, 0::2, 0::2]
    xeo = x4[:, 0::2, 1::2]
    xoe = x4[:, 1::2, 0::2]
    xoo = x4[:, 1::2, 1::2]

    wmat = p["conv_w"].astype(BF16)                              # (3, 3, Cin, Cout)
    inv = jax.lax.rsqrt(p["bn_var"] + bn_eps)
    scale = (p["bn_gamma"] * inv).reshape(1, Cout).astype(F32)
    shift = (p["bn_beta"] + (p["conv_b"] - p["bn_mean"]) * p["bn_gamma"] * inv
             ).reshape(1, Cout).astype(F32)

    vmem_cap = _vmem_capacity()
    per_image = 9 * Npm * Cin * 2 * 2 + Npm * Cout * 4 * 4
    bt = _pick_bt(B, per_image, int(0.5 * vmem_cap))

    args = [xee, xeo, xoe, xoo, wmat, scale, shift]
    par_spec = pl.BlockSpec((bt, Ho, Wo, Cin), lambda b: (b, 0, 0, 0))
    in_specs = [par_spec, par_spec, par_spec, par_spec,
                _const_spec((3, 3, Cin, Cout)),
                _const_spec((1, Cout)), _const_spec((1, Cout))]
    if cpe_per_stage:
        args += [p["cpe_w"], p["cpe_b"]]
        in_specs += [_const_spec((3, 3, Cout)), _const_spec((1, Cout))]

    y = pl.pallas_call(
        functools.partial(_patch_merge_kernel, cpe=cpe_per_stage, Ho=Ho, Wo=Wo),
        out_shape=jax.ShapeDtypeStruct((B, Npm, Cout), F32),
        grid=(B // bt,),
        in_specs=in_specs,
        out_specs=pl.BlockSpec((bt, Npm, Cout), lambda b: (b, 0, 0)),
        compiler_params=pltpu.CompilerParams(
            dimension_semantics=("parallel",),
            vmem_limit_bytes=int(max(16 << 20, min(vmem_cap - (8 << 20), 32 << 20)))),
    )(*args)
    return jnp.transpose(y.reshape(B, Ho, Wo, Cout), (0, 3, 1, 2))


# ---------------------------------------------------------------------------
# Globalstage wrapper
# ---------------------------------------------------------------------------
def globalstage_forward(x_nchw, params, *, num_heads, cpe_per_block=True,
                        cpe_per_stage=False, downsample=True, eps=1e-5):
    B, C, H, W = x_nchw.shape
    # single NCHW -> flattened-NHWC conversion for the whole stage; activations stay
    # (B, N, C) bf16 between the fused block kernels (no per-block transpose / pad).
    act = jnp.transpose(x_nchw, (0, 2, 3, 1)).reshape(B, H * W, C).astype(BF16)
    for blk in params["blocks"]:
        act = global_block_forward(act, blk, H=H, W=W, num_heads=num_heads,
                                   cpe_per_block=cpe_per_block, eps=eps)
    if downsample:
        return patch_merging_forward(act, params["downsample"], H=H, W=W,
                                     cpe_per_stage=cpe_per_stage)
    y = act.astype(x_nchw.dtype).reshape(B, H, W, C)
    return jnp.transpose(y, (0, 3, 1, 2))


# ---------------------------------------------------------------------------
# Plain-JAX reference (independent conv path via lax.conv) for correctness
# ---------------------------------------------------------------------------
def _reference_block(x, p, *, num_heads, cpe_per_block, eps=1e-5):
    B, C, H, W = x.shape
    if cpe_per_block:
        w = jnp.transpose(p["conv_w"], (2, 0, 1))[:, None, :, :]
        pe = jax.lax.conv_general_dilated(
            x, w, window_strides=(1, 1), padding=((1, 1), (1, 1)),
            dimension_numbers=("NCHW", "OIHW", "NCHW"), feature_group_count=C)
        x = x + pe + p["conv_b"][0][None, :, None, None]

    N, nh = H * W, num_heads
    hd = C // nh

    def ln(v, g, b):
        mu = v.mean(-1, keepdims=True)
        var = ((v - mu) ** 2).mean(-1, keepdims=True)
        return (v - mu) / jnp.sqrt(var + eps) * g[0] + b[0]

    xs = jnp.transpose(x, (0, 2, 3, 1)).reshape(B, N, C)
    xn = ln(xs, p["n1_g"], p["n1_b"])
    qkv_b = p.get("qkv_b")
    if qkv_b is None:
        qkv_b = jnp.zeros((3 * C,), F32)
    qkv = xn @ p["qkv_w"] + qkv_b
    qkv = qkv.reshape(B, N, 3, nh, hd).transpose(2, 0, 3, 1, 4)
    q, k, v = qkv[0], qkv[1], qkv[2]
    att = jnp.einsum("bhnd,bhmd->bhnm", q, k) * (hd ** -0.5)
    att = jax.nn.softmax(att, axis=-1)
    o = jnp.einsum("bhnm,bhmd->bhnd", att, v).transpose(0, 2, 1, 3).reshape(B, N, C)
    xs = xs + o @ p["proj_w"] + p["proj_b"][0]
    xn2 = ln(xs, p["n2_g"], p["n2_b"])
    h1 = xn2 @ p["fc1_w"] + p["fc1_b"][0]
    h1 = 0.5 * h1 * (1.0 + jax.lax.erf(h1 * 0.7071067811865476))
    xs = xs + (h1 @ p["fc2_w"] + p["fc2_b"][0])
    return jnp.transpose(xs.reshape(B, H, W, C), (0, 3, 1, 2))


def _reference_merge(x, p, *, cpe_per_stage, bn_eps=1e-5):
    w = jnp.transpose(p["conv_w"], (3, 2, 0, 1))
    y = jax.lax.conv_general_dilated(
        x, w, window_strides=(2, 2), padding=((1, 1), (1, 1)),
        dimension_numbers=("NCHW", "OIHW", "NCHW"))
    y = y + p["conv_b"][None, :, None, None]
    s = (p["bn_gamma"] / jnp.sqrt(p["bn_var"] + bn_eps))[None, :, None, None]
    y = (y - p["bn_mean"][None, :, None, None]) * s + p["bn_beta"][None, :, None, None]
    if cpe_per_stage:
        Cout = y.shape[1]
        wc = jnp.transpose(p["cpe_w"], (2, 0, 1))[:, None, :, :]
        pe = jax.lax.conv_general_dilated(
            y, wc, window_strides=(1, 1), padding=((1, 1), (1, 1)),
            dimension_numbers=("NCHW", "OIHW", "NCHW"), feature_group_count=Cout)
        y = y + pe + p["cpe_b"][0][None, :, None, None]
    return y


def reference_globalstage(x, params, *, num_heads, cpe_per_block=True,
                          cpe_per_stage=False, downsample=True, eps=1e-5):
    for blk in params["blocks"]:
        x = _reference_block(x, blk, num_heads=num_heads,
                             cpe_per_block=cpe_per_block, eps=eps)
    if downsample:
        x = _reference_merge(x, params["downsample"], cpe_per_stage=cpe_per_stage)
    return x


# ---------------------------------------------------------------------------
# main
# ---------------------------------------------------------------------------
if __name__ == "__main__":
    B, C, H, W = 2, 32, 8, 8
    depth, num_heads, mlp_ratio = 2, 4, 4.0
    hidden = int(C * mlp_ratio)
    Cout = 2 * C

    keys = iter(jax.random.split(jax.random.PRNGKey(0), 64))

    def nrm(shape, s=0.05):
        return s * jax.random.normal(next(keys), shape, F32)

    blocks = []
    for _ in range(depth):
        blocks.append({
            "conv_w": nrm((3, 3, C), 0.1),     # torch dwconv w[c,0,i,j] stored as [i,j,c]
            "conv_b": nrm((1, C), 0.1),
            "n1_g": 1.0 + nrm((1, C), 0.1),
            "n1_b": nrm((1, C), 0.1),
            "qkv_w": nrm((C, 3 * C)),          # torch Linear weight, pre-transposed
            "qkv_b": nrm((3 * C,)),            # Globalstage default qkv_bias=True
            "proj_w": nrm((C, C)),
            "proj_b": nrm((1, C)),
            "n2_g": 1.0 + nrm((1, C), 0.1),
            "n2_b": nrm((1, C), 0.1),
            "fc1_w": nrm((C, hidden)),
            "fc1_b": nrm((1, hidden)),
            "fc2_w": nrm((hidden, C)),
            "fc2_b": nrm((1, C)),
        })
    downsample = {
        "conv_w": nrm((3, 3, C, Cout)),        # torch conv w[o,i,kh,kw] stored as [kh,kw,i,o]
        "conv_b": nrm((Cout,), 0.1),
        "bn_gamma": 1.0 + nrm((Cout,), 0.1),
        "bn_beta": nrm((Cout,), 0.1),
        "bn_mean": nrm((Cout,), 0.1),
        "bn_var": 1.0 + 0.1 * jnp.abs(jax.random.normal(next(keys), (Cout,), F32)),
        "cpe_w": nrm((3, 3, Cout), 0.1),
        "cpe_b": nrm((1, Cout), 0.1),
    }
    params = {"blocks": blocks, "downsample": downsample}

    x = jax.random.normal(next(keys), (B, C, H, W), F32)

    fwd = jax.jit(functools.partial(globalstage_forward, num_heads=num_heads,
                                    cpe_per_block=True, cpe_per_stage=True,
                                    downsample=True))
    out = jax.block_until_ready(fwd(x, params))

    ref = reference_globalstage(x, params, num_heads=num_heads,
                                cpe_per_block=True, cpe_per_stage=True,
                                downsample=True)
    assert out.shape == (B, Cout, H // 2, W // 2), out.shape
    err_max = float(jnp.max(jnp.abs(out - ref)))
    err_mean = float(jnp.mean(jnp.abs(out - ref)))
    # bf16 MXU operands + bf16 inter-block activations + tanh-approx GELU
    assert err_max < 1e-1 and err_mean < 2.5e-2, f"max {err_max}, mean {err_mean}"
    print("KERNEL_OK")
</pallas_src>

<mosaic_0001>
module attributes {stable_mosaic.version = 11 : i64} {
  func.func @_global_block_kernel(%arg0: i32, %arg1: memref<1x64x32xbf16, #tpu.memory_space<vmem>>, %arg2: memref<3x3x32xf32, #tpu.memory_space<vmem>>, %arg3: memref<1x32xf32, #tpu.memory_space<vmem>>, %arg4: memref<1x32xf32, #tpu.memory_space<vmem>>, %arg5: memref<1x32xf32, #tpu.memory_space<vmem>>, %arg6: memref<32x96xbf16, #tpu.memory_space<vmem>>, %arg7: memref<1x96xf32, #tpu.memory_space<vmem>>, %arg8: memref<32x32xbf16, #tpu.memory_space<vmem>>, %arg9: memref<1x32xf32, #tpu.memory_space<vmem>>, %arg10: memref<1x32xf32, #tpu.memory_space<vmem>>, %arg11: memref<1x32xf32, #tpu.memory_space<vmem>>, %arg12: memref<32x128xbf16, #tpu.memory_space<vmem>>, %arg13: memref<1x128xf32, #tpu.memory_space<vmem>>, %arg14: memref<128x32xbf16, #tpu.memory_space<vmem>>, %arg15: memref<1x32xf32, #tpu.memory_space<vmem>>, %arg16: memref<1x64x32xbf16, #tpu.memory_space<vmem>>) attributes {dimension_semantics = [#tpu.dimension_semantics<parallel>], iteration_bounds = array<i64: 2>, scalar_prefetch = 0 : i64, scratch_operands = 0 : i64, tpu.core_type = #tpu.core_type<tc>, window_params = [{transform_indices = @transform_0, window_bounds = array<i64: 1, 64, 32>}, {pipeline_mode = #tpu.pipeline_mode<synchronous>, transform_indices = @transform_1, window_bounds = array<i64: 3, 3, 32>}, {pipeline_mode = #tpu.pipeline_mode<synchronous>, transform_indices = @transform_2, window_bounds = array<i64: 1, 32>}, {pipeline_mode = #tpu.pipeline_mode<synchronous>, transform_indices = @transform_3, window_bounds = array<i64: 1, 32>}, {pipeline_mode = #tpu.pipeline_mode<synchronous>, transform_indices = @transform_4, window_bounds = array<i64: 1, 32>}, {pipeline_mode = #tpu.pipeline_mode<synchronous>, transform_indices = @transform_5, window_bounds = array<i64: 32, 96>}, {pipeline_mode = #tpu.pipeline_mode<synchronous>, transform_indices = @transform_6, window_bounds = array<i64: 1, 96>}, {pipeline_mode = #tpu.pipeline_mode<synchronous>, transform_indices = @transform_7, window_bounds = array<i64: 32, 32>}, {pipeline_mode = #tpu.pipeline_mode<synchronous>, transform_indices = @transform_8, window_bounds = array<i64: 1, 32>}, {pipeline_mode = #tpu.pipeline_mode<synchronous>, transform_indices = @transform_9, window_bounds = array<i64: 1, 32>}, {pipeline_mode = #tpu.pipeline_mode<synchronous>, transform_indices = @transform_10, window_bounds = array<i64: 1, 32>}, {pipeline_mode = #tpu.pipeline_mode<synchronous>, transform_indices = @transform_11, window_bounds = array<i64: 32, 128>}, {pipeline_mode = #tpu.pipeline_mode<synchronous>, transform_indices = @transform_12, window_bounds = array<i64: 1, 128>}, {pipeline_mode = #tpu.pipeline_mode<synchronous>, transform_indices = @transform_13, window_bounds = array<i64: 128, 32>}, {pipeline_mode = #tpu.pipeline_mode<synchronous>, transform_indices = @transform_14, window_bounds = array<i64: 1, 32>}, {transform_indices = @transform_15, window_bounds = array<i64: 1, 64, 32>}]} {
    %c0 = arith.constant 0 : index
    %c0_0 = arith.constant 0 : index
    %c0_1 = arith.constant 0 : index
    %0 = vector.load %arg1[%c0, %c0_0, %c0_1] : memref<1x64x32xbf16, #tpu.memory_space<vmem>>, vector<1x64x32xbf16>
    %1 = arith.extf %0 : vector<1x64x32xbf16> to vector<1x64x32xf32>
    %2 = vector.shape_cast %1 : vector<1x64x32xf32> to vector<1x8x8x32xf32>
    %c0_2 = arith.constant 0 : index
    %c0_3 = arith.constant 0 : index
    %c0_4 = arith.constant 0 : index
    %3 = vector.load %arg2[%c0_2, %c0_3, %c0_4] : memref<3x3x32xf32, #tpu.memory_space<vmem>>, vector<3x3x32xf32>
    %c0_5 = arith.constant 0 : index
    %c0_6 = arith.constant 0 : index
    %4 = vector.load %arg3[%c0_5, %c0_6] : memref<1x32xf32, #tpu.memory_space<vmem>>, vector<1x32xf32>
    %5 = vector.shape_cast %4 : vector<1x32xf32> to vector<32xf32>
    %cst = arith.constant 0.000000e+00 : f32
    %6 = vector.broadcast %cst : f32 to vector<1x8x8x32xf32>
    %cst_7 = arith.constant 0.000000e+00 : f32
    %7 = vector.broadcast %cst_7 : f32 to vector<1x1x8x32xf32>
    %8 = vector.extract_strided_slice %2 {offsets = [0, 0, 0, 0], sizes = [1, 7, 8, 32], strides = [1, 1, 1, 1]} : vector<1x8x8x32xf32> to vector<1x7x8x32xf32>
    %9 = tpu.concatenate %7, %8 in 1 : vector<1x1x8x32xf32>, vector<1x7x8x32xf32> -> vector<1x8x8x32xf32>
    %cst_8 = arith.constant 0.000000e+00 : f32
    %10 = vector.broadcast %cst_8 : f32 to vector<1x8x1x32xf32>
    %11 = vector.extract_strided_slice %9 {offsets = [0, 0, 0, 0], sizes = [1, 8, 7, 32], strides = [1, 1, 1, 1]} : vector<1x8x8x32xf32> to vector<1x8x7x32xf32>
    %12 = tpu.concatenate %10, %11 in 2 : vector<1x8x1x32xf32>, vector<1x8x7x32xf32> -> vector<1x8x8x32xf32>
    %13 = vector.extract_strided_slice %3 {offsets = [0, 0, 0], sizes = [1, 1, 32], strides = [1, 1, 1]} : vector<3x3x32xf32> to vector<1x1x32xf32>
    %14 = vector.shape_cast %13 : vector<1x1x32xf32> to vector<32xf32>
    %15 = vector.shape_cast %14 : vector<32xf32> to vector<1x1x1x32xf32>
    %16 = vector.broadcast %15 : vector<1x1x1x32xf32> to vector<1x8x8x32xf32>
    %17 = arith.mulf %12, %16 : vector<1x8x8x32xf32>
    %18 = arith.addf %6, %17 : vector<1x8x8x32xf32>
    %19 = vector.extract_strided_slice %3 {offsets = [0, 1, 0], sizes = [1, 1, 32], strides = [1, 1, 1]} : vector<3x3x32xf32> to vector<1x1x32xf32>
    %20 = vector.shape_cast %19 : vector<1x1x32xf32> to vector<32xf32>
    %21 = vector.shape_cast %20 : vector<32xf32> to vector<1x1x1x32xf32>
    %22 = vector.broadcast %21 : vector<1x1x1x32xf32> to vector<1x8x8x32xf32>
    %23 = arith.mulf %9, %22 : vector<1x8x8x32xf32>
    %24 = arith.addf %18, %23 : vector<1x8x8x32xf32>
    %cst_9 = arith.constant 0.000000e+00 : f32
    %25 = vector.broadcast %cst_9 : f32 to vector<1x8x1x32xf32>
    %26 = vector.extract_strided_slice %9 {offsets = [0, 0, 1, 0], sizes = [1, 8, 7, 32], strides = [1, 1, 1, 1]} : vector<1x8x8x32xf32> to vector<1x8x7x32xf32>
    %27 = tpu.concatenate %26, %25 in 2 : vector<1x8x7x32xf32>, vector<1x8x1x32xf32> -> vector<1x8x8x32xf32>
    %28 = vector.extract_strided_slice %3 {offsets = [0, 2, 0], sizes = [1, 1, 32], strides = [1, 1, 1]} : vector<3x3x32xf32> to vector<1x1x32xf32>
    %29 = vector.shape_cast %28 : vector<1x1x32xf32> to vector<32xf32>
    %30 = vector.shape_cast %29 : vector<32xf32> to vector<1x1x1x32xf32>
    %31 = vector.broadcast %30 : vector<1x1x1x32xf32> to vector<1x8x8x32xf32>
    %32 = arith.mulf %27, %31 : vector<1x8x8x32xf32>
    %33 = arith.addf %24, %32 : vector<1x8x8x32xf32>
    %cst_10 = arith.constant 0.000000e+00 : f32
    %34 = vector.broadcast %cst_10 : f32 to vector<1x8x1x32xf32>
    %35 = vector.extract_strided_slice %2 {offsets = [0, 0, 0, 0], sizes = [1, 8, 7, 32], strides = [1, 1, 1, 1]} : vector<1x8x8x32xf32> to vector<1x8x7x32xf32>
    %36 = tpu.concatenate %34, %35 in 2 : vector<1x8x1x32xf32>, vector<1x8x7x32xf32> -> vector<1x8x8x32xf32>
    %37 = vector.extract_strided_slice %3 {offsets = [1, 0, 0], sizes = [1, 1, 32], strides = [1, 1, 1]} : vector<3x3x32xf32> to vector<1x1x32xf32>
    %38 = vector.shape_cast %37 : vector<1x1x32xf32> to vector<32xf32>
    %39 = vector.shape_cast %38 : vector<32xf32> to vector<1x1x1x32xf32>
    %40 = vector.broadcast %39 : vector<1x1x1x32xf32> to vector<1x8x8x32xf32>
    %41 = arith.mulf %36, %40 : vector<1x8x8x32xf32>
    %42 = arith.addf %33, %41 : vector<1x8x8x32xf32>
    %43 = vector.extract_strided_slice %3 {offsets = [1, 1, 0], sizes = [1, 1, 32], strides = [1, 1, 1]} : vector<3x3x32xf32> to vector<1x1x32xf32>
    %44 = vector.shape_cast %43 : vector<1x1x32xf32> to vector<32xf32>
    %45 = vector.shape_cast %44 : vector<32xf32> to vector<1x1x1x32xf32>
    %46 = vector.broadcast %45 : vector<1x1x1x32xf32> to vector<1x8x8x32xf32>
    %47 = arith.mulf %2, %46 : vector<1x8x8x32xf32>
    %48 = arith.addf %42, %47 : vector<1x8x8x32xf32>
    %cst_11 = arith.constant 0.000000e+00 : f32
    %49 = vector.broadcast %cst_11 : f32 to vector<1x8x1x32xf32>
    %50 = vector.extract_strided_slice %2 {offsets = [0, 0, 1, 0], sizes = [1, 8, 7, 32], strides = [1, 1, 1, 1]} : vector<1x8x8x32xf32> to vector<1x8x7x32xf32>
    %51 = tpu.concatenate %50, %49 in 2 : vector<1x8x7x32xf32>, vector<1x8x1x32xf32> -> vector<1x8x8x32xf32>
    %52 = vector.extract_strided_slice %3 {offsets = [1, 2, 0], sizes = [1, 1, 32], strides = [1, 1, 1]} : vector<3x3x32xf32> to vector<1x1x32xf32>
    %53 = vector.shape_cast %52 : vector<1x1x32xf32> to vector<32xf32>
    %54 = vector.shape_cast %53 : vector<32xf32> to vector<1x1x1x32xf32>
    %55 = vector.broadcast %54 : vector<1x1x1x32xf32> to vector<1x8x8x32xf32>
    %56 = arith.mulf %51, %55 : vector<1x8x8x32xf32>
    %57 = arith.addf %48, %56 : vector<1x8x8x32xf32>
    %cst_12 = arith.constant 0.000000e+00 : f32
    %58 = vector.broadcast %cst_12 : f32 to vector<1x1x8x32xf32>
    %59 = vector.extract_strided_slice %2 {offsets = [0, 1, 0, 0], sizes = [1, 7, 8, 32], strides = [1, 1, 1, 1]} : vector<1x8x8x32xf32> to vector<1x7x8x32xf32>
    %60 = tpu.concatenate %59, %58 in 1 : vector<1x7x8x32xf32>, vector<1x1x8x32xf32> -> vector<1x8x8x32xf32>
    %cst_13 = arith.constant 0.000000e+00 : f32
    %61 = vector.broadcast %cst_13 : f32 to vector<1x8x1x32xf32>
    %62 = vector.extract_strided_slice %60 {offsets = [0, 0, 0, 0], sizes = [1, 8, 7, 32], strides = [1, 1, 1, 1]} : vector<1x8x8x32xf32> to vector<1x8x7x32xf32>
    %63 = tpu.concatenate %61, %62 in 2 : vector<1x8x1x32xf32>, vector<1x8x7x32xf32> -> vector<1x8x8x32xf32>
    %64 = vector.extract_strided_slice %3 {offsets = [2, 0, 0], sizes = [1, 1, 32], strides = [1, 1, 1]} : vector<3x3x32xf32> to vector<1x1x32xf32>
    %65 = vector.shape_cast %64 : vector<1x1x32xf32> to vector<32xf32>
    %66 = vector.shape_cast %65 : vector<32xf32> to vector<1x1x1x32xf32>
    %67 = vector.broadcast %66 : vector<1x1x1x32xf32> to vector<1x8x8x32xf32>
    %68 = arith.mulf %63, %67 : vector<1x8x8x32xf32>
    %69 = arith.addf %57, %68 : vector<1x8x8x32xf32>
    %70 = vector.extract_strided_slice %3 {offsets = [2, 1, 0], sizes = [1, 1, 32], strides = [1, 1, 1]} : vector<3x3x32xf32> to vector<1x1x32xf32>
    %71 = vector.shape_cast %70 : vector<1x1x32xf32> to vector<32xf32>
    %72 = vector.shape_cast %71 : vector<32xf32> to vector<1x1x1x32xf32>
    %73 = vector.broadcast %72 : vector<1x1x1x32xf32> to vector<1x8x8x32xf32>
    %74 = arith.mulf %60, %73 : vector<1x8x8x32xf32>
    %75 = arith.addf %69, %74 : vector<1x8x8x32xf32>
    %cst_14 = arith.constant 0.000000e+00 : f32
    %76 = vector.broadcast %cst_14 : f32 to vector<1x8x1x32xf32>
    %77 = vector.extract_strided_slice %60 {offsets = [0, 0, 1, 0], sizes = [1, 8, 7, 32], strides = [1, 1, 1, 1]} : vector<1x8x8x32xf32> to vector<1x8x7x32xf32>
    %78 = tpu.concatenate %77, %76 in 2 : vector<1x8x7x32xf32>, vector<1x8x1x32xf32> -> vector<1x8x8x32xf32>
    %79 = vector.extract_strided_slice %3 {offsets = [2, 2, 0], sizes = [1, 1, 32], strides = [1, 1, 1]} : vector<3x3x32xf32> to vector<1x1x32xf32>
    %80 = vector.shape_cast %79 : vector<1x1x32xf32> to vector<32xf32>
    %81 = vector.shape_cast %80 : vector<32xf32> to vector<1x1x1x32xf32>
    %82 = vector.broadcast %81 : vector<1x1x1x32xf32> to vector<1x8x8x32xf32>
    %83 = arith.mulf %78, %82 : vector<1x8x8x32xf32>
    %84 = arith.addf %75, %83 : vector<1x8x8x32xf32>
    %85 = arith.addf %2, %84 : vector<1x8x8x32xf32>
    %86 = vector.shape_cast %5 : vector<32xf32> to vector<1x1x1x32xf32>
    %87 = vector.broadcast %86 : vector<1x1x1x32xf32> to vector<1x8x8x32xf32>
    %88 = arith.addf %85, %87 : vector<1x8x8x32xf32>
    %89 = vector.shape_cast %88 : vector<1x8x8x32xf32> to vector<1x64x32xf32>
    %90 = vector.shape_cast %89 : vector<1x64x32xf32> to vector<64x32xf32>
    %c0_15 = arith.constant 0 : index
    %c0_16 = arith.constant 0 : index
    %91 = vector.load %arg4[%c0_15, %c0_16] : memref<1x32xf32, #tpu.memory_space<vmem>>, vector<1x32xf32>
    %92 = vector.shape_cast %91 : vector<1x32xf32> to vector<32xf32>
    %c0_17 = arith.constant 0 : index
    %c0_18 = arith.constant 0 : index
    %93 = vector.load %arg5[%c0_17, %c0_18] : memref<1x32xf32, #tpu.memory_space<vmem>>, vector<1x32xf32>
    %94 = vector.shape_cast %93 : vector<1x32xf32> to vector<32xf32>
    %cst_19 = arith.constant dense<0.000000e+00> : vector<64xf32>
    %95 = vector.multi_reduction <add>, %90, %cst_19 [1] : vector<64x32xf32> to vector<64xf32>
    %96 = vector.shape_cast %95 : vector<64xf32> to vector<64x1xf32>
    %cst_20 = arith.constant 3.200000e+01 : f32
    %97 = vector.broadcast %cst_20 : f32 to vector<64x1xf32>
    %98 = arith.divf %96, %97 : vector<64x1xf32>
    %99 = vector.broadcast %98 : vector<64x1xf32> to vector<64x32xf32>
    %100 = arith.subf %90, %99 : vector<64x32xf32>
    %101 = arith.mulf %100, %100 : vector<64x32xf32>
    %cst_21 = arith.constant dense<0.000000e+00> : vector<64xf32>
    %102 = vector.multi_reduction <add>, %101, %cst_21 [1] : vector<64x32xf32> to vector<64xf32>
    %103 = vector.shape_cast %102 : vector<64xf32> to vector<64x1xf32>
    %cst_22 = arith.constant 3.200000e+01 : f32
    %104 = vector.broadcast %cst_22 : f32 to vector<64x1xf32>
    %105 = arith.divf %103, %104 : vector<64x1xf32>
    %106 = vector.broadcast %98 : vector<64x1xf32> to vector<64x32xf32>
    %107 = arith.subf %90, %106 : vector<64x32xf32>
    %cst_23 = arith.constant 9.99999974E-6 : f32
    %108 = vector.broadcast %cst_23 : f32 to vector<64x1xf32>
    %109 = arith.addf %105, %108 : vector<64x1xf32>
    %110 = math.rsqrt %109 : vector<64x1xf32>
    %111 = vector.broadcast %110 : vector<64x1xf32> to vector<64x32xf32>
    %112 = arith.mulf %107, %111 : vector<64x32xf32>
    %113 = vector.shape_cast %92 : vector<32xf32> to vector<1x32xf32>
    %114 = vector.broadcast %113 : vector<1x32xf32> to vector<64x32xf32>
    %115 = arith.mulf %112, %114 : vector<64x32xf32>
    %116 = vector.shape_cast %94 : vector<32xf32> to vector<1x32xf32>
    %117 = vector.broadcast %116 : vector<1x32xf32> to vector<64x32xf32>
    %118 = arith.addf %115, %117 : vector<64x32xf32>
    %119 = arith.truncf %118 : vector<64x32xf32> to vector<64x32xbf16>
    %c0_24 = arith.constant 0 : index
    %c0_25 = arith.constant 0 : index
    %120 = vector.load %arg6[%c0_24, %c0_25] : memref<32x96xbf16, #tpu.memory_space<vmem>>, vector<32x96xbf16>
    %cst_26 = arith.constant dense<0.000000e+00> : vector<64x96xf32>
    %121 = tpu.matmul %119, %120, %cst_26 {dimension_numbers = #tpu.dot_dimension_numbers<[1], [0], [0], [1], [0, 0, 1, 1], [], []>} : vector<64x32xbf16>, vector<32x96xbf16>, vector<64x96xf32> -> vector<64x96xf32>
    %c0_27 = arith.constant 0 : index
    %c0_28 = arith.constant 0 : index
    %122 = vector.load %arg7[%c0_27, %c0_28] : memref<1x96xf32, #tpu.memory_space<vmem>>, vector<1x96xf32>
    %123 = vector.shape_cast %122 : vector<1x96xf32> to vector<96xf32>
    %124 = vector.shape_cast %123 : vector<96xf32> to vector<1x96xf32>
    %125 = vector.broadcast %124 : vector<1x96xf32> to vector<64x96xf32>
    %126 = arith.addf %121, %125 : vector<64x96xf32>
    %127 = vector.extract_strided_slice %126 {offsets = [0, 0], sizes = [64, 32], strides = [1, 1]} : vector<64x96xf32> to vector<64x32xf32>
    %cst_29 = arith.constant 0.353553385 : f32
    %128 = vector.broadcast %cst_29 : f32 to vector<64x32xf32>
    %129 = arith.mulf %127, %128 : vector<64x32xf32>
    %130 = vector.shape_cast %129 : vector<64x32xf32> to vector<1x64x32xf32>
    %131 = vector.extract_strided_slice %126 {offsets = [0, 32], sizes = [64, 32], strides = [1, 1]} : vector<64x96xf32> to vector<64x32xf32>
    %132 = vector.shape_cast %131 : vector<64x32xf32> to vector<1x64x32xf32>
    %133 = vector.extract_strided_slice %126 {offsets = [0, 64], sizes = [64, 32], strides = [1, 1]} : vector<64x96xf32> to vector<64x32xf32>
    %134 = vector.shape_cast %133 : vector<64x32xf32> to vector<1x64x32xf32>
    %135 = vector.extract_strided_slice %130 {offsets = [0, 0, 0], sizes = [1, 64, 8], strides = [1, 1, 1]} : vector<1x64x32xf32> to vector<1x64x8xf32>
    %136 = vector.shape_cast %135 : vector<1x64x8xf32> to vector<1x1x64x8xf32>
    %137 = vector.extract_strided_slice %130 {offsets = [0, 0, 8], sizes = [1, 64, 8], strides = [1, 1, 1]} : vector<1x64x32xf32> to vector<1x64x8xf32>
    %138 = vector.shape_cast %137 : vector<1x64x8xf32> to vector<1x1x64x8xf32>
    %139 = vector.extract_strided_slice %130 {offsets = [0, 0, 16], sizes = [1, 64, 8], strides = [1, 1, 1]} : vector<1x64x32xf32> to vector<1x64x8xf32>
    %140 = vector.shape_cast %139 : vector<1x64x8xf32> to vector<1x1x64x8xf32>
    %141 = vector.extract_strided_slice %130 {offsets = [0, 0, 24], sizes = [1, 64, 8], strides = [1, 1, 1]} : vector<1x64x32xf32> to vector<1x64x8xf32>
    %142 = vector.shape_cast %141 : vector<1x64x8xf32> to vector<1x1x64x8xf32>
    %143 = tpu.concatenate %136, %138, %140, %142 in 1 : vector<1x1x64x8xf32>, vector<1x1x64x8xf32>, vector<1x1x64x8xf32>, vector<1x1x64x8xf32> -> vector<1x4x64x8xf32>
    %144 = vector.shape_cast %143 : vector<1x4x64x8xf32> to vector<4x64x8xf32>
    %145 = arith.truncf %144 : vector<4x64x8xf32> to vector<4x64x8xbf16>
    %146 = vector.extract_strided_slice %132 {offsets = [0, 0, 0], sizes = [1, 64, 8], strides = [1, 1, 1]} : vector<1x64x32xf32> to vector<1x64x8xf32>
    %147 = vector.shape_cast %146 : vector<1x64x8xf32> to vector<1x1x64x8xf32>
    %148 = vector.extract_strided_slice %132 {offsets = [0, 0, 8], sizes = [1, 64, 8], strides = [1, 1, 1]} : vector<1x64x32xf32> to vector<1x64x8xf32>
    %149 = vector.shape_cast %148 : vector<1x64x8xf32> to vector<1x1x64x8xf32>
    %150 = vector.extract_strided_slice %132 {offsets = [0, 0, 16], sizes = [1, 64, 8], strides = [1, 1, 1]} : vector<1x64x32xf32> to vector<1x64x8xf32>
    %151 = vector.shape_cast %150 : vector<1x64x8xf32> to vector<1x1x64x8xf32>
    %152 = vector.extract_strided_slice %132 {offsets = [0, 0, 24], sizes = [1, 64, 8], strides = [1, 1, 1]} : vector<1x64x32xf32> to vector<1x64x8xf32>
    %153 = vector.shape_cast %152 : vector<1x64x8xf32> to vector<1x1x64x8xf32>
    %154 = tpu.concatenate %147, %149, %151, %153 in 1 : vector<1x1x64x8xf32>, vector<1x1x64x8xf32>, vector<1x1x64x8xf32>, vector<1x1x64x8xf32> -> vector<1x4x64x8xf32>
    %155 = vector.shape_cast %154 : vector<1x4x64x8xf32> to vector<4x64x8xf32>
    %156 = arith.truncf %155 : vector<4x64x8xf32> to vector<4x64x8xbf16>
    %157 = vector.extract_strided_slice %134 {offsets = [0, 0, 0], sizes = [1, 64, 8], strides = [1, 1, 1]} : vector<1x64x32xf32> to vector<1x64x8xf32>
    %158 = vector.shape_cast %157 : vector<1x64x8xf32> to vector<1x1x64x8xf32>
    %159 = vector.extract_strided_slice %134 {offsets = [0, 0, 8], sizes = [1, 64, 8], strides = [1, 1, 1]} : vector<1x64x32xf32> to vector<1x64x8xf32>
    %160 = vector.shape_cast %159 : vector<1x64x8xf32> to vector<1x1x64x8xf32>
    %161 = vector.extract_strided_slice %134 {offsets = [0, 0, 16], sizes = [1, 64, 8], strides = [1, 1, 1]} : vector<1x64x32xf32> to vector<1x64x8xf32>
    %162 = vector.shape_cast %161 : vector<1x64x8xf32> to vector<1x1x64x8xf32>
    %163 = vector.extract_strided_slice %134 {offsets = [0, 0, 24], sizes = [1, 64, 8], strides = [1, 1, 1]} : vector<1x64x32xf32> to vector<1x64x8xf32>
    %164 = vector.shape_cast %163 : vector<1x64x8xf32> to vector<1x1x64x8xf32>
    %165 = tpu.concatenate %158, %160, %162, %164 in 1 : vector<1x1x64x8xf32>, vector<1x1x64x8xf32>, vector<1x1x64x8xf32>, vector<1x1x64x8xf32> -> vector<1x4x64x8xf32>
    %166 = vector.shape_cast %165 : vector<1x4x64x8xf32> to vector<4x64x8xf32>
    %167 = arith.truncf %166 : vector<4x64x8xf32> to vector<4x64x8xbf16>
    "tpu.trace_start"() <{level = 10 : i32, message = "bqd,bkd->bqk"}> : () -> ()
    %cst_30 = arith.constant dense<0.000000e+00> : vector<4x64x64xf32>
    %168 = tpu.matmul %145, %156, %cst_30 {dimension_numbers = #tpu.dot_dimension_numbers<[2], [2], [1], [1], [0, 0, 0, 1, 1, 1], [0], [0]>} : vector<4x64x8xbf16>, vector<4x64x8xbf16>, vector<4x64x64xf32> -> vector<4x64x64xf32>
    "tpu.trace_stop"() : () -> ()
    %cst_31 = arith.constant dense<0xFF800000> : vector<4x64xf32>
    %169 = vector.multi_reduction <maximumf>, %168, %cst_31 [2] : vector<4x64x64xf32> to vector<4x64xf32>
    %170 = vector.shape_cast %169 : vector<4x64xf32> to vector<4x64x1xf32>
    %171 = vector.broadcast %170 : vector<4x64x1xf32> to vector<4x64x64xf32>
    %172 = arith.subf %168, %171 : vector<4x64x64xf32>
    %173 = math.exp %172 : vector<4x64x64xf32>
    %cst_32 = arith.constant dense<0.000000e+00> : vector<4x64xf32>
    %174 = vector.multi_reduction <add>, %173, %cst_32 [2] : vector<4x64x64xf32> to vector<4x64xf32>
    %175 = vector.shape_cast %174 : vector<4x64xf32> to vector<4x64x1xf32>
    %176 = vector.broadcast %175 : vector<4x64x1xf32> to vector<4x64x64xf32>
    %177 = arith.divf %173, %176 : vector<4x64x64xf32>
    %178 = arith.truncf %177 : vector<4x64x64xf32> to vector<4x64x64xbf16>
    "tpu.trace_start"() <{level = 10 : i32, message = "bqk,bkd->bqd"}> : () -> ()
    %cst_33 = arith.constant dense<0.000000e+00> : vector<4x64x8xf32>
    %179 = tpu.matmul %178, %167, %cst_33 {dimension_numbers = #tpu.dot_dimension_numbers<[2], [1], [1], [2], [0, 0, 0, 1, 1, 2], [0], [0]>} : vector<4x64x64xbf16>, vector<4x64x8xbf16>, vector<4x64x8xf32> -> vector<4x64x8xf32>
    "tpu.trace_stop"() : () -> ()
    %180 = vector.shape_cast %179 : vector<4x64x8xf32> to vector<1x4x64x8xf32>
    %181 = vector.extract_strided_slice %180 {offsets = [0, 0, 0, 0], sizes = [1, 1, 64, 8], strides = [1, 1, 1, 1]} : vector<1x4x64x8xf32> to vector<1x1x64x8xf32>
    %182 = vector.shape_cast %181 : vector<1x1x64x8xf32> to vector<1x64x8xf32>
    %183 = vector.extract_strided_slice %180 {offsets = [0, 1, 0, 0], sizes = [1, 1, 64, 8], strides = [1, 1, 1, 1]} : vector<1x4x64x8xf32> to vector<1x1x64x8xf32>
    %184 = vector.shape_cast %183 : vector<1x1x64x8xf32> to vector<1x64x8xf32>
    %185 = vector.extract_strided_slice %180 {offsets = [0, 2, 0, 0], sizes = [1, 1, 64, 8], strides = [1, 1, 1, 1]} : vector<1x4x64x8xf32> to vector<1x1x64x8xf32>
    %186 = vector.shape_cast %185 : vector<1x1x64x8xf32> to vector<1x64x8xf32>
    %187 = vector.extract_strided_slice %180 {offsets = [0, 3, 0, 0], sizes = [1, 1, 64, 8], strides = [1, 1, 1, 1]} : vector<1x4x64x8xf32> to vector<1x1x64x8xf32>
    %188 = vector.shape_cast %187 : vector<1x1x64x8xf32> to vector<1x64x8xf32>
    %189 = tpu.concatenate %182, %184, %186, %188 in 2 : vector<1x64x8xf32>, vector<1x64x8xf32>, vector<1x64x8xf32>, vector<1x64x8xf32> -> vector<1x64x32xf32>
    %190 = vector.shape_cast %189 : vector<1x64x32xf32> to vector<64x32xf32>
    %191 = arith.truncf %190 : vector<64x32xf32> to vector<64x32xbf16>
    %c0_34 = arith.constant 0 : index
    %c0_35 = arith.constant 0 : index
    %192 = vector.load %arg8[%c0_34, %c0_35] : memref<32x32xbf16, #tpu.memory_space<vmem>>, vector<32x32xbf16>
    %cst_36 = arith.constant dense<0.000000e+00> : vector<64x32xf32>
    %193 = tpu.matmul %191, %192, %cst_36 {dimension_numbers = #tpu.dot_dimension_numbers<[1], [0], [0], [1], [0, 0, 1, 1], [], []>} : vector<64x32xbf16>, vector<32x32xbf16>, vector<64x32xf32> -> vector<64x32xf32>
    %194 = arith.addf %90, %193 : vector<64x32xf32>
    %c0_37 = arith.constant 0 : index
    %c0_38 = arith.constant 0 : index
    %195 = vector.load %arg9[%c0_37, %c0_38] : memref<1x32xf32, #tpu.memory_space<vmem>>, vector<1x32xf32>
    %196 = vector.shape_cast %195 : vector<1x32xf32> to vector<32xf32>
    %197 = vector.shape_cast %196 : vector<32xf32> to vector<1x32xf32>
    %198 = vector.broadcast %197 : vector<1x32xf32> to vector<64x32xf32>
    %199 = arith.addf %194, %198 : vector<64x32xf32>
    %c0_39 = arith.constant 0 : index
    %c0_40 = arith.constant 0 : index
    %200 = vector.load %arg10[%c0_39, %c0_40] : memref<1x32xf32, #tpu.memory_space<vmem>>, vector<1x32xf32>
    %201 = vector.shape_cast %200 : vector<1x32xf32> to vector<32xf32>
    %c0_41 = arith.constant 0 : index
    %c0_42 = arith.constant 0 : index
    %202 = vector.load %arg11[%c0_41, %c0_42] : memref<1x32xf32, #tpu.memory_space<vmem>>, vector<1x32xf32>
    %203 = vector.shape_cast %202 : vector<1x32xf32> to vector<32xf32>
    %cst_43 = arith.constant dense<0.000000e+00> : vector<64xf32>
    %204 = vector.multi_reduction <add>, %199, %cst_43 [1] : vector<64x32xf32> to vector<64xf32>
    %205 = vector.shape_cast %204 : vector<64xf32> to vector<64x1xf32>
    %cst_44 = arith.constant 3.200000e+01 : f32
    %206 = vector.broadcast %cst_44 : f32 to vector<64x1xf32>
    %207 = arith.divf %205, %206 : vector<64x1xf32>
    %208 = vector.broadcast %207 : vector<64x1xf32> to vector<64x32xf32>
    %209 = arith.subf %199, %208 : vector<64x32xf32>
    %210 = arith.mulf %209, %209 : vector<64x32xf32>
    %cst_45 = arith.constant dense<0.000000e+00> : vector<64xf32>
    %211 = vector.multi_reduction <add>, %210, %cst_45 [1] : vector<64x32xf32> to vector<64xf32>
    %212 = vector.shape_cast %211 : vector<64xf32> to vector<64x1xf32>
    %cst_46 = arith.constant 3.200000e+01 : f32
    %213 = vector.broadcast %cst_46 : f32 to vector<64x1xf32>
    %214 = arith.divf %212, %213 : vector<64x1xf32>
    %215 = vector.broadcast %207 : vector<64x1xf32> to vector<64x32xf32>
    %216 = arith.subf %199, %215 : vector<64x32xf32>
    %cst_47 = arith.constant 9.99999974E-6 : f32
    %217 = vector.broadcast %cst_47 : f32 to vector<64x1xf32>
    %218 = arith.addf %214, %217 : vector<64x1xf32>
    %219 = math.rsqrt %218 : vector<64x1xf32>
    %220 = vector.broadcast %219 : vector<64x1xf32> to vector<64x32xf32>
    %221 = arith.mulf %216, %220 : vector<64x32xf32>
    %222 = vector.shape_cast %201 : vector<32xf32> to vector<1x32xf32>
    %223 = vector.broadcast %222 : vector<1x32xf32> to vector<64x32xf32>
    %224 = arith.mulf %221, %223 : vector<64x32xf32>
    %225 = vector.shape_cast %203 : vector<32xf32> to vector<1x32xf32>
    %226 = vector.broadcast %225 : vector<1x32xf32> to vector<64x32xf32>
    %227 = arith.addf %224, %226 : vector<64x32xf32>
    %228 = arith.truncf %227 : vector<64x32xf32> to vector<64x32xbf16>
    %c0_48 = arith.constant 0 : index
    %c0_49 = arith.constant 0 : index
    %229 = vector.load %arg12[%c0_48, %c0_49] : memref<32x128xbf16, #tpu.memory_space<vmem>>, vector<32x128xbf16>
    %cst_50 = arith.constant dense<0.000000e+00> : vector<64x128xf32>
    %230 = tpu.matmul %228, %229, %cst_50 {dimension_numbers = #tpu.dot_dimension_numbers<[1], [0], [0], [1], [0, 0, 1, 1], [], []>} : vector<64x32xbf16>, vector<32x128xbf16>, vector<64x128xf32> -> vector<64x128xf32>
    %c0_51 = arith.constant 0 : index
    %c0_52 = arith.constant 0 : index
    %231 = vector.load %arg13[%c0_51, %c0_52] : memref<1x128xf32, #tpu.memory_space<vmem>>, vector<1x128xf32>
    %232 = vector.shape_cast %231 : vector<1x128xf32> to vector<128xf32>
    %233 = vector.shape_cast %232 : vector<128xf32> to vector<1x128xf32>
    %234 = vector.broadcast %233 : vector<1x128xf32> to vector<64x128xf32>
    %235 = arith.addf %230, %234 : vector<64x128xf32>
    %cst_53 = arith.constant 5.000000e-01 : f32
    %236 = vector.broadcast %cst_53 : f32 to vector<64x128xf32>
    %237 = arith.mulf %236, %235 : vector<64x128xf32>
    %cst_54 = arith.constant 4.471500e-02 : f32
    %238 = vector.broadcast %cst_54 : f32 to vector<64x128xf32>
    %239 = arith.mulf %238, %235 : vector<64x128xf32>
    %240 = arith.mulf %239, %235 : vector<64x128xf32>
    %241 = arith.mulf %240, %235 : vector<64x128xf32>
    %242 = arith.addf %235, %241 : vector<64x128xf32>
    %cst_55 = arith.constant 0.797884583 : f32
    %243 = vector.broadcast %cst_55 : f32 to vector<64x128xf32>
    %244 = arith.mulf %243, %242 : vector<64x128xf32>
    %245 = math.tanh %244 : vector<64x128xf32>
    %cst_56 = arith.constant 1.000000e+00 : f32
    %246 = vector.broadcast %cst_56 : f32 to vector<64x128xf32>
    %247 = arith.addf %246, %245 : vector<64x128xf32>
    %248 = arith.mulf %237, %247 : vector<64x128xf32>
    %249 = arith.truncf %248 : vector<64x128xf32> to vector<64x128xbf16>
    %c0_57 = arith.constant 0 : index
    %c0_58 = arith.constant 0 : index
    %250 = vector.load %arg14[%c0_57, %c0_58] : memref<128x32xbf16, #tpu.memory_space<vmem>>, vector<128x32xbf16>
    %cst_59 = arith.constant dense<0.000000e+00> : vector<64x32xf32>
    %251 = tpu.matmul %249, %250, %cst_59 {dimension_numbers = #tpu.dot_dimension_numbers<[1], [0], [0], [1], [0, 0, 1, 1], [], []>} : vector<64x128xbf16>, vector<128x32xbf16>, vector<64x32xf32> -> vector<64x32xf32>
    %c0_60 = arith.constant 0 : index
    %c0_61 = arith.constant 0 : index
    %252 = vector.load %arg15[%c0_60, %c0_61] : memref<1x32xf32, #tpu.memory_space<vmem>>, vector<1x32xf32>
    %253 = vector.shape_cast %252 : vector<1x32xf32> to vector<32xf32>
    %254 = vector.shape_cast %253 : vector<32xf32> to vector<1x32xf32>
    %255 = vector.broadcast %254 : vector<1x32xf32> to vector<64x32xf32>
    %256 = arith.addf %251, %255 : vector<64x32xf32>
    %257 = arith.addf %199, %256 : vector<64x32xf32>
    %258 = vector.shape_cast %257 : vector<64x32xf32> to vector<1x64x32xf32>
    %259 = arith.truncf %258 : vector<1x64x32xf32> to vector<1x64x32xbf16>
    %c0_62 = arith.constant 0 : index
    %c0_63 = arith.constant 0 : index
    %c0_64 = arith.constant 0 : index
    %260 = vector.load %arg16[%c0_62, %c0_63, %c0_64] : memref<1x64x32xbf16, #tpu.memory_space<vmem>>, vector<1x64x32xbf16>
    tpu.vector_store %arg16[%c0_62, %c0_63, %c0_64], %259 {strides = array<i32>} : memref<1x64x32xbf16, #tpu.memory_space<vmem>>, vector<1x64x32xbf16>,
    return
  }
  func.func @transform_0(%arg0: i32) -> (i32, i32, i32) {
    %c0_i32 = arith.constant 0 : i32
    %c0_i32_0 = arith.constant 0 : i32
    %c0_i32_1 = arith.constant 0 : i32
    return %arg0, %c0_i32, %c0_i32_0 : i32, i32, i32
  }
  func.func @transform_1(%arg0: i32) -> (i32, i32, i32) {
    %c0_i32 = arith.constant 0 : i32
    %c0_i32_0 = arith.constant 0 : i32
    %c0_i32_1 = arith.constant 0 : i32
    %c0_i32_2 = arith.constant 0 : i32
    return %c0_i32, %c0_i32_0, %c0_i32_1 : i32, i32, i32
  }
  func.func @transform_2(%arg0: i32) -> (i32, i32) {
    %c0_i32 = arith.constant 0 : i32
    %c0_i32_0 = arith.constant 0 : i32
    %c0_i32_1 = arith.constant 0 : i32
    return %c0_i32, %c0_i32_0 : i32, i32
  }
  func.func @transform_3(%arg0: i32) -> (i32, i32) {
    %c0_i32 = arith.constant 0 : i32
    %c0_i32_0 = arith.constant 0 : i32
    %c0_i32_1 = arith.constant 0 : i32
    return %c0_i32, %c0_i32_0 : i32, i32
  }
  func.func @transform_4(%arg0: i32) -> (i32, i32) {
    %c0_i32 = arith.constant 0 : i32
    %c0_i32_0 = arith.constant 0 : i32
    %c0_i32_1 = arith.constant 0 : i32
    return %c0_i32, %c0_i32_0 : i32, i32
  }
  func.func @transform_5(%arg0: i32) -> (i32, i32) {
    %c0_i32 = arith.constant 0 : i32
    %c0_i32_0 = arith.constant 0 : i32
    %c0_i32_1 = arith.constant 0 : i32
    return %c0_i32, %c0_i32_0 : i32, i32
  }
  func.func @transform_6(%arg0: i32) -> (i32, i32) {
    %c0_i32 = arith.constant 0 : i32
    %c0_i32_0 = arith.constant 0 : i32
    %c0_i32_1 = arith.constant 0 : i32
    return %c0_i32, %c0_i32_0 : i32, i32
  }
  func.func @transform_7(%arg0: i32) -> (i32, i32) {
    %c0_i32 = arith.constant 0 : i32
    %c0_i32_0 = arith.constant 0 : i32
    %c0_i32_1 = arith.constant 0 : i32
    return %c0_i32, %c0_i32_0 : i32, i32
  }
  func.func @transform_8(%arg0: i32) -> (i32, i32) {
    %c0_i32 = arith.constant 0 : i32
    %c0_i32_0 = arith.constant 0 : i32
    %c0_i32_1 = arith.constant 0 : i32
    return %c0_i32, %c0_i32_0 : i32, i32
  }
  func.func @transform_9(%arg0: i32) -> (i32, i32) {
    %c0_i32 = arith.constant 0 : i32
    %c0_i32_0 = arith.constant 0 : i32
    %c0_i32_1 = arith.constant 0 : i32
    return %c0_i32, %c0_i32_0 : i32, i32
  }
  func.func @transform_10(%arg0: i32) -> (i32, i32) {
    %c0_i32 = arith.constant 0 : i32
    %c0_i32_0 = arith.constant 0 : i32
    %c0_i32_1 = arith.constant 0 : i32
    return %c0_i32, %c0_i32_0 : i32, i32
  }
  func.func @transform_11(%arg0: i32) -> (i32, i32) {
    %c0_i32 = arith.constant 0 : i32
    %c0_i32_0 = arith.constant 0 : i32
    %c0_i32_1 = arith.constant 0 : i32
    return %c0_i32, %c0_i32_0 : i32, i32
  }
  func.func @transform_12(%arg0: i32) -> (i32, i32) {
    %c0_i32 = arith.constant 0 : i32
    %c0_i32_0 = arith.constant 0 : i32
    %c0_i32_1 = arith.constant 0 : i32
    return %c0_i32, %c0_i32_0 : i32, i32
  }
  func.func @transform_13(%arg0: i32) -> (i32, i32) {
    %c0_i32 = arith.constant 0 : i32
    %c0_i32_0 = arith.constant 0 : i32
    %c0_i32_1 = arith.constant 0 : i32
    return %c0_i32, %c0_i32_0 : i32, i32
  }
  func.func @transform_14(%arg0: i32) -> (i32, i32) {
    %c0_i32 = arith.constant 0 : i32
    %c0_i32_0 = arith.constant 0 : i32
    %c0_i32_1 = arith.constant 0 : i32
    return %c0_i32, %c0_i32_0 : i32, i32
  }
  func.func @transform_15(%arg0: i32) -> (i32, i32, i32) {
    %c0_i32 = arith.constant 0 : i32
    %c0_i32_0 = arith.constant 0 : i32
    %c0_i32_1 = arith.constant 0 : i32
    return %arg0, %c0_i32, %c0_i32_0 : i32, i32, i32
  }
}

module attributes {stable_mosaic.version = 11 : i64} {
  func.func @_patch_merge_kernel(%arg0: i32, %arg1: memref<1x4x4x32xbf16, #tpu.memory_space<vmem>>, %arg2: memref<1x4x4x32xbf16, #tpu.memory_space<vmem>>, %arg3: memref<1x4x4x32xbf16, #tpu.memory_space<vmem>>, %arg4: memref<1x4x4x32xbf16, #tpu.memory_space<vmem>>, %arg5: memref<3x3x32x64xbf16, #tpu.memory_space<vmem>>, %arg6: memref<1x64xf32, #tpu.memory_space<vmem>>, %arg7: memref<1x64xf32, #tpu.memory_space<vmem>>, %arg8: memref<3x3x64xf32, #tpu.memory_space<vmem>>, %arg9: memref<1x64xf32, #tpu.memory_space<vmem>>, %arg10: memref<1x16x64xf32, #tpu.memory_space<vmem>>) attributes {dimension_semantics = [#tpu.dimension_semantics<parallel>], iteration_bounds = array<i64: 2>, scalar_prefetch = 0 : i64, scratch_operands = 0 : i64, tpu.core_type = #tpu.core_type<tc>, window_params = [{transform_indices = @transform_0, window_bounds = array<i64: 1, 4, 4, 32>}, {transform_indices = @transform_1, window_bounds = array<i64: 1, 4, 4, 32>}, {transform_indices = @transform_2, window_bounds = array<i64: 1, 4, 4, 32>}, {transform_indices = @transform_3, window_bounds = array<i64: 1, 4, 4, 32>}, {pipeline_mode = #tpu.pipeline_mode<synchronous>, transform_indices = @transform_4, window_bounds = array<i64: 3, 3, 32, 64>}, {pipeline_mode = #tpu.pipeline_mode<synchronous>, transform_indices = @transform_5, window_bounds = array<i64: 1, 64>}, {pipeline_mode = #tpu.pipeline_mode<synchronous>, transform_indices = @transform_6, window_bounds = array<i64: 1, 64>}, {pipeline_mode = #tpu.pipeline_mode<synchronous>, transform_indices = @transform_7, window_bounds = array<i64: 3, 3, 64>}, {pipeline_mode = #tpu.pipeline_mode<synchronous>, transform_indices = @transform_8, window_bounds = array<i64: 1, 64>}, {transform_indices = @transform_9, window_bounds = array<i64: 1, 16, 64>}]} {
    %c0 = arith.constant 0 : index
    %c0_0 = arith.constant 0 : index
    %c0_1 = arith.constant 0 : index
    %c0_2 = arith.constant 0 : index
    %0 = vector.load %arg1[%c0, %c0_0, %c0_1, %c0_2] : memref<1x4x4x32xbf16, #tpu.memory_space<vmem>>, vector<1x4x4x32xbf16>
    %c0_3 = arith.constant 0 : index
    %c0_4 = arith.constant 0 : index
    %c0_5 = arith.constant 0 : index
    %c0_6 = arith.constant 0 : index
    %1 = vector.load %arg2[%c0_3, %c0_4, %c0_5, %c0_6] : memref<1x4x4x32xbf16, #tpu.memory_space<vmem>>, vector<1x4x4x32xbf16>
    %c0_7 = arith.constant 0 : index
    %c0_8 = arith.constant 0 : index
    %c0_9 = arith.constant 0 : index
    %c0_10 = arith.constant 0 : index
    %2 = vector.load %arg3[%c0_7, %c0_8, %c0_9, %c0_10] : memref<1x4x4x32xbf16, #tpu.memory_space<vmem>>, vector<1x4x4x32xbf16>
    %c0_11 = arith.constant 0 : index
    %c0_12 = arith.constant 0 : index
    %c0_13 = arith.constant 0 : index
    %c0_14 = arith.constant 0 : index
    %3 = vector.load %arg4[%c0_11, %c0_12, %c0_13, %c0_14] : memref<1x4x4x32xbf16, #tpu.memory_space<vmem>>, vector<1x4x4x32xbf16>
    %cst = arith.constant 0.000000e+00 : bf16
    %4 = vector.broadcast %cst : bf16 to vector<1x1x4x32xbf16>
    %5 = vector.extract_strided_slice %3 {offsets = [0, 0, 0, 0], sizes = [1, 3, 4, 32], strides = [1, 1, 1, 1]} : vector<1x4x4x32xbf16> to vector<1x3x4x32xbf16>
    %6 = tpu.concatenate %4, %5 in 1 : vector<1x1x4x32xbf16>, vector<1x3x4x32xbf16> -> vector<1x4x4x32xbf16>
    %cst_15 = arith.constant 0.000000e+00 : bf16
    %7 = vector.broadcast %cst_15 : bf16 to vector<1x4x1x32xbf16>
    %8 = vector.extract_strided_slice %6 {offsets = [0, 0, 0, 0], sizes = [1, 4, 3, 32], strides = [1, 1, 1, 1]} : vector<1x4x4x32xbf16> to vector<1x4x3x32xbf16>
    %9 = tpu.concatenate %7, %8 in 2 : vector<1x4x1x32xbf16>, vector<1x4x3x32xbf16> -> vector<1x4x4x32xbf16>
    %cst_16 = arith.constant 0.000000e+00 : bf16
    %10 = vector.broadcast %cst_16 : bf16 to vector<1x1x4x32xbf16>
    %11 = vector.extract_strided_slice %2 {offsets = [0, 0, 0, 0], sizes = [1, 3, 4, 32], strides = [1, 1, 1, 1]} : vector<1x4x4x32xbf16> to vector<1x3x4x32xbf16>
    %12 = tpu.concatenate %10, %11 in 1 : vector<1x1x4x32xbf16>, vector<1x3x4x32xbf16> -> vector<1x4x4x32xbf16>
    %cst_17 = arith.constant 0.000000e+00 : bf16
    %13 = vector.broadcast %cst_17 : bf16 to vector<1x1x4x32xbf16>
    %14 = vector.extract_strided_slice %3 {offsets = [0, 0, 0, 0], sizes = [1, 3, 4, 32], strides = [1, 1, 1, 1]} : vector<1x4x4x32xbf16> to vector<1x3x4x32xbf16>
    %15 = tpu.concatenate %13, %14 in 1 : vector<1x1x4x32xbf16>, vector<1x3x4x32xbf16> -> vector<1x4x4x32xbf16>
    %cst_18 = arith.constant 0.000000e+00 : bf16
    %16 = vector.broadcast %cst_18 : bf16 to vector<1x4x1x32xbf16>
    %17 = vector.extract_strided_slice %1 {offsets = [0, 0, 0, 0], sizes = [1, 4, 3, 32], strides = [1, 1, 1, 1]} : vector<1x4x4x32xbf16> to vector<1x4x3x32xbf16>
    %18 = tpu.concatenate %16, %17 in 2 : vector<1x4x1x32xbf16>, vector<1x4x3x32xbf16> -> vector<1x4x4x32xbf16>
    %cst_19 = arith.constant 0.000000e+00 : bf16
    %19 = vector.broadcast %cst_19 : bf16 to vector<1x4x1x32xbf16>
    %20 = vector.extract_strided_slice %3 {offsets = [0, 0, 0, 0], sizes = [1, 4, 3, 32], strides = [1, 1, 1, 1]} : vector<1x4x4x32xbf16> to vector<1x4x3x32xbf16>
    %21 = tpu.concatenate %19, %20 in 2 : vector<1x4x1x32xbf16>, vector<1x4x3x32xbf16> -> vector<1x4x4x32xbf16>
    %cst_20 = arith.constant 0.000000e+00 : f32
    %22 = vector.broadcast %cst_20 : f32 to vector<16x64xf32>
    %23 = vector.shape_cast %9 : vector<1x4x4x32xbf16> to vector<16x32xbf16>
    %c0_21 = arith.constant 0 : index
    %c0_22 = arith.constant 0 : index
    %c0_23 = arith.constant 0 : index
    %c0_24 = arith.constant 0 : index
    %24 = vector.load %arg5[%c0_21, %c0_22, %c0_23, %c0_24] : memref<3x3x32x64xbf16, #tpu.memory_space<vmem>>, vector<1x1x32x64xbf16>
    %25 = vector.shape_cast %24 : vector<1x1x32x64xbf16> to vector<32x64xbf16>
    %cst_25 = arith.constant dense<0.000000e+00> : vector<16x64xf32>
    %26 = tpu.matmul %23, %25, %cst_25 {dimension_numbers = #tpu.dot_dimension_numbers<[1], [0], [0], [1], [0, 0, 1, 1], [], []>} : vector<16x32xbf16>, vector<32x64xbf16>, vector<16x64xf32> -> vector<16x64xf32>
    %27 = arith.addf %22, %26 : vector<16x64xf32>
    %28 = vector.shape_cast %12 : vector<1x4x4x32xbf16> to vector<16x32xbf16>
    %c0_26 = arith.constant 0 : index
    %c1 = arith.constant 1 : index
    %c0_27 = arith.constant 0 : index
    %c0_28 = arith.constant 0 : index
    %29 = vector.load %arg5[%c0_26, %c1, %c0_27, %c0_28] : memref<3x3x32x64xbf16, #tpu.memory_space<vmem>>, vector<1x1x32x64xbf16>
    %30 = vector.shape_cast %29 : vector<1x1x32x64xbf16> to vector<32x64xbf16>
    %cst_29 = arith.constant dense<0.000000e+00> : vector<16x64xf32>
    %31 = tpu.matmul %28, %30, %cst_29 {dimension_numbers = #tpu.dot_dimension_numbers<[1], [0], [0], [1], [0, 0, 1, 1], [], []>} : vector<16x32xbf16>, vector<32x64xbf16>, vector<16x64xf32> -> vector<16x64xf32>
    %32 = arith.addf %27, %31 : vector<16x64xf32>
    %33 = vector.shape_cast %15 : vector<1x4x4x32xbf16> to vector<16x32xbf16>
    %c0_30 = arith.constant 0 : index
    %c2 = arith.constant 2 : index
    %c0_31 = arith.constant 0 : index
    %c0_32 = arith.constant 0 : index
    %34 = vector.load %arg5[%c0_30, %c2, %c0_31, %c0_32] : memref<3x3x32x64xbf16, #tpu.memory_space<vmem>>, vector<1x1x32x64xbf16>
    %35 = vector.shape_cast %34 : vector<1x1x32x64xbf16> to vector<32x64xbf16>
    %cst_33 = arith.constant dense<0.000000e+00> : vector<16x64xf32>
    %36 = tpu.matmul %33, %35, %cst_33 {dimension_numbers = #tpu.dot_dimension_numbers<[1], [0], [0], [1], [0, 0, 1, 1], [], []>} : vector<16x32xbf16>, vector<32x64xbf16>, vector<16x64xf32> -> vector<16x64xf32>
    %37 = arith.addf %32, %36 : vector<16x64xf32>
    %38 = vector.shape_cast %18 : vector<1x4x4x32xbf16> to vector<16x32xbf16>
    %c1_34 = arith.constant 1 : index
    %c0_35 = arith.constant 0 : index
    %c0_36 = arith.constant 0 : index
    %c0_37 = arith.constant 0 : index
    %39 = vector.load %arg5[%c1_34, %c0_35, %c0_36, %c0_37] : memref<3x3x32x64xbf16, #tpu.memory_space<vmem>>, vector<1x1x32x64xbf16>
    %40 = vector.shape_cast %39 : vector<1x1x32x64xbf16> to vector<32x64xbf16>
    %cst_38 = arith.constant dense<0.000000e+00> : vector<16x64xf32>
    %41 = tpu.matmul %38, %40, %cst_38 {dimension_numbers = #tpu.dot_dimension_numbers<[1], [0], [0], [1], [0, 0, 1, 1], [], []>} : vector<16x32xbf16>, vector<32x64xbf16>, vector<16x64xf32> -> vector<16x64xf32>
    %42 = arith.addf %37, %41 : vector<16x64xf32>
    %43 = vector.shape_cast %0 : vector<1x4x4x32xbf16> to vector<16x32xbf16>
    %c1_39 = arith.constant 1 : index
    %c1_40 = arith.constant 1 : index
    %c0_41 = arith.constant 0 : index
    %c0_42 = arith.constant 0 : index
    %44 = vector.load %arg5[%c1_39, %c1_40, %c0_41, %c0_42] : memref<3x3x32x64xbf16, #tpu.memory_space<vmem>>, vector<1x1x32x64xbf16>
    %45 = vector.shape_cast %44 : vector<1x1x32x64xbf16> to vector<32x64xbf16>
    %cst_43 = arith.constant dense<0.000000e+00> : vector<16x64xf32>
    %46 = tpu.matmul %43, %45, %cst_43 {dimension_numbers = #tpu.dot_dimension_numbers<[1], [0], [0], [1], [0, 0, 1, 1], [], []>} : vector<16x32xbf16>, vector<32x64xbf16>, vector<16x64xf32> -> vector<16x64xf32>
    %47 = arith.addf %42, %46 : vector<16x64xf32>
    %48 = vector.shape_cast %1 : vector<1x4x4x32xbf16> to vector<16x32xbf16>
    %c1_44 = arith.constant 1 : index
    %c2_45 = arith.constant 2 : index
    %c0_46 = arith.constant 0 : index
    %c0_47 = arith.constant 0 : index
    %49 = vector.load %arg5[%c1_44, %c2_45, %c0_46, %c0_47] : memref<3x3x32x64xbf16, #tpu.memory_space<vmem>>, vector<1x1x32x64xbf16>
    %50 = vector.shape_cast %49 : vector<1x1x32x64xbf16> to vector<32x64xbf16>
    %cst_48 = arith.constant dense<0.000000e+00> : vector<16x64xf32>
    %51 = tpu.matmul %48, %50, %cst_48 {dimension_numbers = #tpu.dot_dimension_numbers<[1], [0], [0], [1], [0, 0, 1, 1], [], []>} : vector<16x32xbf16>, vector<32x64xbf16>, vector<16x64xf32> -> vector<16x64xf32>
    %52 = arith.addf %47, %51 : vector<16x64xf32>
    %53 = vector.shape_cast %21 : vector<1x4x4x32xbf16> to vector<16x32xbf16>
    %c2_49 = arith.constant 2 : index
    %c0_50 = arith.constant 0 : index
    %c0_51 = arith.constant 0 : index
    %c0_52 = arith.constant 0 : index
    %54 = vector.load %arg5[%c2_49, %c0_50, %c0_51, %c0_52] : memref<3x3x32x64xbf16, #tpu.memory_space<vmem>>, vector<1x1x32x64xbf16>
    %55 = vector.shape_cast %54 : vector<1x1x32x64xbf16> to vector<32x64xbf16>
    %cst_53 = arith.constant dense<0.000000e+00> : vector<16x64xf32>
    %56 = tpu.matmul %53, %55, %cst_53 {dimension_numbers = #tpu.dot_dimension_numbers<[1], [0], [0], [1], [0, 0, 1, 1], [], []>} : vector<16x32xbf16>, vector<32x64xbf16>, vector<16x64xf32> -> vector<16x64xf32>
    %57 = arith.addf %52, %56 : vector<16x64xf32>
    %58 = vector.shape_cast %2 : vector<1x4x4x32xbf16> to vector<16x32xbf16>
    %c2_54 = arith.constant 2 : index
    %c1_55 = arith.constant 1 : index
    %c0_56 = arith.constant 0 : index
    %c0_57 = arith.constant 0 : index
    %59 = vector.load %arg5[%c2_54, %c1_55, %c0_56, %c0_57] : memref<3x3x32x64xbf16, #tpu.memory_space<vmem>>, vector<1x1x32x64xbf16>
    %60 = vector.shape_cast %59 : vector<1x1x32x64xbf16> to vector<32x64xbf16>
    %cst_58 = arith.constant dense<0.000000e+00> : vector<16x64xf32>
    %61 = tpu.matmul %58, %60, %cst_58 {dimension_numbers = #tpu.dot_dimension_numbers<[1], [0], [0], [1], [0, 0, 1, 1], [], []>} : vector<16x32xbf16>, vector<32x64xbf16>, vector<16x64xf32> -> vector<16x64xf32>
    %62 = arith.addf %57, %61 : vector<16x64xf32>
    %63 = vector.shape_cast %3 : vector<1x4x4x32xbf16> to vector<16x32xbf16>
    %c2_59 = arith.constant 2 : index
    %c2_60 = arith.constant 2 : index
    %c0_61 = arith.constant 0 : index
    %c0_62 = arith.constant 0 : index
    %64 = vector.load %arg5[%c2_59, %c2_60, %c0_61, %c0_62] : memref<3x3x32x64xbf16, #tpu.memory_space<vmem>>, vector<1x1x32x64xbf16>
    %65 = vector.shape_cast %64 : vector<1x1x32x64xbf16> to vector<32x64xbf16>
    %cst_63 = arith.constant dense<0.000000e+00> : vector<16x64xf32>
    %66 = tpu.matmul %63, %65, %cst_63 {dimension_numbers = #tpu.dot_dimension_numbers<[1], [0], [0], [1], [0, 0, 1, 1], [], []>} : vector<16x32xbf16>, vector<32x64xbf16>, vector<16x64xf32> -> vector<16x64xf32>
    %67 = arith.addf %62, %66 : vector<16x64xf32>
    %c0_64 = arith.constant 0 : index
    %c0_65 = arith.constant 0 : index
    %68 = vector.load %arg6[%c0_64, %c0_65] : memref<1x64xf32, #tpu.memory_space<vmem>>, vector<1x64xf32>
    %69 = vector.shape_cast %68 : vector<1x64xf32> to vector<64xf32>
    %70 = vector.shape_cast %69 : vector<64xf32> to vector<1x64xf32>
    %71 = vector.broadcast %70 : vector<1x64xf32> to vector<16x64xf32>
    %72 = arith.mulf %67, %71 : vector<16x64xf32>
    %c0_66 = arith.constant 0 : index
    %c0_67 = arith.constant 0 : index
    %73 = vector.load %arg7[%c0_66, %c0_67] : memref<1x64xf32, #tpu.memory_space<vmem>>, vector<1x64xf32>
    %74 = vector.shape_cast %73 : vector<1x64xf32> to vector<64xf32>
    %75 = vector.shape_cast %74 : vector<64xf32> to vector<1x64xf32>
    %76 = vector.broadcast %75 : vector<1x64xf32> to vector<16x64xf32>
    %77 = arith.addf %72, %76 : vector<16x64xf32>
    %78 = vector.shape_cast %77 : vector<16x64xf32> to vector<1x4x4x64xf32>
    %c0_68 = arith.constant 0 : index
    %c0_69 = arith.constant 0 : index
    %c0_70 = arith.constant 0 : index
    %79 = vector.load %arg8[%c0_68, %c0_69, %c0_70] : memref<3x3x64xf32, #tpu.memory_space<vmem>>, vector<3x3x64xf32>
    %c0_71 = arith.constant 0 : index
    %c0_72 = arith.constant 0 : index
    %80 = vector.load %arg9[%c0_71, %c0_72] : memref<1x64xf32, #tpu.memory_space<vmem>>, vector<1x64xf32>
    %81 = vector.shape_cast %80 : vector<1x64xf32> to vector<64xf32>
    %cst_73 = arith.constant 0.000000e+00 : f32
    %82 = vector.broadcast %cst_73 : f32 to vector<1x4x4x64xf32>
    %cst_74 = arith.constant 0.000000e+00 : f32
    %83 = vector.broadcast %cst_74 : f32 to vector<1x1x4x64xf32>
    %84 = vector.extract_strided_slice %78 {offsets = [0, 0, 0, 0], sizes = [1, 3, 4, 64], strides = [1, 1, 1, 1]} : vector<1x4x4x64xf32> to vector<1x3x4x64xf32>
    %85 = tpu.concatenate %83, %84 in 1 : vector<1x1x4x64xf32>, vector<1x3x4x64xf32> -> vector<1x4x4x64xf32>
    %cst_75 = arith.constant 0.000000e+00 : f32
    %86 = vector.broadcast %cst_75 : f32 to vector<1x4x1x64xf32>
    %87 = vector.extract_strided_slice %85 {offsets = [0, 0, 0, 0], sizes = [1, 4, 3, 64], strides = [1, 1, 1, 1]} : vector<1x4x4x64xf32> to vector<1x4x3x64xf32>
    %88 = tpu.concatenate %86, %87 in 2 : vector<1x4x1x64xf32>, vector<1x4x3x64xf32> -> vector<1x4x4x64xf32>
    %89 = vector.extract_strided_slice %79 {offsets = [0, 0, 0], sizes = [1, 1, 64], strides = [1, 1, 1]} : vector<3x3x64xf32> to vector<1x1x64xf32>
    %90 = vector.shape_cast %89 : vector<1x1x64xf32> to vector<64xf32>
    %91 = vector.shape_cast %90 : vector<64xf32> to vector<1x1x1x64xf32>
    %92 = vector.broadcast %91 : vector<1x1x1x64xf32> to vector<1x4x4x64xf32>
    %93 = arith.mulf %88, %92 : vector<1x4x4x64xf32>
    %94 = arith.addf %82, %93 : vector<1x4x4x64xf32>
    %95 = vector.extract_strided_slice %79 {offsets = [0, 1, 0], sizes = [1, 1, 64], strides = [1, 1, 1]} : vector<3x3x64xf32> to vector<1x1x64xf32>
    %96 = vector.shape_cast %95 : vector<1x1x64xf32> to vector<64xf32>
    %97 = vector.shape_cast %96 : vector<64xf32> to vector<1x1x1x64xf32>
    %98 = vector.broadcast %97 : vector<1x1x1x64xf32> to vector<1x4x4x64xf32>
    %99 = arith.mulf %85, %98 : vector<1x4x4x64xf32>
    %100 = arith.addf %94, %99 : vector<1x4x4x64xf32>
    %cst_76 = arith.constant 0.000000e+00 : f32
    %101 = vector.broadcast %cst_76 : f32 to vector<1x4x1x64xf32>
    %102 = vector.extract_strided_slice %85 {offsets = [0, 0, 1, 0], sizes = [1, 4, 3, 64], strides = [1, 1, 1, 1]} : vector<1x4x4x64xf32> to vector<1x4x3x64xf32>
    %103 = tpu.concatenate %102, %101 in 2 : vector<1x4x3x64xf32>, vector<1x4x1x64xf32> -> vector<1x4x4x64xf32>
    %104 = vector.extract_strided_slice %79 {offsets = [0, 2, 0], sizes = [1, 1, 64], strides = [1, 1, 1]} : vector<3x3x64xf32> to vector<1x1x64xf32>
    %105 = vector.shape_cast %104 : vector<1x1x64xf32> to vector<64xf32>
    %106 = vector.shape_cast %105 : vector<64xf32> to vector<1x1x1x64xf32>
    %107 = vector.broadcast %106 : vector<1x1x1x64xf32> to vector<1x4x4x64xf32>
    %108 = arith.mulf %103, %107 : vector<1x4x4x64xf32>
    %109 = arith.addf %100, %108 : vector<1x4x4x64xf32>
    %cst_77 = arith.constant 0.000000e+00 : f32
    %110 = vector.broadcast %cst_77 : f32 to vector<1x4x1x64xf32>
    %111 = vector.extract_strided_slice %78 {offsets = [0, 0, 0, 0], sizes = [1, 4, 3, 64], strides = [1, 1, 1, 1]} : vector<1x4x4x64xf32> to vector<1x4x3x64xf32>
    %112 = tpu.concatenate %110, %111 in 2 : vector<1x4x1x64xf32>, vector<1x4x3x64xf32> -> vector<1x4x4x64xf32>
    %113 = vector.extract_strided_slice %79 {offsets = [1, 0, 0], sizes = [1, 1, 64], strides = [1, 1, 1]} : vector<3x3x64xf32> to vector<1x1x64xf32>
    %114 = vector.shape_cast %113 : vector<1x1x64xf32> to vector<64xf32>
    %115 = vector.shape_cast %114 : vector<64xf32> to vector<1x1x1x64xf32>
    %116 = vector.broadcast %115 : vector<1x1x1x64xf32> to vector<1x4x4x64xf32>
    %117 = arith.mulf %112, %116 : vector<1x4x4x64xf32>
    %118 = arith.addf %109, %117 : vector<1x4x4x64xf32>
    %119 = vector.extract_strided_slice %79 {offsets = [1, 1, 0], sizes = [1, 1, 64], strides = [1, 1, 1]} : vector<3x3x64xf32> to vector<1x1x64xf32>
    %120 = vector.shape_cast %119 : vector<1x1x64xf32> to vector<64xf32>
    %121 = vector.shape_cast %120 : vector<64xf32> to vector<1x1x1x64xf32>
    %122 = vector.broadcast %121 : vector<1x1x1x64xf32> to vector<1x4x4x64xf32>
    %123 = arith.mulf %78, %122 : vector<1x4x4x64xf32>
    %124 = arith.addf %118, %123 : vector<1x4x4x64xf32>
    %cst_78 = arith.constant 0.000000e+00 : f32
    %125 = vector.broadcast %cst_78 : f32 to vector<1x4x1x64xf32>
    %126 = vector.extract_strided_slice %78 {offsets = [0, 0, 1, 0], sizes = [1, 4, 3, 64], strides = [1, 1, 1, 1]} : vector<1x4x4x64xf32> to vector<1x4x3x64xf32>
    %127 = tpu.concatenate %126, %125 in 2 : vector<1x4x3x64xf32>, vector<1x4x1x64xf32> -> vector<1x4x4x64xf32>
    %128 = vector.extract_strided_slice %79 {offsets = [1, 2, 0], sizes = [1, 1, 64], strides = [1, 1, 1]} : vector<3x3x64xf32> to vector<1x1x64xf32>
    %129 = vector.shape_cast %128 : vector<1x1x64xf32> to vector<64xf32>
    %130 = vector.shape_cast %129 : vector<64xf32> to vector<1x1x1x64xf32>
    %131 = vector.broadcast %130 : vector<1x1x1x64xf32> to vector<1x4x4x64xf32>
    %132 = arith.mulf %127, %131 : vector<1x4x4x64xf32>
    %133 = arith.addf %124, %132 : vector<1x4x4x64xf32>
    %cst_79 = arith.constant 0.000000e+00 : f32
    %134 = vector.broadcast %cst_79 : f32 to vector<1x1x4x64xf32>
    %135 = vector.extract_strided_slice %78 {offsets = [0, 1, 0, 0], sizes = [1, 3, 4, 64], strides = [1, 1, 1, 1]} : vector<1x4x4x64xf32> to vector<1x3x4x64xf32>
    %136 = tpu.concatenate %135, %134 in 1 : vector<1x3x4x64xf32>, vector<1x1x4x64xf32> -> vector<1x4x4x64xf32>
    %cst_80 = arith.constant 0.000000e+00 : f32
    %137 = vector.broadcast %cst_80 : f32 to vector<1x4x1x64xf32>
    %138 = vector.extract_strided_slice %136 {offsets = [0, 0, 0, 0], sizes = [1, 4, 3, 64], strides = [1, 1, 1, 1]} : vector<1x4x4x64xf32> to vector<1x4x3x64xf32>
    %139 = tpu.concatenate %137, %138 in 2 : vector<1x4x1x64xf32>, vector<1x4x3x64xf32> -> vector<1x4x4x64xf32>
    %140 = vector.extract_strided_slice %79 {offsets = [2, 0, 0], sizes = [1, 1, 64], strides = [1, 1, 1]} : vector<3x3x64xf32> to vector<1x1x64xf32>
    %141 = vector.shape_cast %140 : vector<1x1x64xf32> to vector<64xf32>
    %142 = vector.shape_cast %141 : vector<64xf32> to vector<1x1x1x64xf32>
    %143 = vector.broadcast %142 : vector<1x1x1x64xf32> to vector<1x4x4x64xf32>
    %144 = arith.mulf %139, %143 : vector<1x4x4x64xf32>
    %145 = arith.addf %133, %144 : vector<1x4x4x64xf32>
    %146 = vector.extract_strided_slice %79 {offsets = [2, 1, 0], sizes = [1, 1, 64], strides = [1, 1, 1]} : vector<3x3x64xf32> to vector<1x1x64xf32>
    %147 = vector.shape_cast %146 : vector<1x1x64xf32> to vector<64xf32>
    %148 = vector.shape_cast %147 : vector<64xf32> to vector<1x1x1x64xf32>
    %149 = vector.broadcast %148 : vector<1x1x1x64xf32> to vector<1x4x4x64xf32>
    %150 = arith.mulf %136, %149 : vector<1x4x4x64xf32>
    %151 = arith.addf %145, %150 : vector<1x4x4x64xf32>
    %cst_81 = arith.constant 0.000000e+00 : f32
    %152 = vector.broadcast %cst_81 : f32 to vector<1x4x1x64xf32>
    %153 = vector.extract_strided_slice %136 {offsets = [0, 0, 1, 0], sizes = [1, 4, 3, 64], strides = [1, 1, 1, 1]} : vector<1x4x4x64xf32> to vector<1x4x3x64xf32>
    %154 = tpu.concatenate %153, %152 in 2 : vector<1x4x3x64xf32>, vector<1x4x1x64xf32> -> vector<1x4x4x64xf32>
    %155 = vector.extract_strided_slice %79 {offsets = [2, 2, 0], sizes = [1, 1, 64], strides = [1, 1, 1]} : vector<3x3x64xf32> to vector<1x1x64xf32>
    %156 = vector.shape_cast %155 : vector<1x1x64xf32> to vector<64xf32>
    %157 = vector.shape_cast %156 : vector<64xf32> to vector<1x1x1x64xf32>
    %158 = vector.broadcast %157 : vector<1x1x1x64xf32> to vector<1x4x4x64xf32>
    %159 = arith.mulf %154, %158 : vector<1x4x4x64xf32>
    %160 = arith.addf %151, %159 : vector<1x4x4x64xf32>
    %161 = arith.addf %78, %160 : vector<1x4x4x64xf32>
    %162 = vector.shape_cast %81 : vector<64xf32> to vector<1x1x1x64xf32>
    %163 = vector.broadcast %162 : vector<1x1x1x64xf32> to vector<1x4x4x64xf32>
    %164 = arith.addf %161, %163 : vector<1x4x4x64xf32>
    %165 = vector.shape_cast %164 : vector<1x4x4x64xf32> to vector<16x64xf32>
    %166 = vector.shape_cast %165 : vector<16x64xf32> to vector<1x16x64xf32>
    %c0_82 = arith.constant 0 : index
    %c0_83 = arith.constant 0 : index
    %c0_84 = arith.constant 0 : index
    %167 = vector.load %arg10[%c0_82, %c0_83, %c0_84] : memref<1x16x64xf32, #tpu.memory_space<vmem>>, vector<1x16x64xf32>
    tpu.vector_store %arg10[%c0_82, %c0_83, %c0_84], %166 {strides = array<i32>} : memref<1x16x64xf32, #tpu.memory_space<vmem>>, vector<1x16x64xf32>,
    return
  }
  func.func @transform_0(%arg0: i32) -> (i32, i32, i32, i32) {
    %c0_i32 = arith.constant 0 : i32
    %c0_i32_0 = arith.constant 0 : i32
    %c0_i32_1 = arith.constant 0 : i32
    %c0_i32_2 = arith.constant 0 : i32
    return %arg0, %c0_i32, %c0_i32_0, %c0_i32_1 : i32, i32, i32, i32
  }
  func.func @transform_1(%arg0: i32) -> (i32, i32, i32, i32) {
    %c0_i32 = arith.constant 0 : i32
    %c0_i32_0 = arith.constant 0 : i32
    %c0_i32_1 = arith.constant 0 : i32
    %c0_i32_2 = arith.constant 0 : i32
    return %arg0, %c0_i32, %c0_i32_0, %c0_i32_1 : i32, i32, i32, i32
  }
  func.func @transform_2(%arg0: i32) -> (i32, i32, i32, i32) {
    %c0_i32 = arith.constant 0 : i32
    %c0_i32_0 = arith.constant 0 : i32
    %c0_i32_1 = arith.constant 0 : i32
    %c0_i32_2 = arith.constant 0 : i32
    return %arg0, %c0_i32, %c0_i32_0, %c0_i32_1 : i32, i32, i32, i32
  }
  func.func @transform_3(%arg0: i32) -> (i32, i32, i32, i32) {
    %c0_i32 = arith.constant 0 : i32
    %c0_i32_0 = arith.constant 0 : i32
    %c0_i32_1 = arith.constant 0 : i32
    %c0_i32_2 = arith.constant 0 : i32
    return %arg0, %c0_i32, %c0_i32_0, %c0_i32_1 : i32, i32, i32, i32
  }
  func.func @transform_4(%arg0: i32) -> (i32, i32, i32, i32) {
    %c0_i32 = arith.constant 0 : i32
    %c0_i32_0 = arith.constant 0 : i32
    %c0_i32_1 = arith.constant 0 : i32
    %c0_i32_2 = arith.constant 0 : i32
    %c0_i32_3 = arith.constant 0 : i32
    return %c0_i32, %c0_i32_0, %c0_i32_1, %c0_i32_2 : i32, i32, i32, i32
  }
  func.func @transform_5(%arg0: i32) -> (i32, i32) {
    %c0_i32 = arith.constant 0 : i32
    %c0_i32_0 = arith.constant 0 : i32
    %c0_i32_1 = arith.constant 0 : i32
    return %c0_i32, %c0_i32_0 : i32, i32
  }
  func.func @transform_6(%arg0: i32) -> (i32, i32) {
    %c0_i32 = arith.constant 0 : i32
    %c0_i32_0 = arith.constant 0 : i32
    %c0_i32_1 = arith.constant 0 : i32
    return %c0_i32, %c0_i32_0 : i32, i32
  }
  func.func @transform_7(%arg0: i32) -> (i32, i32, i32) {
    %c0_i32 = arith.constant 0 : i32
    %c0_i32_0 = arith.constant 0 : i32
    %c0_i32_1 = arith.constant 0 : i32
    %c0_i32_2 = arith.constant 0 : i32
    return %c0_i32, %c0_i32_0, %c0_i32_1 : i32, i32, i32
  }
  func.func @transform_8(%arg0: i32) -> (i32, i32) {
    %c0_i32 = arith.constant 0 : i32
    %c0_i32_0 = arith.constant 0 : i32
    %c0_i32_1 = arith.constant 0 : i32
    return %c0_i32, %c0_i32_0 : i32, i32
  }
  func.func @transform_9(%arg0: i32) -> (i32, i32, i32) {
    %c0_i32 = arith.constant 0 : i32
    %c0_i32_0 = arith.constant 0 : i32
    %c0_i32_1 = arith.constant 0 : i32
    return %arg0, %c0_i32, %c0_i32_0 : i32, i32, i32
  }
}

</mosaic_0001>

<llo_original>
// kernel: globalstage_forward.5
$region0: #{globalstage_forward.5}
  #allocation0 [shape = 'u32[]', space=smem, size = 0x4, offset = 0x4, fixed_abs, tag = 'smem constant byte address 0x4 - core index']
  #allocation1 [shape = 'u32[144,128]{1,0:T(1,128)}', space=vmem, size = 0x12000, scoped, tag = 'internal scratch']
  %s0 = inlined_call_operand.vmem [shape: bf16[2,4,4,32], index: 0, kind: input, shape index: {}]
  %s1 = inlined_call_operand.vmem [shape: bf16[2,4,4,32], index: 1, kind: input, shape index: {}]
  %s2 = inlined_call_operand.vmem [shape: bf16[2,4,4,32], index: 2, kind: input, shape index: {}]
  %s3 = inlined_call_operand.vmem [shape: bf16[2,4,4,32], index: 3, kind: input, shape index: {}]
  %s4 = inlined_call_operand.vmem [shape: bf16[3,3,32,64], index: 4, kind: input, shape index: {}]
  %s5 = inlined_call_operand.vmem [shape: f32[1,64], index: 5, kind: input, shape index: {}]
  %s6 = inlined_call_operand.vmem [shape: f32[1,64], index: 6, kind: input, shape index: {}]
  %s7 = inlined_call_operand.vmem [shape: f32[3,3,64], index: 7, kind: input, shape index: {}]
  %s8 = inlined_call_operand.vmem [shape: f32[1,64], index: 8, kind: input, shape index: {}]
  %s9 = inlined_call_operand.hbm [shape: f32[2,16,64], index: 9, kind: output, shape index: {}]
  %s10 = sld [smem:[#allocation0]]
  $region69: #{globalstage_forward.5} parent=0
    _
  %s12 = ssub.s32 1, %s10
  %s13 = scalar_select 0, %s12, %s10
  $region1: #{globalstage_forward.5} parent=0
    #allocation2 [shape = 'u8[16384]{0}', space=vmem, size = 0x4000, scoped, tag = 'output window, operand 0']
    #allocation3 [shape = 's32[2]{0}', space=sflag, size = 0x8, scoped, tag = 'scoped memory for globalstage_forward.5']
    %14 = vsyncpa [#allocation3], 0
    %s15 = scalar_lea.sflag [#allocation3], 1
    %16 = vsyncpa %s15, 0
    loop: start=0, step=1, limit=4
    $region2: #{globalstage_forward.5} parent=1 // loop_pre_header
      _
    $region3: #{globalstage_forward.5} parent=1 // loop_header
      %s18 = sphi 0, %s22
      %p19 = scmp.ge.s32.totalorder %s18, 4
      %s28 = sphi 0, %s30
      %s31 = sphi 0, %s28
      %s32 = sphi 0, %s31
      %s48 = sphi 0, %s32
      %s54 = sphi 0, %s56
      %s57 = sphi 0, %s54
      %s58 = sphi 0, %s57
      %s74 = sphi 0, %s58
      %s80 = sphi 0, %s82
      %s83 = sphi 0, %s80
      %s84 = sphi 0, %s83
      %s100 = sphi 0, %s84
      %s106 = sphi 0, %s108
      %s109 = sphi 0, %s106
      %s110 = sphi 0, %s109
      %s126 = sphi 0, %s110
      %s130 = sphi 0, %s130
      %s132 = sphi 0, %s130
      %s133 = sphi 0, %s132
      %s147 = sphi 0, %s133
      %s151 = sphi 0, %s151
      %s153 = sphi 0, %s151
      %s154 = sphi 0, %s153
      %s168 = sphi 0, %s154
      %s172 = sphi 0, %s172
      %s174 = sphi 0, %s172
      %s175 = sphi 0, %s174
      %s189 = sphi 0, %s175
      %s193 = sphi 0, %s193
      %s195 = sphi 0, %s193
      %s196 = sphi 0, %s195
      %s210 = sphi 0, %s196
      %s214 = sphi 0, %s214
      %s216 = sphi 0, %s214
      %s217 = sphi 0, %s216
      %s231 = sphi 0, %s217
      %s237 = sphi 0, %s239
      %s240 = sphi 0, %s237
      %s241 = sphi 0, %s240
      %s257 = sphi 0, %s241
    $region4: #{globalstage_forward.5} parent=1 // loop_header_branch
      %21 = sbr.rel (%p19) target = $region8
    $region5: #{globalstage_forward.5} parent=1 // loop_body
      %s23 = ssub.s32 %s18, 1
      %s24 = ssub.s32 %s18, 2
      %s25 = sadd.s32 %s18, 1
      %s26 = ssub.s32 %s18, %s25
      %p27 = scmp.eq.s32.totalorder %s26, 0
      %s29 = sadd.s32 %s28, 1
      %s30 = scalar_select %p27, %s28, %s29
      %p33 = pneg %p27
      %p34 = scmp.eq.s32.totalorder %s18, 1
      %p35 = por %p33, %p34
      %p36 = scmp.ne.s32.totalorder %s28, %s31
      %p37 = scmp.eq.s32.totalorder %s18, 0
      %p38 = por %p36, %p37
      %p39 = scmp.ne.s32.totalorder %s28, %s31
      %p40 = scmp.eq.s32.totalorder %s23, 1
      %p41 = por %p39, %p40
      %p42 = scmp.ne.s32.totalorder %s31, %s32
      %p43 = scmp.eq.s32.totalorder %s23, 0
      %p44 = por %p42, %p43
      %p45 = scmp.ne.s32.totalorder %s31, %s32
      %p46 = scmp.eq.s32.totalorder %s24, 1
      %p47 = por %p45, %p46
      %p49 = scmp.ne.s32.totalorder %s32, %s48
      %p50 = scmp.eq.s32.totalorder %s24, 0
      %p51 = por %p49, %p50
      %s52 = ssub.s32 %s18, %s25
      %p53 = scmp.eq.s32.totalorder %s52, 0
      %s55 = sadd.s32 %s54, 1
      %s56 = scalar_select %p53, %s54, %s55
      %p59 = pneg %p53
      %p60 = scmp.eq.s32.totalorder %s18, 1
      %p61 = por %p59, %p60
      %p62 = scmp.ne.s32.totalorder %s54, %s57
      %p63 = scmp.eq.s32.totalorder %s18, 0
      %p64 = por %p62, %p63
      %p65 = scmp.ne.s32.totalorder %s54, %s57
      %p66 = scmp.eq.s32.totalorder %s23, 1
      %p67 = por %p65, %p66
      %p68 = scmp.ne.s32.totalorder %s57, %s58
      %p69 = scmp.eq.s32.totalorder %s23, 0
      %p70 = por %p68, %p69
      %p71 = scmp.ne.s32.totalorder %s57, %s58
      %p72 = scmp.eq.s32.totalorder %s24, 1
      %p73 = por %p71, %p72
      %p75 = scmp.ne.s32.totalorder %s58, %s74
      %p76 = scmp.eq.s32.totalorder %s24, 0
      %p77 = por %p75, %p76
      %s78 = ssub.s32 %s18, %s25
      %p79 = scmp.eq.s32.totalorder %s78, 0
      %s81 = sadd.s32 %s80, 1
      %s82 = scalar_select %p79, %s80, %s81
      %p85 = pneg %p79
      %p86 = scmp.eq.s32.totalorder %s18, 1
      %p87 = por %p85, %p86
      %p88 = scmp.ne.s32.totalorder %s80, %s83
      %p89 = scmp.eq.s32.totalorder %s18, 0
      %p90 = por %p88, %p89
      %p91 = scmp.ne.s32.totalorder %s80, %s83
      %p92 = scmp.eq.s32.totalorder %s23, 1
      %p93 = por %p91, %p92
      %p94 = scmp.ne.s32.totalorder %s83, %s84
      %p95 = scmp.eq.s32.totalorder %s23, 0
      %p96 = por %p94, %p95
      %p97 = scmp.ne.s32.totalorder %s83, %s84
      %p98 = scmp.eq.s32.totalorder %s24, 1
      %p99 = por %p97, %p98
      %p101 = scmp.ne.s32.totalorder %s84, %s100
      %p102 = scmp.eq.s32.totalorder %s24, 0
      %p103 = por %p101, %p102
      %s104 = ssub.s32 %s18, %s25
      %p105 = scmp.eq.s32.totalorder %s104, 0
      %s107 = sadd.s32 %s106, 1
      %s108 = scalar_select %p105, %s106, %s107
      %p111 = pneg %p105
      %p112 = scmp.eq.s32.totalorder %s18, 1
      %p113 = por %p111, %p112
      %p114 = scmp.ne.s32.totalorder %s106, %s109
      %p115 = scmp.eq.s32.totalorder %s18, 0
      %p116 = por %p114, %p115
      %p117 = scmp.ne.s32.totalorder %s106, %s109
      %p118 = scmp.eq.s32.totalorder %s23, 1
      %p119 = por %p117, %p118
      %p120 = scmp.ne.s32.totalorder %s109, %s110
      %p121 = scmp.eq.s32.totalorder %s23, 0
      %p122 = por %p120, %p121
      %p123 = scmp.ne.s32.totalorder %s109, %s110
      %p124 = scmp.eq.s32.totalorder %s24, 1
      %p125 = por %p123, %p124
      %p127 = scmp.ne.s32.totalorder %s110, %s126
      %p128 = scmp.eq.s32.totalorder %s24, 0
      %p129 = por %p127, %p128
      %s131 = sadd.s32 %s130, 1
      %p134 = scmp.eq.s32.totalorder %s18, 1
      %p135 = scmp.ne.s32.totalorder %s130, %s132
      %p136 = scmp.eq.s32.totalorder %s18, 0
      %p137 = por %p135, %p136
      %p138 = scmp.ne.s32.totalorder %s130, %s132
      %p139 = scmp.eq.s32.totalorder %s23, 1
      %p140 = por %p138, %p139
      %p141 = scmp.ne.s32.totalorder %s132, %s133
      %p142 = scmp.eq.s32.totalorder %s23, 0
      %p143 = por %p141, %p142
      %p144 = scmp.ne.s32.totalorder %s132, %s133
      %p145 = scmp.eq.s32.totalorder %s24, 1
      %p146 = por %p144, %p145
      %p148 = scmp.ne.s32.totalorder %s133, %s147
      %p149 = scmp.eq.s32.totalorder %s24, 0
      %p150 = por %p148, %p149
      %s152 = sadd.s32 %s151, 1
      %p155 = scmp.eq.s32.totalorder %s18, 1
      %p156 = scmp.ne.s32.totalorder %s151, %s153
      %p157 = scmp.eq.s32.totalorder %s18, 0
      %p158 = por %p156, %p157
      %p159 = scmp.ne.s32.totalorder %s151, %s153
      %p160 = scmp.eq.s32.totalorder %s23, 1
      %p161 = por %p159, %p160
      %p162 = scmp.ne.s32.totalorder %s153, %s154
      %p163 = scmp.eq.s32.totalorder %s23, 0
      %p164 = por %p162, %p163
      %p165 = scmp.ne.s32.totalorder %s153, %s154
      %p166 = scmp.eq.s32.totalorder %s24, 1
      %p167 = por %p165, %p166
      %p169 = scmp.ne.s32.totalorder %s154, %s168
      %p170 = scmp.eq.s32.totalorder %s24, 0
      %p171 = por %p169, %p170
      %s173 = sadd.s32 %s172, 1
      %p176 = scmp.eq.s32.totalorder %s18, 1
      %p177 = scmp.ne.s32.totalorder %s172, %s174
      %p178 = scmp.eq.s32.totalorder %s18, 0
      %p179 = por %p177, %p178
      %p180 = scmp.ne.s32.totalorder %s172, %s174
      %p181 = scmp.eq.s32.totalorder %s23, 1
      %p182 = por %p180, %p181
      %p183 = scmp.ne.s32.totalorder %s174, %s175
      %p184 = scmp.eq.s32.totalorder %s23, 0
      %p185 = por %p183, %p184
      %p186 = scmp.ne.s32.totalorder %s174, %s175
      %p187 = scmp.eq.s32.totalorder %s24, 1
      %p188 = por %p186, %p187
      %p190 = scmp.ne.s32.totalorder %s175, %s189
      %p191 = scmp.eq.s32.totalorder %s24, 0
      %p192 = por %p190, %p191
      %s194 = sadd.s32 %s193, 1
      %p197 = scmp.eq.s32.totalorder %s18, 1
      %p198 = scmp.ne.s32.totalorder %s193, %s195
      %p199 = scmp.eq.s32.totalorder %s18, 0
      %p200 = por %p198, %p199
      %p201 = scmp.ne.s32.totalorder %s193, %s195
      %p202 = scmp.eq.s32.totalorder %s23, 1
      %p203 = por %p201, %p202
      %p204 = scmp.ne.s32.totalorder %s195, %s196
      %p205 = scmp.eq.s32.totalorder %s23, 0
      %p206 = por %p204, %p205
      %p207 = scmp.ne.s32.totalorder %s195, %s196
      %p208 = scmp.eq.s32.totalorder %s24, 1
      %p209 = por %p207, %p208
      %p211 = scmp.ne.s32.totalorder %s196, %s210
      %p212 = scmp.eq.s32.totalorder %s24, 0
      %p213 = por %p211, %p212
      %s215 = sadd.s32 %s214, 1
      %p218 = scmp.eq.s32.totalorder %s18, 1
      %p219 = scmp.ne.s32.totalorder %s214, %s216
      %p220 = scmp.eq.s32.totalorder %s18, 0
      %p221 = por %p219, %p220
      %p222 = scmp.ne.s32.totalorder %s214, %s216
      %p223 = scmp.eq.s32.totalorder %s23, 1
      %p224 = por %p222, %p223
      %p225 = scmp.ne.s32.totalorder %s216, %s217
      %p226 = scmp.eq.s32.totalorder %s23, 0
      %p227 = por %p225, %p226
      %p228 = scmp.ne.s32.totalorder %s216, %s217
      %p229 = scmp.eq.s32.totalorder %s24, 1
      %p230 = por %p228, %p229
      %p232 = scmp.ne.s32.totalorder %s217, %s231
      %p233 = scmp.eq.s32.totalorder %s24, 0
      %p234 = por %p232, %p233
      %s235 = ssub.s32 %s18, %s25
      %p236 = scmp.eq.s32.totalorder %s235, 0
      %s238 = sadd.s32 %s237, 1
      %s239 = scalar_select %p236, %s237, %s238
      %p242 = pneg %p236
      %p243 = scmp.eq.s32.totalorder %s18, 1
      %p244 = por %p242, %p243
      %p245 = scmp.ne.s32.totalorder %s237, %s240
      %p246 = scmp.eq.s32.totalorder %s18, 0
      %p247 = por %p245, %p246
      %p248 = scmp.ne.s32.totalorder %s237, %s240
      %p249 = scmp.eq.s32.totalorder %s23, 1
      %p250 = por %p248, %p249
      %p251 = scmp.ne.s32.totalorder %s240, %s241
      %p252 = scmp.eq.s32.totalorder %s23, 0
      %p253 = por %p251, %p252
      %p254 = scmp.ne.s32.totalorder %s240, %s241
      %p255 = scmp.eq.s32.totalorder %s24, 1
      %p256 = por %p254, %p255
      %p258 = scmp.ne.s32.totalorder %s241, %s257
      %p259 = scmp.eq.s32.totalorder %s24, 0
      %p260 = por %p258, %p259
      %p261 = scmp.le.s32.totalorder 1, %s18
      %p262 = scmp.lt.s32.totalorder %s18, 3
      %p263 = pnand %p261, %p262
      %p264 = pneg %p263
      // Predicated region
      $region9: #{globalstage_forward.5} parent=5 // pred_check
        _
      $region10: #{globalstage_forward.5} parent=5 // pred_check_branch
        %266 = sbr.rel (%p263) target = $region12
      $region11: #{globalstage_forward.5} parent=5 // pred_region
        %s267 = ssub.s32 %s18, 1
        // Predicated region
        $region13: #{globalstage_forward.5} parent=11 // pred_check
          %p268 = pneg %p143
        $region14: #{globalstage_forward.5} parent=11 // pred_check_branch
          %270 = sbr.rel (%p268) target = $region16
        $region15: #{globalstage_forward.5} parent=11 // pred_region
          _
        $region16: #{globalstage_forward.5} parent=11 // pred_fallthru
          _
        // Predicated region
        $region17: #{globalstage_forward.5} parent=11 // pred_check
          %p271 = pneg %p164
        $region18: #{globalstage_forward.5} parent=11 // pred_check_branch
          %273 = sbr.rel (%p271) target = $region20
        $region19: #{globalstage_forward.5} parent=11 // pred_region
          _
        $region20: #{globalstage_forward.5} parent=11 // pred_fallthru
          _
        // Predicated region
        $region21: #{globalstage_forward.5} parent=11 // pred_check
          %p274 = pneg %p185
        $region22: #{globalstage_forward.5} parent=11 // pred_check_branch
          %276 = sbr.rel (%p274) target = $region24
        $region23: #{globalstage_forward.5} parent=11 // pred_region
          _
        $region24: #{globalstage_forward.5} parent=11 // pred_fallthru
          _
        // Predicated region
        $region25: #{globalstage_forward.5} parent=11 // pred_check
          %p277 = pneg %p206
        $region26: #{globalstage_forward.5} parent=11 // pred_check_branch
          %279 = sbr.rel (%p277) target = $region28
        $region27: #{globalstage_forward.5} parent=11 // pred_region
          _
        $region28: #{globalstage_forward.5} parent=11 // pred_fallthru
          _
        // Predicated region
        $region29: #{globalstage_forward.5} parent=11 // pred_check
          %p280 = pneg %p227
        $region30: #{globalstage_forward.5} parent=11 // pred_check_branch
          %282 = sbr.rel (%p280) target = $region32
        $region31: #{globalstage_forward.5} parent=11 // pred_region
          _
        $region32: #{globalstage_forward.5} parent=11 // pred_fallthru
          _
      $region12: #{globalstage_forward.5} parent=5 // pred_fallthru
        _
      %p283 = scmp.lt.s32.totalorder %s18, 2
      // Predicated region
      $region33: #{globalstage_forward.5} parent=5 // pred_check
        %p284 = pneg %p283
      $region34: #{globalstage_forward.5} parent=5 // pred_check_branch
        %286 = sbr.rel (%p284) target = $region36
      $region35: #{globalstage_forward.5} parent=5 // pred_region
        // Predicated region
        $region37: #{globalstage_forward.5} parent=35 // pred_check
          %p287 = pneg %p38
        $region38: #{globalstage_forward.5} parent=35 // pred_check_branch
          %289 = sbr.rel (%p287) target = $region40
        $region39: #{globalstage_forward.5} parent=35 // pred_region
          %p290 = scmp.lt.s32.totalorder %s18, 1
          %s291 = scalar_select %p290, %s18, 1
          %s292 = smul.addr %s291, 4
          %s293 = smul.addr %s292, 2
          %s294 = scalar_lea.vmem %s0, %s293
        $region40: #{globalstage_forward.5} parent=35 // pred_fallthru
          _
        // Predicated region
        $region41: #{globalstage_forward.5} parent=35 // pred_check
          %p295 = pneg %p64
        $region42: #{globalstage_forward.5} parent=35 // pred_check_branch
          %297 = sbr.rel (%p295) target = $region44
        $region43: #{globalstage_forward.5} parent=35 // pred_region
          %p298 = scmp.lt.s32.totalorder %s18, 1
          %s299 = scalar_select %p298, %s18, 1
          %s300 = smul.addr %s299, 4
          %s301 = smul.addr %s300, 2
          %s302 = scalar_lea.vmem %s1, %s301
        $region44: #{globalstage_forward.5} parent=35 // pred_fallthru
          _
        // Predicated region
        $region45: #{globalstage_forward.5} parent=35 // pred_check
          %p303 = pneg %p90
        $region46: #{globalstage_forward.5} parent=35 // pred_check_branch
          %305 = sbr.rel (%p303) target = $region48
        $region47: #{globalstage_forward.5} parent=35 // pred_region
          %p306 = scmp.lt.s32.totalorder %s18, 1
          %s307 = scalar_select %p306, %s18, 1
          %s308 = smul.addr %s307, 4
          %s309 = smul.addr %s308, 2
          %s310 = scalar_lea.vmem %s2, %s309
        $region48: #{globalstage_forward.5} parent=35 // pred_fallthru
          _
        // Predicated region
        $region49: #{globalstage_forward.5} parent=35 // pred_check
          %p311 = pneg %p116
        $region50: #{globalstage_forward.5} parent=35 // pred_check_branch
          %313 = sbr.rel (%p311) target = $region52
        $region51: #{globalstage_forward.5} parent=35 // pred_region
          %p314 = scmp.lt.s32.totalorder %s18, 1
          %s315 = scalar_select %p314, %s18, 1
          %s316 = smul.addr %s315, 4
          %s317 = smul.addr %s316, 2
          %s318 = scalar_lea.vmem %s3, %s317
        $region52: #{globalstage_forward.5} parent=35 // pred_fallthru
          _
      $region36: #{globalstage_forward.5} parent=5 // pred_fallthru
        _
      %p319 = scmp.le.s32.totalorder 1, %s18
      %p320 = scmp.lt.s32.totalorder %s18, 3
      %p321 = pnand %p319, %p320
      %p322 = pneg %p321
      // Predicated region
      $region53: #{globalstage_forward.5} parent=5 // pred_check
        _
      $region54: #{globalstage_forward.5} parent=5 // pred_check_branch
        %324 = sbr.rel (%p321) target = $region56
      $region55: #{globalstage_forward.5} parent=5 // pred_region
        %s325 = ssub.s32 %s18, 1
        %p326 = scmp.lt.s32.totalorder %s23, 1
        %s327 = scalar_select %p326, %s23, 1
        %s328 = smul.addr %s327, 4
        %s329 = smul.addr %s328, 2
        %s330 = scalar_lea.vmem %s0, %s329
        %p331 = pneg %p44
        %p332 = pneg %p41
        %p333 = scmp.lt.s32.totalorder %s23, 1
        %s334 = scalar_select %p333, %s23, 1
        %s335 = smul.addr %s334, 4
        %s336 = smul.addr %s335, 2
        %s337 = scalar_lea.vmem %s1, %s336
        %p338 = pneg %p70
        %p339 = pneg %p67
        %p340 = scmp.lt.s32.totalorder %s23, 1
        %s341 = scalar_select %p340, %s23, 1
        %s342 = smul.addr %s341, 4
        %s343 = smul.addr %s342, 2
        %s344 = scalar_lea.vmem %s2, %s343
        %p345 = pneg %p96
        %p346 = pneg %p93
        %p347 = scmp.lt.s32.totalorder %s23, 1
        %s348 = scalar_select %p347, %s23, 1
        %s349 = smul.addr %s348, 4
        %s350 = smul.addr %s349, 2
        %s351 = scalar_lea.vmem %s3, %s350
        %p352 = pneg %p122
        %p353 = pneg %p119
        %p354 = pneg %p143
        %p355 = pneg %p140
        %p356 = pneg %p164
        %p357 = pneg %p161
        %p358 = pneg %p185
        %p359 = pneg %p182
        %p360 = pneg %p206
        %p361 = pneg %p203
        %p362 = pneg %p227
        %p363 = pneg %p224
        %p364 = pneg %p253
        %p365 = pneg %p250
        %s366 = sand.u32 %s240, 1
        %s367 = scalar_lea.sflag [#allocation3], %s366
        %s368 = sand.u32 %s240, 1
        %s369 = smul.addr %s368, 16
        %s370 = scalar_lea.vmem [#allocation2], %s369
        %p371 = scmp.lt.s32.totalorder %s23, 1
        %s372 = scalar_select %p371, %s23, 1
        %s373 = smul.addr %s372, 4
        %s374 = smul.addr %s373, 2
        %s375 = scalar_lea.vmem %s0, %s374
        %p376 = scmp.lt.s32.totalorder %s23, 1
        %s377 = scalar_select %p376, %s23, 1
        %s378 = smul.addr %s377, 4
        %s379 = smul.addr %s378, 2
        %s380 = scalar_lea.vmem %s1, %s379
        %p381 = scmp.lt.s32.totalorder %s23, 1
        %s382 = scalar_select %p381, %s23, 1
        %s383 = smul.addr %s382, 4
        %s384 = smul.addr %s383, 2
        %s385 = scalar_lea.vmem %s2, %s384
        %p386 = scmp.lt.s32.totalorder %s23, 1
        %s387 = scalar_select %p386, %s23, 1
        %s388 = smul.addr %s387, 4
        %s389 = smul.addr %s388, 2
        %s390 = scalar_lea.vmem %s3, %s389
        %v392 = vld [vmem:[%s375] sm:$0x3]
        %v393 = vld [vmem:[%s375 + $0x2] sm:$0x3]
        %v394 = vld [vmem:[%s375 + $0x4] sm:$0x3]
        %v395 = vld [vmem:[%s375 + $0x6] sm:$0x3]
        %v396 = vld [vmem:[%s380] sm:$0x3]
        %v397 = vld [vmem:[%s380 + $0x2] sm:$0x3]
        %v398 = vld [vmem:[%s380 + $0x4] sm:$0x3]
        %v399 = vld [vmem:[%s380 + $0x6] sm:$0x3]
        %v400 = vld [vmem:[%s385] sm:$0x3]
        %v401 = vld [vmem:[%s385 + $0x2] sm:$0x3]
        %v402 = vld [vmem:[%s385 + $0x4] sm:$0x3]
        %v403 = vld [vmem:[%s385 + $0x6] sm:$0x3]
        %v404 = vld [vmem:[%s390] sm:$0x3]
        %v405 = vld [vmem:[%s390 + $0x2] sm:$0x3]
        %v406 = vld [vmem:[%s390 + $0x4] sm:$0x3]
        %v407 = vld [vmem:[%s390 + $0x6] sm:$0x3]
        %v409 = vshrl.u32 0, 16
        %v411 = vrot.slane %v409, 7
        %v412 = vshll.u32 0, 16
        %v414 = vor.u32 %v411, %v412
        %v416 = vshrl.u32 %v404, 16
        %v418 = vrot.slane %v416, 7
        %v419 = vshll.u32 %v404, 16
        %v421 = vor.u32 %v418, %v419
        %v423 = vshrl.u32 %v405, 16
        %v425 = vrot.slane %v423, 7
        %v426 = vshll.u32 %v405, 16
        %v428 = vor.u32 %v425, %v426
        %v430 = vshrl.u32 %v406, 16
        %v432 = vrot.slane %v430, 7
        %v433 = vshll.u32 %v406, 16
        %v435 = vor.u32 %v432, %v433
        %vm440 = vcmask 1040384
        %vm441 = vsmask.f32 256
        %vm442 = vmand %vm440, %vm441
        %v443 = vsel %vm442, 0, %v414
        %v444 = vsel %vm442, 0, %v421
        %v445 = vsel %vm442, 0, %v428
        %v446 = vsel %vm442, 0, %v435
        %v452 = vunpack.c.l.s4 1983009808
        %v453 = vunpack.c.0.s8 %v452
        %v454 = vlaneseq
        %v455 = vshrl.u32 %v454, 7
        %v456 = vsub.s32 %v453, %v455
        %v457 = vrot.slane %v396, %v456
        %v459 = vunpack.c.l.s4 1983009808
        %v460 = vunpack.c.0.s8 %v459
        %v461 = vlaneseq
        %v462 = vshrl.u32 %v461, 7
        %v463 = vsub.s32 %v460, %v462
        %v464 = vrot.slane %v397, %v463
        %v466 = vunpack.c.l.s4 1983009808
        %v467 = vunpack.c.0.s8 %v466
        %v468 = vlaneseq
        %v469 = vshrl.u32 %v468, 7
        %v470 = vsub.s32 %v467, %v469
        %v471 = vrot.slane %v398, %v470
        %v473 = vunpack.c.l.s4 1983009808
        %v474 = vunpack.c.0.s8 %v473
        %v475 = vlaneseq
        %v476 = vshrl.u32 %v475, 7
        %v477 = vsub.s32 %v474, %v476
        %v478 = vrot.slane %v399, %v477
        %v480 = vshrl.u32 %v457, 16
        %v482 = vrot.slane %v480, 7
        %v483 = vshll.u32 %v457, 16
        %v485 = vor.u32 %v482, %v483
        %v487 = vshrl.u32 %v464, 16
        %v489 = vrot.slane %v487, 7
        %v490 = vshll.u32 %v464, 16
        %v492 = vor.u32 %v489, %v490
        %v494 = vshrl.u32 %v471, 16
        %v496 = vrot.slane %v494, 7
        %v497 = vshll.u32 %v471, 16
        %v499 = vor.u32 %v496, %v497
        %v501 = vshrl.u32 %v478, 16
        %v503 = vrot.slane %v501, 7
        %v504 = vshll.u32 %v478, 16
        %v506 = vor.u32 %v503, %v504
        %v511 = vsel %vm442, 0, %v485
        %v512 = vsel %vm442, 0, %v492
        %v513 = vsel %vm442, 0, %v499
        %v514 = vsel %vm442, 0, %v506
        %v520 = vunpack.c.l.s4 1983009808
        %v521 = vunpack.c.0.s8 %v520
        %v522 = vlaneseq
        %v523 = vshrl.u32 %v522, 7
        %v524 = vsub.s32 %v521, %v523
        %v525 = vrot.slane %v404, %v524
        %v527 = vunpack.c.l.s4 1983009808
        %v528 = vunpack.c.0.s8 %v527
        %v529 = vlaneseq
        %v530 = vshrl.u32 %v529, 7
        %v531 = vsub.s32 %v528, %v530
        %v532 = vrot.slane %v405, %v531
        %v534 = vunpack.c.l.s4 1983009808
        %v535 = vunpack.c.0.s8 %v534
        %v536 = vlaneseq
        %v537 = vshrl.u32 %v536, 7
        %v538 = vsub.s32 %v535, %v537
        %v539 = vrot.slane %v406, %v538
        %v541 = vunpack.c.l.s4 1983009808
        %v542 = vunpack.c.0.s8 %v541
        %v543 = vlaneseq
        %v544 = vshrl.u32 %v543, 7
        %v545 = vsub.s32 %v542, %v544
        %v546 = vrot.slane %v407, %v545
        %v548 = vshrl.u32 %v525, 16
        %v550 = vrot.slane %v548, 7
        %v551 = vshll.u32 %v525, 16
        %v553 = vor.u32 %v550, %v551
        %v555 = vshrl.u32 %v532, 16
        %v557 = vrot.slane %v555, 7
        %v558 = vshll.u32 %v532, 16
        %v560 = vor.u32 %v557, %v558
        %v562 = vshrl.u32 %v539, 16
        %v564 = vrot.slane %v562, 7
        %v565 = vshll.u32 %v539, 16
        %v567 = vor.u32 %v564, %v565
        %v569 = vshrl.u32 %v546, 16
        %v571 = vrot.slane %v569, 7
        %v572 = vshll.u32 %v546, 16
        %v574 = vor.u32 %v571, %v572
        %v579 = vsel %vm442, 0, %v553
        %v580 = vsel %vm442, 0, %v560
        %v581 = vsel %vm442, 0, %v567
        %v582 = vsel %vm442, 0, %v574
        %v583 = vld [vmem:[%s4] sm:$0xf]
        %v584 = vld [vmem:[%s4 + $0x4] sm:$0xf]
        %v585 = vld [vmem:[%s4 + $0x8] sm:$0xf]
        %v586 = vld [vmem:[%s4 + $0xc] sm:$0xf]
        %s587 = scalar_lea.vmem %s4, 16
        %v588 = vld [vmem:[%s587] sm:$0xf]
        %v589 = vld [vmem:[%s587 + $0x4] sm:$0xf]
        %v590 = vld [vmem:[%s587 + $0x8] sm:$0xf]
        %v591 = vld [vmem:[%s587 + $0xc] sm:$0xf]
        %v596 = vcombine.low 0, %v400
        %v597 = vcombine.low %v401, %v402
        %v599 = vunpack.c.l.s4 1983009808
        %v600 = vunpack.c.0.s8 %v599
        %v601 = vlaneseq
        %v602 = vshrl.u32 %v601, 7
        %v603 = vsub.s32 %v600, %v602
        %v604 = vrot.slane %v596, %v603
        %v606 = vunpack.c.l.s4 1983009808
        %v607 = vunpack.c.0.s8 %v606
        %v608 = vlaneseq
        %v609 = vshrl.u32 %v608, 7
        %v610 = vsub.s32 %v607, %v609
        %v611 = vrot.slane %v597, %v610
        %v612 = vcombine.low %v604, %v611
        %v617 = vunpack.c.l.b16 %v588
        %v618 = vunpack.c.l.b16 %v589
        %v619 = vunpack.c.l.b16 %v590
        %v620 = vunpack.c.l.b16 %v591
        %v621 = vpack.c.b16 %v618, %v617
        %v622 = vpack.c.b16 %v620, %v619
        %vm625 = vcmask 261120
        %v627 = vsel %vm625, %v612, 0
        %629 = vmatprep.subr.bf16.mxu0 0
        %630 = vmatpush1.bf16.msra.mxu0 %v621
        %631 = vmatprep.subr.bf16.mxu0 0
        %632 = vmatpush1.bf16.msra.mxu0 %v622
        %633 = vmatprep.subr.bf16.mxu0 0
        %634 = vmatpush1.bf16.msra.mxu0 0
        %635 = vmatprep.subr.bf16.mxu0 0
        %636 = vmatpush1.bf16.msra.mxu0 0
        %637 = vmatprep.subr.bf16.mxu0 0
        %638 = vmatpush1.bf16.msra.mxu0 0
        %639 = vmatprep.subr.bf16.mxu0 0
        %640 = vmatpush1.bf16.msra.mxu0 0
        %641 = vmatprep.subr.bf16.mxu0 0
        %642 = vmatpush1.bf16.msra.mxu0 0
        %643 = vmatprep.subr.bf16.mxu0 0
        %644 = vmatpush1.bf16.msra.mxu0 0
        %645 = vmatprep.subr.bf16.mxu0 0
        %646 = vmatpush1.bf16.msra.mxu0 0
        %647 = vmatprep.subr.bf16.mxu0 0
        %648 = vmatpush1.bf16.msra.mxu0 0
        %649 = vmatprep.subr.bf16.mxu0 0
        %650 = vmatpush1.bf16.msra.mxu0 0
        %651 = vmatprep.subr.bf16.mxu0 0
        %652 = vmatpush1.bf16.msra.mxu0 0
        %653 = vmatprep.subr.bf16.mxu0 0
        %654 = vmatpush1.bf16.msra.mxu0 0
        %655 = vmatprep.subr.bf16.mxu0 0
        %656 = vmatpush1.bf16.msra.mxu0 0
        %657 = vmatprep.subr.bf16.mxu0 0
        %658 = vmatpush1.bf16.msra.mxu0 0
        %659 = vmatprep.subr.bf16.mxu0 0
        %660 = vmatpush1.bf16.msra.mxu0 0
        %661 = vmatprep.mubr.bf16.mxu0 0
        %662 = vmatmul.mubr.bf16.gmra.mrb[0].mxu0 %v627
        %v663 = vpop.f32.mrb[0].mxu0
        %v664 = vadd.f32 0.0, %v663
        %v665 = vpop.f32.mrb[0].mxu0
        %v666 = vpop.f32.mrb[0].mxu0
        %v667 = vadd.f32 0.0, %v666
        %v668 = vpop.f32.mrb[0].mxu0
        %669 = vdwg.mxu0
        %v674 = vcombine.low %v443, %v444
        %v675 = vcombine.low %v445, %v446
        %v677 = vunpack.c.l.s4 1983009808
        %v678 = vunpack.c.0.s8 %v677
        %v679 = vlaneseq
        %v680 = vshrl.u32 %v679, 7
        %v681 = vsub.s32 %v678, %v680
        %v682 = vrot.slane %v674, %v681
        %v684 = vunpack.c.l.s4 1983009808
        %v685 = vunpack.c.0.s8 %v684
        %v686 = vlaneseq
        %v687 = vshrl.u32 %v686, 7
        %v688 = vsub.s32 %v685, %v687
        %v689 = vrot.slane %v675, %v688
        %v690 = vcombine.low %v682, %v689
        %v695 = vunpack.c.l.b16 %v583
        %v696 = vunpack.c.l.b16 %v584
        %v697 = vunpack.c.l.b16 %v585
        %v698 = vunpack.c.l.b16 %v586
        %v699 = vpack.c.b16 %v696, %v695
        %v700 = vpack.c.b16 %v698, %v697
        %v704 = vsel %vm625, %v690, 0
        %706 = vmatprep.subr.bf16.mxu0 0
        %707 = vmatpush1.bf16.msra.mxu0 %v699
        %708 = vmatprep.subr.bf16.mxu0 0
        %709 = vmatpush1.bf16.msra.mxu0 %v700
        %710 = vmatprep.subr.bf16.mxu0 0
        %711 = vmatpush1.bf16.msra.mxu0 0
        %712 = vmatprep.subr.bf16.mxu0 0
        %713 = vmatpush1.bf16.msra.mxu0 0
        %714 = vmatprep.subr.bf16.mxu0 0
        %715 = vmatpush1.bf16.msra.mxu0 0
        %716 = vmatprep.subr.bf16.mxu0 0
        %717 = vmatpush1.bf16.msra.mxu0 0
        %718 = vmatprep.subr.bf16.mxu0 0
        %719 = vmatpush1.bf16.msra.mxu0 0
        %720 = vmatprep.subr.bf16.mxu0 0
        %721 = vmatpush1.bf16.msra.mxu0 0
        %722 = vmatprep.subr.bf16.mxu0 0
        %723 = vmatpush1.bf16.msra.mxu0 0
        %724 = vmatprep.subr.bf16.mxu0 0
        %725 = vmatpush1.bf16.msra.mxu0 0
        %726 = vmatprep.subr.bf16.mxu0 0
        %727 = vmatpush1.bf16.msra.mxu0 0
        %728 = vmatprep.subr.bf16.mxu0 0
        %729 = vmatpush1.bf16.msra.mxu0 0
        %730 = vmatprep.subr.bf16.mxu0 0
        %731 = vmatpush1.bf16.msra.mxu0 0
        %732 = vmatprep.subr.bf16.mxu0 0
        %733 = vmatpush1.bf16.msra.mxu0 0
        %734 = vmatprep.subr.bf16.mxu0 0
        %735 = vmatpush1.bf16.msra.mxu0 0
        %736 = vmatprep.subr.bf16.mxu0 0
        %737 = vmatpush1.bf16.msra.mxu0 0
        %738 = vmatprep.mubr.bf16.mxu0 0
        %739 = vmatmul.mubr.bf16.gmra.mrb[0].mxu0 %v704
        %v740 = vpop.f32.mrb[0].mxu0
        %v741 = vadd.f32 %v664, %v740
        %v742 = vpop.f32.mrb[0].mxu0
        %v743 = vpop.f32.mrb[0].mxu0
        %v744 = vadd.f32 %v667, %v743
        %v745 = vpop.f32.mrb[0].mxu0
        %746 = vdwg.mxu0
        %s747 = scalar_lea.vmem %s4, 32
        %v748 = vld [vmem:[%s747] sm:$0xf]
        %v749 = vld [vmem:[%s747 + $0x4] sm:$0xf]
        %v750 = vld [vmem:[%s747 + $0x8] sm:$0xf]
        %v751 = vld [vmem:[%s747 + $0xc] sm:$0xf]
        %v752 = vcombine.low 0, %v404
        %v753 = vcombine.low %v405, %v406
        %v755 = vunpack.c.l.s4 1983009808
        %v756 = vunpack.c.0.s8 %v755
        %v757 = vlaneseq
        %v758 = vshrl.u32 %v757, 7
        %v759 = vsub.s32 %v756, %v758
        %v760 = vrot.slane %v752, %v759
        %v762 = vunpack.c.l.s4 1983009808
        %v763 = vunpack.c.0.s8 %v762
        %v764 = vlaneseq
        %v765 = vshrl.u32 %v764, 7
        %v766 = vsub.s32 %v763, %v765
        %v767 = vrot.slane %v753, %v766
        %v768 = vcombine.low %v760, %v767
        %v773 = vunpack.c.l.b16 %v748
        %v774 = vunpack.c.l.b16 %v749
        %v775 = vunpack.c.l.b16 %v750
        %v776 = vunpack.c.l.b16 %v751
        %v777 = vpack.c.b16 %v774, %v773
        %v778 = vpack.c.b16 %v776, %v775
        %v782 = vsel %vm625, %v768, 0
        %784 = vmatprep.subr.bf16.mxu0 0
        %785 = vmatpush1.bf16.msra.mxu0 %v777
        %786 = vmatprep.subr.bf16.mxu0 0
        %787 = vmatpush1.bf16.msra.mxu0 %v778
        %788 = vmatprep.subr.bf16.mxu0 0
        %789 = vmatpush1.bf16.msra.mxu0 0
        %790 = vmatprep.subr.bf16.mxu0 0
        %791 = vmatpush1.bf16.msra.mxu0 0
        %792 = vmatprep.subr.bf16.mxu0 0
        %793 = vmatpush1.bf16.msra.mxu0 0
        %794 = vmatprep.subr.bf16.mxu0 0
        %795 = vmatpush1.bf16.msra.mxu0 0
        %796 = vmatprep.subr.bf16.mxu0 0
        %797 = vmatpush1.bf16.msra.mxu0 0
        %798 = vmatprep.subr.bf16.mxu0 0
        %799 = vmatpush1.bf16.msra.mxu0 0
        %800 = vmatprep.subr.bf16.mxu0 0
        %801 = vmatpush1.bf16.msra.mxu0 0
        %802 = vmatprep.subr.bf16.mxu0 0
        %803 = vmatpush1.bf16.msra.mxu0 0
        %804 = vmatprep.subr.bf16.mxu0 0
        %805 = vmatpush1.bf16.msra.mxu0 0
        %806 = vmatprep.subr.bf16.mxu0 0
        %807 = vmatpush1.bf16.msra.mxu0 0
        %808 = vmatprep.subr.bf16.mxu0 0
        %809 = vmatpush1.bf16.msra.mxu0 0
        %810 = vmatprep.subr.bf16.mxu0 0
        %811 = vmatpush1.bf16.msra.mxu0 0
        %812 = vmatprep.subr.bf16.mxu0 0
        %813 = vmatpush1.bf16.msra.mxu0 0
        %814 = vmatprep.subr.bf16.mxu0 0
        %815 = vmatpush1.bf16.msra.mxu0 0
        %816 = vmatprep.mubr.bf16.mxu0 0
        %817 = vmatmul.mubr.bf16.gmra.mrb[0].mxu0 %v782
        %v818 = vpop.f32.mrb[0].mxu0
        %v819 = vadd.f32 0.0, %v818
        %v820 = vpop.f32.mrb[0].mxu0
        %v821 = vpop.f32.mrb[0].mxu0
        %v822 = vadd.f32 0.0, %v821
        %v823 = vpop.f32.mrb[0].mxu0
        %824 = vdwg.mxu0
        %v825 = vadd.f32 %v741, %v819
        %v826 = vadd.f32 %v744, %v822
        %s827 = scalar_lea.vmem %s4, 48
        %v828 = vld [vmem:[%s827] sm:$0xf]
        %v829 = vld [vmem:[%s827 + $0x4] sm:$0xf]
        %v830 = vld [vmem:[%s827 + $0x8] sm:$0xf]
        %v831 = vld [vmem:[%s827 + $0xc] sm:$0xf]
        %v836 = vcombine.low %v511, %v512
        %v837 = vcombine.low %v513, %v514
        %v839 = vunpack.c.l.s4 1983009808
        %v840 = vunpack.c.0.s8 %v839
        %v841 = vlaneseq
        %v842 = vshrl.u32 %v841, 7
        %v843 = vsub.s32 %v840, %v842
        %v844 = vrot.slane %v836, %v843
        %v846 = vunpack.c.l.s4 1983009808
        %v847 = vunpack.c.0.s8 %v846
        %v848 = vlaneseq
        %v849 = vshrl.u32 %v848, 7
        %v850 = vsub.s32 %v847, %v849
        %v851 = vrot.slane %v837, %v850
        %v852 = vcombine.low %v844, %v851
        %v857 = vunpack.c.l.b16 %v828
        %v858 = vunpack.c.l.b16 %v829
        %v859 = vunpack.c.l.b16 %v830
        %v860 = vunpack.c.l.b16 %v831
        %v861 = vpack.c.b16 %v858, %v857
        %v862 = vpack.c.b16 %v860, %v859
        %v866 = vsel %vm625, %v852, 0
        %868 = vmatprep.subr.bf16.mxu0 0
        %869 = vmatpush1.bf16.msra.mxu0 %v861
        %870 = vmatprep.subr.bf16.mxu0 0
        %871 = vmatpush1.bf16.msra.mxu0 %v862
        %872 = vmatprep.subr.bf16.mxu0 0
        %873 = vmatpush1.bf16.msra.mxu0 0
        %874 = vmatprep.subr.bf16.mxu0 0
        %875 = vmatpush1.bf16.msra.mxu0 0
        %876 = vmatprep.subr.bf16.mxu0 0
        %877 = vmatpush1.bf16.msra.mxu0 0
        %878 = vmatprep.subr.bf16.mxu0 0
        %879 = vmatpush1.bf16.msra.mxu0 0
        %880 = vmatprep.subr.bf16.mxu0 0
        %881 = vmatpush1.bf16.msra.mxu0 0
        %882 = vmatprep.subr.bf16.mxu0 0
        %883 = vmatpush1.bf16.msra.mxu0 0
        %884 = vmatprep.subr.bf16.mxu0 0
        %885 = vmatpush1.bf16.msra.mxu0 0
        %886 = vmatprep.subr.bf16.mxu0 0
        %887 = vmatpush1.bf16.msra.mxu0 0
        %888 = vmatprep.subr.bf16.mxu0 0
        %889 = vmatpush1.bf16.msra.mxu0 0
        %890 = vmatprep.subr.bf16.mxu0 0
        %891 = vmatpush1.bf16.msra.mxu0 0
        %892 = vmatprep.subr.bf16.mxu0 0
        %893 = vmatpush1.bf16.msra.mxu0 0
        %894 = vmatprep.subr.bf16.mxu0 0
        %895 = vmatpush1.bf16.msra.mxu0 0
        %896 = vmatprep.subr.bf16.mxu0 0
        %897 = vmatpush1.bf16.msra.mxu0 0
        %898 = vmatprep.subr.bf16.mxu0 0
        %899 = vmatpush1.bf16.msra.mxu0 0
        %900 = vmatprep.mubr.bf16.mxu0 0
        %901 = vmatmul.mubr.bf16.gmra.mrb[0].mxu0 %v866
        %v902 = vpop.f32.mrb[0].mxu0
        %v903 = vadd.f32 0.0, %v902
        %v904 = vpop.f32.mrb[0].mxu0
        %v905 = vpop.f32.mrb[0].mxu0
        %v906 = vadd.f32 0.0, %v905
        %v907 = vpop.f32.mrb[0].mxu0
        %908 = vdwg.mxu0
        %v909 = vadd.f32 %v825, %v903
        %v910 = vadd.f32 %v826, %v906
        %s911 = scalar_lea.vmem %s4, 64
        %v912 = vld [vmem:[%s911] sm:$0xf]
        %v913 = vld [vmem:[%s911 + $0x4] sm:$0xf]
        %v914 = vld [vmem:[%s911 + $0x8] sm:$0xf]
        %v915 = vld [vmem:[%s911 + $0xc] sm:$0xf]
        %v920 = vcombine.low %v392, %v393
        %v921 = vcombine.low %v394, %v395
        %v923 = vunpack.c.l.s4 1983009808
        %v924 = vunpack.c.0.s8 %v923
        %v925 = vlaneseq
        %v926 = vshrl.u32 %v925, 7
        %v927 = vsub.s32 %v924, %v926
        %v928 = vrot.slane %v920, %v927
        %v930 = vunpack.c.l.s4 1983009808
        %v931 = vunpack.c.0.s8 %v930
        %v932 = vlaneseq
        %v933 = vshrl.u32 %v932, 7
        %v934 = vsub.s32 %v931, %v933
        %v935 = vrot.slane %v921, %v934
        %v936 = vcombine.low %v928, %v935
        %v941 = vunpack.c.l.b16 %v912
        %v942 = vunpack.c.l.b16 %v913
        %v943 = vunpack.c.l.b16 %v914
        %v944 = vunpack.c.l.b16 %v915
        %v945 = vpack.c.b16 %v942, %v941
        %v946 = vpack.c.b16 %v944, %v943
        %v950 = vsel %vm625, %v936, 0
        %952 = vmatprep.subr.bf16.mxu0 0
        %953 = vmatpush1.bf16.msra.mxu0 %v945
        %954 = vmatprep.subr.bf16.mxu0 0
        %955 = vmatpush1.bf16.msra.mxu0 %v946
        %956 = vmatprep.subr.bf16.mxu0 0
        %957 = vmatpush1.bf16.msra.mxu0 0
        %958 = vmatprep.subr.bf16.mxu0 0
        %959 = vmatpush1.bf16.msra.mxu0 0
        %960 = vmatprep.subr.bf16.mxu0 0
        %961 = vmatpush1.bf16.msra.mxu0 0
        %962 = vmatprep.subr.bf16.mxu0 0
        %963 = vmatpush1.bf16.msra.mxu0 0
        %964 = vmatprep.subr.bf16.mxu0 0
        %965 = vmatpush1.bf16.msra.mxu0 0
        %966 = vmatprep.subr.bf16.mxu0 0
        %967 = vmatpush1.bf16.msra.mxu0 0
        %968 = vmatprep.subr.bf16.mxu0 0
        %969 = vmatpush1.bf16.msra.mxu0 0
        %970 = vmatprep.subr.bf16.mxu0 0
        %971 = vmatpush1.bf16.msra.mxu0 0
        %972 = vmatprep.subr.bf16.mxu0 0
        %973 = vmatpush1.bf16.msra.mxu0 0
        %974 = vmatprep.subr.bf16.mxu0 0
        %975 = vmatpush1.bf16.msra.mxu0 0
        %976 = vmatprep.subr.bf16.mxu0 0
        %977 = vmatpush1.bf16.msra.mxu0 0
        %978 = vmatprep.subr.bf16.mxu0 0
        %979 = vmatpush1.bf16.msra.mxu0 0
        %980 = vmatprep.subr.bf16.mxu0 0
        %981 = vmatpush1.bf16.msra.mxu0 0
        %982 = vmatprep.subr.bf16.mxu0 0
        %983 = vmatpush1.bf16.msra.mxu0 0
        %984 = vmatprep.mubr.bf16.mxu0 0
        %985 = vmatmul.mubr.bf16.gmra.mrb[0].mxu0 %v950
        %v986 = vpop.f32.mrb[0].mxu0
        %v987 = vadd.f32 0.0, %v986
        %v988 = vpop.f32.mrb[0].mxu0
        %v989 = vpop.f32.mrb[0].mxu0
        %v990 = vadd.f32 0.0, %v989
        %v991 = vpop.f32.mrb[0].mxu0
        %992 = vdwg.mxu0
        %v993 = vadd.f32 %v909, %v987
        %v994 = vadd.f32 %v910, %v990
        %s995 = scalar_lea.vmem %s4, 80
        %v996 = vld [vmem:[%s995] sm:$0xf]
        %v997 = vld [vmem:[%s995 + $0x4] sm:$0xf]
        %v998 = vld [vmem:[%s995 + $0x8] sm:$0xf]
        %v999 = vld [vmem:[%s995 + $0xc] sm:$0xf]
        %v1000 = vcombine.low %v396, %v397
        %v1001 = vcombine.low %v398, %v399
        %v1003 = vunpack.c.l.s4 1983009808
        %v1004 = vunpack.c.0.s8 %v1003
        %v1005 = vlaneseq
        %v1006 = vshrl.u32 %v1005, 7
        %v1007 = vsub.s32 %v1004, %v1006
        %v1008 = vrot.slane %v1000, %v1007
        %v1010 = vunpack.c.l.s4 1983009808
        %v1011 = vunpack.c.0.s8 %v1010
        %v1012 = vlaneseq
        %v1013 = vshrl.u32 %v1012, 7
        %v1014 = vsub.s32 %v1011, %v1013
        %v1015 = vrot.slane %v1001, %v1014
        %v1016 = vcombine.low %v1008, %v1015
        %v1021 = vunpack.c.l.b16 %v996
        %v1022 = vunpack.c.l.b16 %v997
        %v1023 = vunpack.c.l.b16 %v998
        %v1024 = vunpack.c.l.b16 %v999
        %v1025 = vpack.c.b16 %v1022, %v1021
        %v1026 = vpack.c.b16 %v1024, %v1023
        %v1030 = vsel %vm625, %v1016, 0
        %1032 = vmatprep.subr.bf16.mxu0 0
        %1033 = vmatpush1.bf16.msra.mxu0 %v1025
        %1034 = vmatprep.subr.bf16.mxu0 0
        %1035 = vmatpush1.bf16.msra.mxu0 %v1026
        %1036 = vmatprep.subr.bf16.mxu0 0
        %1037 = vmatpush1.bf16.msra.mxu0 0
        %1038 = vmatprep.subr.bf16.mxu0 0
        %1039 = vmatpush1.bf16.msra.mxu0 0
        %1040 = vmatprep.subr.bf16.mxu0 0
        %1041 = vmatpush1.bf16.msra.mxu0 0
        %1042 = vmatprep.subr.bf16.mxu0 0
        %1043 = vmatpush1.bf16.msra.mxu0 0
        %1044 = vmatprep.subr.bf16.mxu0 0
        %1045 = vmatpush1.bf16.msra.mxu0 0
        %1046 = vmatprep.subr.bf16.mxu0 0
        %1047 = vmatpush1.bf16.msra.mxu0 0
        %1048 = vmatprep.subr.bf16.mxu0 0
        %1049 = vmatpush1.bf16.msra.mxu0 0
        %1050 = vmatprep.subr.bf16.mxu0 0
        %1051 = vmatpush1.bf16.msra.mxu0 0
        %1052 = vmatprep.subr.bf16.mxu0 0
        %1053 = vmatpush1.bf16.msra.mxu0 0
        %1054 = vmatprep.subr.bf16.mxu0 0
        %1055 = vmatpush1.bf16.msra.mxu0 0
        %1056 = vmatprep.subr.bf16.mxu0 0
        %1057 = vmatpush1.bf16.msra.mxu0 0
        %1058 = vmatprep.subr.bf16.mxu0 0
        %1059 = vmatpush1.bf16.msra.mxu0 0
        %1060 = vmatprep.subr.bf16.mxu0 0
        %1061 = vmatpush1.bf16.msra.mxu0 0
        %1062 = vmatprep.subr.bf16.mxu0 0
        %1063 = vmatpush1.bf16.msra.mxu0 0
        %1064 = vmatprep.mubr.bf16.mxu0 0
        %1065 = vmatmul.mubr.bf16.gmra.mrb[0].mxu0 %v1030
        %v1066 = vpop.f32.mrb[0].mxu0
        %v1067 = vadd.f32 0.0, %v1066
        %v1068 = vpop.f32.mrb[0].mxu0
        %v1069 = vpop.f32.mrb[0].mxu0
        %v1070 = vadd.f32 0.0, %v1069
        %v1071 = vpop.f32.mrb[0].mxu0
        %1072 = vdwg.mxu0
        %v1073 = vadd.f32 %v993, %v1067
        %v1074 = vadd.f32 %v994, %v1070
        %s1075 = scalar_lea.vmem %s4, 96
        %v1076 = vld [vmem:[%s1075] sm:$0xf]
        %v1077 = vld [vmem:[%s1075 + $0x4] sm:$0xf]
        %v1078 = vld [vmem:[%s1075 + $0x8] sm:$0xf]
        %v1079 = vld [vmem:[%s1075 + $0xc] sm:$0xf]
        %v1084 = vcombine.low %v579, %v580
        %v1085 = vcombine.low %v581, %v582
        %v1087 = vunpack.c.l.s4 1983009808
        %v1088 = vunpack.c.0.s8 %v1087
        %v1089 = vlaneseq
        %v1090 = vshrl.u32 %v1089, 7
        %v1091 = vsub.s32 %v1088, %v1090
        %v1092 = vrot.slane %v1084, %v1091
        %v1094 = vunpack.c.l.s4 1983009808
        %v1095 = vunpack.c.0.s8 %v1094
        %v1096 = vlaneseq
        %v1097 = vshrl.u32 %v1096, 7
        %v1098 = vsub.s32 %v1095, %v1097
        %v1099 = vrot.slane %v1085, %v1098
        %v1100 = vcombine.low %v1092, %v1099
        %v1105 = vunpack.c.l.b16 %v1076
        %v1106 = vunpack.c.l.b16 %v1077
        %v1107 = vunpack.c.l.b16 %v1078
        %v1108 = vunpack.c.l.b16 %v1079
        %v1109 = vpack.c.b16 %v1106, %v1105
        %v1110 = vpack.c.b16 %v1108, %v1107
        %v1114 = vsel %vm625, %v1100, 0
        %1116 = vmatprep.subr.bf16.mxu0 0
        %1117 = vmatpush1.bf16.msra.mxu0 %v1109
        %1118 = vmatprep.subr.bf16.mxu0 0
        %1119 = vmatpush1.bf16.msra.mxu0 %v1110
        %1120 = vmatprep.subr.bf16.mxu0 0
        %1121 = vmatpush1.bf16.msra.mxu0 0
        %1122 = vmatprep.subr.bf16.mxu0 0
        %1123 = vmatpush1.bf16.msra.mxu0 0
        %1124 = vmatprep.subr.bf16.mxu0 0
        %1125 = vmatpush1.bf16.msra.mxu0 0
        %1126 = vmatprep.subr.bf16.mxu0 0
        %1127 = vmatpush1.bf16.msra.mxu0 0
        %1128 = vmatprep.subr.bf16.mxu0 0
        %1129 = vmatpush1.bf16.msra.mxu0 0
        %1130 = vmatprep.subr.bf16.mxu0 0
        %1131 = vmatpush1.bf16.msra.mxu0 0
        %1132 = vmatprep.subr.bf16.mxu0 0
        %1133 = vmatpush1.bf16.msra.mxu0 0
        %1134 = vmatprep.subr.bf16.mxu0 0
        %1135 = vmatpush1.bf16.msra.mxu0 0
        %1136 = vmatprep.subr.bf16.mxu0 0
        %1137 = vmatpush1.bf16.msra.mxu0 0
        %1138 = vmatprep.subr.bf16.mxu0 0
        %1139 = vmatpush1.bf16.msra.mxu0 0
        %1140 = vmatprep.subr.bf16.mxu0 0
        %1141 = vmatpush1.bf16.msra.mxu0 0
        %1142 = vmatprep.subr.bf16.mxu0 0
        %1143 = vmatpush1.bf16.msra.mxu0 0
        %1144 = vmatprep.subr.bf16.mxu0 0
        %1145 = vmatpush1.bf16.msra.mxu0 0
        %1146 = vmatprep.subr.bf16.mxu0 0
        %1147 = vmatpush1.bf16.msra.mxu0 0
        %1148 = vmatprep.mubr.bf16.mxu0 0
        %1149 = vmatmul.mubr.bf16.gmra.mrb[0].mxu0 %v1114
        %v1150 = vpop.f32.mrb[0].mxu0
        %v1151 = vadd.f32 0.0, %v1150
        %v1152 = vpop.f32.mrb[0].mxu0
        %v1153 = vpop.f32.mrb[0].mxu0
        %v1154 = vadd.f32 0.0, %v1153
        %v1155 = vpop.f32.mrb[0].mxu0
        %1156 = vdwg.mxu0
        %v1157 = vadd.f32 %v1073, %v1151
        %v1158 = vadd.f32 %v1074, %v1154
        %s1159 = scalar_lea.vmem %s4, 112
        %v1160 = vld [vmem:[%s1159] sm:$0xf]
        %v1161 = vld [vmem:[%s1159 + $0x4] sm:$0xf]
        %v1162 = vld [vmem:[%s1159 + $0x8] sm:$0xf]
        %v1163 = vld [vmem:[%s1159 + $0xc] sm:$0xf]
        %v1165 = vcombine.low %v400, %v401
        %v1166 = vcombine.low %v402, %v403
        %v1168 = vunpack.c.l.s4 1983009808
        %v1169 = vunpack.c.0.s8 %v1168
        %v1170 = vlaneseq
        %v1171 = vshrl.u32 %v1170, 7
        %v1172 = vsub.s32 %v1169, %v1171
        %v1173 = vrot.slane %v1165, %v1172
        %v1175 = vunpack.c.l.s4 1983009808
        %v1176 = vunpack.c.0.s8 %v1175
        %v1177 = vlaneseq
        %v1178 = vshrl.u32 %v1177, 7
        %v1179 = vsub.s32 %v1176, %v1178
        %v1180 = vrot.slane %v1166, %v1179
        %v1181 = vcombine.low %v1173, %v1180
        %v1186 = vunpack.c.l.b16 %v1160
        %v1187 = vunpack.c.l.b16 %v1161
        %v1188 = vunpack.c.l.b16 %v1162
        %v1189 = vunpack.c.l.b16 %v1163
        %v1190 = vpack.c.b16 %v1187, %v1186
        %v1191 = vpack.c.b16 %v1189, %v1188
        %v1195 = vsel %vm625, %v1181, 0
        %1197 = vmatprep.subr.bf16.mxu0 0
        %1198 = vmatpush1.bf16.msra.mxu0 %v1190
        %1199 = vmatprep.subr.bf16.mxu0 0
        %1200 = vmatpush1.bf16.msra.mxu0 %v1191
        %1201 = vmatprep.subr.bf16.mxu0 0
        %1202 = vmatpush1.bf16.msra.mxu0 0
        %1203 = vmatprep.subr.bf16.mxu0 0
        %1204 = vmatpush1.bf16.msra.mxu0 0
        %1205 = vmatprep.subr.bf16.mxu0 0
        %1206 = vmatpush1.bf16.msra.mxu0 0
        %1207 = vmatprep.subr.bf16.mxu0 0
        %1208 = vmatpush1.bf16.msra.mxu0 0
        %1209 = vmatprep.subr.bf16.mxu0 0
        %1210 = vmatpush1.bf16.msra.mxu0 0
        %1211 = vmatprep.subr.bf16.mxu0 0
        %1212 = vmatpush1.bf16.msra.mxu0 0
        %1213 = vmatprep.subr.bf16.mxu0 0
        %1214 = vmatpush1.bf16.msra.mxu0 0
        %1215 = vmatprep.subr.bf16.mxu0 0
        %1216 = vmatpush1.bf16.msra.mxu0 0
        %1217 = vmatprep.subr.bf16.mxu0 0
        %1218 = vmatpush1.bf16.msra.mxu0 0
        %1219 = vmatprep.subr.bf16.mxu0 0
        %1220 = vmatpush1.bf16.msra.mxu0 0
        %1221 = vmatprep.subr.bf16.mxu0 0
        %1222 = vmatpush1.bf16.msra.mxu0 0
        %1223 = vmatprep.subr.bf16.mxu0 0
        %1224 = vmatpush1.bf16.msra.mxu0 0
        %1225 = vmatprep.subr.bf16.mxu0 0
        %1226 = vmatpush1.bf16.msra.mxu0 0
        %1227 = vmatprep.subr.bf16.mxu0 0
        %1228 = vmatpush1.bf16.msra.mxu0 0
        %1229 = vmatprep.mubr.bf16.mxu0 0
        %1230 = vmatmul.mubr.bf16.gmra.mrb[0].mxu0 %v1195
        %v1231 = vpop.f32.mrb[0].mxu0
        %v1232 = vadd.f32 0.0, %v1231
        %v1233 = vpop.f32.mrb[0].mxu0
        %v1234 = vpop.f32.mrb[0].mxu0
        %v1235 = vadd.f32 0.0, %v1234
        %v1236 = vpop.f32.mrb[0].mxu0
        %1237 = vdwg.mxu0
        %v1238 = vadd.f32 %v1157, %v1232
        %v1239 = vadd.f32 %v1158, %v1235
        %s1240 = scalar_lea.vmem %s4, 128
        %v1241 = vld [vmem:[%s1240] sm:$0xf]
        %v1242 = vld [vmem:[%s1240 + $0x4] sm:$0xf]
        %v1243 = vld [vmem:[%s1240 + $0x8] sm:$0xf]
        %v1244 = vld [vmem:[%s1240 + $0xc] sm:$0xf]
        %v1245 = vcombine.low %v404, %v405
        %v1246 = vcombine.low %v406, %v407
        %v1248 = vunpack.c.l.s4 1983009808
        %v1249 = vunpack.c.0.s8 %v1248
        %v1250 = vlaneseq
        %v1251 = vshrl.u32 %v1250, 7
        %v1252 = vsub.s32 %v1249, %v1251
        %v1253 = vrot.slane %v1245, %v1252
        %v1255 = vunpack.c.l.s4 1983009808
        %v1256 = vunpack.c.0.s8 %v1255
        %v1257 = vlaneseq
        %v1258 = vshrl.u32 %v1257, 7
        %v1259 = vsub.s32 %v1256, %v1258
        %v1260 = vrot.slane %v1246, %v1259
        %v1261 = vcombine.low %v1253, %v1260
        %v1266 = vunpack.c.l.b16 %v1241
        %v1267 = vunpack.c.l.b16 %v1242
        %v1268 = vunpack.c.l.b16 %v1243
        %v1269 = vunpack.c.l.b16 %v1244
        %v1270 = vpack.c.b16 %v1267, %v1266
        %v1271 = vpack.c.b16 %v1269, %v1268
        %v1275 = vsel %vm625, %v1261, 0
        %1277 = vmatprep.subr.bf16.mxu0 0
        %1278 = vmatpush1.bf16.msra.mxu0 %v1270
        %1279 = vmatprep.subr.bf16.mxu0 0
        %1280 = vmatpush1.bf16.msra.mxu0 %v1271
        %1281 = vmatprep.subr.bf16.mxu0 0
        %1282 = vmatpush1.bf16.msra.mxu0 0
        %1283 = vmatprep.subr.bf16.mxu0 0
        %1284 = vmatpush1.bf16.msra.mxu0 0
        %1285 = vmatprep.subr.bf16.mxu0 0
        %1286 = vmatpush1.bf16.msra.mxu0 0
        %1287 = vmatprep.subr.bf16.mxu0 0
        %1288 = vmatpush1.bf16.msra.mxu0 0
        %1289 = vmatprep.subr.bf16.mxu0 0
        %1290 = vmatpush1.bf16.msra.mxu0 0
        %1291 = vmatprep.subr.bf16.mxu0 0
        %1292 = vmatpush1.bf16.msra.mxu0 0
        %1293 = vmatprep.subr.bf16.mxu0 0
        %1294 = vmatpush1.bf16.msra.mxu0 0
        %1295 = vmatprep.subr.bf16.mxu0 0
        %1296 = vmatpush1.bf16.msra.mxu0 0
        %1297 = vmatprep.subr.bf16.mxu0 0
        %1298 = vmatpush1.bf16.msra.mxu0 0
        %1299 = vmatprep.subr.bf16.mxu0 0
        %1300 = vmatpush1.bf16.msra.mxu0 0
        %1301 = vmatprep.subr.bf16.mxu0 0
        %1302 = vmatpush1.bf16.msra.mxu0 0
        %1303 = vmatprep.subr.bf16.mxu0 0
        %1304 = vmatpush1.bf16.msra.mxu0 0
        %1305 = vmatprep.subr.bf16.mxu0 0
        %1306 = vmatpush1.bf16.msra.mxu0 0
        %1307 = vmatprep.subr.bf16.mxu0 0
        %1308 = vmatpush1.bf16.msra.mxu0 0
        %1309 = vmatprep.mubr.bf16.mxu0 0
        %1310 = vmatmul.mubr.bf16.gmra.mrb[0].mxu0 %v1275
        %v1311 = vpop.f32.mrb[0].mxu0
        %v1312 = vadd.f32 0.0, %v1311
        %v1313 = vpop.f32.mrb[0].mxu0
        %v1314 = vpop.f32.mrb[0].mxu0
        %v1315 = vadd.f32 0.0, %v1314
        %v1316 = vpop.f32.mrb[0].mxu0
        %1317 = vdwg.mxu0
        %v1318 = vadd.f32 %v1238, %v1312
        %v1319 = vadd.f32 %v1239, %v1315
        %v1320 = vld [vmem:[%s5] sm:$0x1]
        %v1322 = vlaneseq
        %v1323 = vshrl.u32 %v1322, 7
        %v1324 = vsub.s32 0, %v1323
        %v1325 = vrot.slane %v1320, %v1324
        %v1327 = vmul.f32 %v1318, %v1325
        %v1328 = vmul.f32 %v1319, %v1325
        %v1329 = vld [vmem:[%s6] sm:$0x1]
        %v1331 = vlaneseq
        %v1332 = vshrl.u32 %v1331, 7
        %v1333 = vsub.s32 0, %v1332
        %v1334 = vrot.slane %v1329, %v1333
        %v1336 = vadd.f32 %v1327, %v1334
        %v1337 = vadd.f32 %v1328, %v1334
        %v1340 = vcombine.high %v1336, %v1336
        %v1341 = vcombine.high %v1337, %v1337
        %v1344 = vld [vmem:[%s7] sm:$0x7]
        %v1345 = vld [vmem:[%s7 + $0x4] sm:$0x7]
        %v1346 = vld [vmem:[%s7 + $0x8] sm:$0x7]
        %v1347 = vld [vmem:[%s8] sm:$0x1]
        %v1349 = vrot.slane 0.0, 7
        %v1350 = vrot.slane %v1336, 7
        %v1351 = vrot.slane %v1340, 7
        %v1352 = vrot.slane %v1337, 7
        %vm1357 = vcmask 1040384
        %v1358 = vsel %vm1357, 0.0, %v1349
        %v1359 = vsel %vm1357, 0.0, %v1350
        %v1360 = vsel %vm1357, 0.0, %v1351
        %v1361 = vsel %vm1357, 0.0, %v1352
        %v1362 = vlaneseq
        %v1363 = vshrl.u32 %v1362, 7
        %v1364 = vsub.s32 0, %v1363
        %v1365 = vrot.slane %v1344, %v1364
        %v1366 = vmul.f32 %v1358, %v1365
        %v1367 = vmul.f32 %v1359, %v1365
        %v1368 = vmul.f32 %v1360, %v1365
        %v1369 = vmul.f32 %v1361, %v1365
        %v1370 = vadd.f32 %v1366, 0.0
        %v1371 = vadd.f32 %v1367, 0.0
        %v1372 = vadd.f32 %v1368, 0.0
        %v1373 = vadd.f32 %v1369, 0.0
        %v1374 = vlaneseq
        %v1375 = vshrl.u32 %v1374, 7
        %v1376 = vsub.s32 1, %v1375
        %v1377 = vrot.slane %v1344, %v1376
        %v1378 = vmul.f32 %v1377, 0.0
        %v1379 = vmul.f32 %v1336, %v1377
        %v1380 = vmul.f32 %v1340, %v1377
        %v1381 = vmul.f32 %v1337, %v1377
        %v1382 = vadd.f32 %v1370, %v1378
        %v1383 = vadd.f32 %v1371, %v1379
        %v1384 = vadd.f32 %v1372, %v1380
        %v1385 = vadd.f32 %v1373, %v1381
        %v1386 = vrot.slane 0.0, 1
        %v1387 = vrot.slane %v1336, 1
        %v1388 = vrot.slane %v1340, 1
        %v1389 = vrot.slane %v1337, 1
        %vm1394 = vcmask 1042432
        %v1395 = vsel %vm1394, %v1386, 0.0
        %v1396 = vsel %vm1394, %v1387, 0.0
        %v1397 = vsel %vm1394, %v1388, 0.0
        %v1398 = vsel %vm1394, %v1389, 0.0
        %v1399 = vlaneseq
        %v1400 = vshrl.u32 %v1399, 7
        %v1401 = vsub.s32 2, %v1400
        %v1402 = vrot.slane %v1344, %v1401
        %v1403 = vmul.f32 %v1395, %v1402
        %v1404 = vmul.f32 %v1396, %v1402
        %v1405 = vmul.f32 %v1397, %v1402
        %v1406 = vmul.f32 %v1398, %v1402
        %v1407 = vadd.f32 %v1382, %v1403
        %v1408 = vadd.f32 %v1383, %v1404
        %v1409 = vadd.f32 %v1384, %v1405
        %v1410 = vadd.f32 %v1385, %v1406
        %v1411 = vrot.slane %v1341, 7
        %v1413 = vsel %vm1357, 0.0, %v1411
        %v1414 = vlaneseq
        %v1415 = vshrl.u32 %v1414, 7
        %v1416 = vsub.s32 0, %v1415
        %v1417 = vrot.slane %v1345, %v1416
        %v1418 = vmul.f32 %v1359, %v1417
        %v1419 = vmul.f32 %v1360, %v1417
        %v1420 = vmul.f32 %v1361, %v1417
        %v1421 = vmul.f32 %v1413, %v1417
        %v1422 = vadd.f32 %v1407, %v1418
        %v1423 = vadd.f32 %v1408, %v1419
        %v1424 = vadd.f32 %v1409, %v1420
        %v1425 = vadd.f32 %v1410, %v1421
        %v1426 = vlaneseq
        %v1427 = vshrl.u32 %v1426, 7
        %v1428 = vsub.s32 1, %v1427
        %v1429 = vrot.slane %v1345, %v1428
        %v1430 = vmul.f32 %v1336, %v1429
        %v1431 = vmul.f32 %v1340, %v1429
        %v1432 = vmul.f32 %v1337, %v1429
        %v1433 = vmul.f32 %v1341, %v1429
        %v1434 = vadd.f32 %v1422, %v1430
        %v1435 = vadd.f32 %v1423, %v1431
        %v1436 = vadd.f32 %v1424, %v1432
        %v1437 = vadd.f32 %v1425, %v1433
        %v1438 = vrot.slane %v1341, 1
        %v1440 = vsel %vm1394, %v1438, 0.0
        %v1441 = vlaneseq
        %v1442 = vshrl.u32 %v1441, 7
        %v1443 = vsub.s32 2, %v1442
        %v1444 = vrot.slane %v1345, %v1443
        %v1445 = vmul.f32 %v1396, %v1444
        %v1446 = vmul.f32 %v1397, %v1444
        %v1447 = vmul.f32 %v1398, %v1444
        %v1448 = vmul.f32 %v1440, %v1444
        %v1449 = vadd.f32 %v1434, %v1445
        %v1450 = vadd.f32 %v1435, %v1446
        %v1451 = vadd.f32 %v1436, %v1447
        %v1452 = vadd.f32 %v1437, %v1448
        %v1453 = vlaneseq
        %v1454 = vshrl.u32 %v1453, 7
        %v1455 = vsub.s32 0, %v1454
        %v1456 = vrot.slane %v1346, %v1455
        %v1457 = vmul.f32 %v1360, %v1456
        %v1458 = vmul.f32 %v1361, %v1456
        %v1459 = vmul.f32 %v1413, %v1456
        %v1460 = vmul.f32 %v1358, %v1456
        %v1461 = vadd.f32 %v1449, %v1457
        %v1462 = vadd.f32 %v1450, %v1458
        %v1463 = vadd.f32 %v1451, %v1459
        %v1464 = vadd.f32 %v1452, %v1460
        %v1465 = vlaneseq
        %v1466 = vshrl.u32 %v1465, 7
        %v1467 = vsub.s32 1, %v1466
        %v1468 = vrot.slane %v1346, %v1467
        %v1469 = vmul.f32 %v1340, %v1468
        %v1470 = vmul.f32 %v1337, %v1468
        %v1471 = vmul.f32 %v1341, %v1468
        %v1472 = vmul.f32 %v1468, 0.0
        %v1473 = vadd.f32 %v1461, %v1469
        %v1474 = vadd.f32 %v1462, %v1470
        %v1475 = vadd.f32 %v1463, %v1471
        %v1476 = vadd.f32 %v1464, %v1472
        %v1477 = vlaneseq
        %v1478 = vshrl.u32 %v1477, 7
        %v1479 = vsub.s32 2, %v1478
        %v1480 = vrot.slane %v1346, %v1479
        %v1481 = vmul.f32 %v1397, %v1480
        %v1482 = vmul.f32 %v1398, %v1480
        %v1483 = vmul.f32 %v1440, %v1480
        %v1484 = vmul.f32 %v1395, %v1480
        %v1485 = vadd.f32 %v1473, %v1481
        %v1486 = vadd.f32 %v1474, %v1482
        %v1487 = vadd.f32 %v1475, %v1483
        %v1488 = vadd.f32 %v1476, %v1484
        %v1489 = vadd.f32 %v1336, %v1485
        %v1490 = vadd.f32 %v1340, %v1486
        %v1491 = vadd.f32 %v1337, %v1487
        %v1492 = vadd.f32 %v1341, %v1488
        %v1494 = vlaneseq
        %v1495 = vshrl.u32 %v1494, 7
        %v1496 = vsub.s32 0, %v1495
        %v1497 = vrot.slane %v1347, %v1496
        %v1499 = vadd.f32 %v1489, %v1497
        %v1500 = vadd.f32 %v1490, %v1497
        %v1501 = vadd.f32 %v1491, %v1497
        %v1502 = vadd.f32 %v1492, %v1497
        %v1507 = vcombine.low %v1499, %v1500
        %v1508 = vcombine.low %v1501, %v1502
        %vm1511 = vcmask 523264
        %1512 = vst.msk [vmem:[%s370] sm:$0xff] %vm1511, %v1507
        %1513 = vst.msk [vmem:[%s370 + $0x8] sm:$0xff] %vm1511, %v1508
        %s1514 = sand.u32 %s240, 1
        %s1515 = scalar_lea.sflag [#allocation3], %s1514
        %s1516 = sand.u32 %s240, 1
        %s1517 = smul.addr %s1516, 16
        %s1518 = scalar_lea.vmem [#allocation2], %s1517
        // Predicated region
        $region57: #{globalstage_forward.5} parent=55 // pred_check
          %p1519 = pneg %p250
        $region58: #{globalstage_forward.5} parent=55 // pred_check_branch
          %1521 = sbr.rel (%p1519) target = $region60
        $region59: #{globalstage_forward.5} parent=55 // pred_region
          %s1523 = ssub.s32 256, 256
          %1524 = vsyncadd %s1515, %s1523
          %s1525 = smul.addr %s23, 2
          %s1526 = smul.addr %s1525, 128
          %s1527 = scalar_lea.hbm %s9, %s1526
          %s1528 = sshll.u32 %s1518, 4
          %s1529 = int_to_ptr.vmem [resolvable:$true] %s1528
          %1534 = dma.vmem_to_hbm [thread:$0]  %s1529, 256, %s1527, %s1515, 128, 128, 8
        $region60: #{globalstage_forward.5} parent=55 // pred_fallthru
          _
      $region56: #{globalstage_forward.5} parent=5 // pred_fallthru
        _
      %p1535 = scmp.le.s32.totalorder 2, %s18
      // Predicated region
      $region61: #{globalstage_forward.5} parent=5 // pred_check
        %p1536 = pneg %p1535
      $region62: #{globalstage_forward.5} parent=5 // pred_check_branch
        %1538 = sbr.rel (%p1536) target = $region64
      $region63: #{globalstage_forward.5} parent=5 // pred_region
        %s1539 = ssub.s32 %s18, 2
        // Predicated region
        $region65: #{globalstage_forward.5} parent=63 // pred_check
          %p1540 = pneg %p256
        $region66: #{globalstage_forward.5} parent=63 // pred_check_branch
          %1542 = sbr.rel (%p1540) target = $region68
        $region67: #{globalstage_forward.5} parent=63 // pred_region
          %s1543 = sand.u32 %s241, 1
          %s1544 = scalar_lea.sflag [#allocation3], %s1543
          %s1545 = sand.u32 %s241, 1
          %s1546 = smul.addr %s1545, 16
          %s1547 = scalar_lea.vmem [#allocation2], %s1546
          %1548 = dma.done %s1544, 256
        $region68: #{globalstage_forward.5} parent=63 // pred_fallthru
          _
      $region64: #{globalstage_forward.5} parent=5 // pred_fallthru
        _
    $region6: #{globalstage_forward.5} parent=1 // loop_footer
      %s22 = sadd.s32 1, %s18
    $region7: #{globalstage_forward.5} parent=1 // loop_footer_branch
      %17 = sbr.rel target = $region3
    $region8: #{globalstage_forward.5} parent=1 // loop_exit
      _
    %1549 = vsyncpa [#allocation3], 1
    %s1550 = scalar_lea.sflag [#allocation3], 1
    %1551 = vsyncpa %s1550, 1

// kernel: globalstage_forward.3
$region0: #{globalstage_forward.3}
  #allocation0 [shape = 'u32[]', space=smem, size = 0x4, offset = 0x4, fixed_abs, tag = 'smem constant byte address 0x4 - core index']
  #allocation1 [shape = 'u32[144,128]{1,0:T(1,128)}', space=vmem, size = 0x12000, scoped, tag = 'internal scratch']
  %s0 = inlined_call_operand.vmem [shape: bf16[2,64,32], index: 0, kind: input, shape index: {}]
  %s1 = inlined_call_operand.vmem [shape: f32[3,3,32], index: 1, kind: input, shape index: {}]
  %s2 = inlined_call_operand.vmem [shape: f32[1,32], index: 2, kind: input, shape index: {}]
  %s3 = inlined_call_operand.vmem [shape: f32[1,32], index: 3, kind: input, shape index: {}]
  %s4 = inlined_call_operand.vmem [shape: f32[1,32], index: 4, kind: input, shape index: {}]
  %s5 = inlined_call_operand.vmem [shape: bf16[32,96], index: 5, kind: input, shape index: {}]
  %s6 = inlined_call_operand.vmem [shape: f32[1,96], index: 6, kind: input, shape index: {}]
  %s7 = inlined_call_operand.vmem [shape: bf16[32,32], index: 7, kind: input, shape index: {}]
  %s8 = inlined_call_operand.vmem [shape: f32[1,32], index: 8, kind: input, shape index: {}]
  %s9 = inlined_call_operand.vmem [shape: f32[1,32], index: 9, kind: input, shape index: {}]
  %s10 = inlined_call_operand.vmem [shape: f32[1,32], index: 10, kind: input, shape index: {}]
  %s11 = inlined_call_operand.vmem [shape: bf16[32,128], index: 11, kind: input, shape index: {}]
  %s12 = inlined_call_operand.vmem [shape: f32[1,128], index: 12, kind: input, shape index: {}]
  %s13 = inlined_call_operand.vmem [shape: bf16[128,32], index: 13, kind: input, shape index: {}]
  %s14 = inlined_call_operand.vmem [shape: f32[1,32], index: 14, kind: input, shape index: {}]
  %s15 = inlined_call_operand.vmem [shape: bf16[2,64,32], index: 15, kind: output, shape index: {}]
  %s16 = sld [smem:[#allocation0]]
  $region93: #{globalstage_forward.3} parent=0
    _
  %s18 = ssub.s32 1, %s16
  %s19 = scalar_select 0, %s18, %s16
  loop: start=0, step=1, limit=4
  $region2: #{globalstage_forward.3} parent=0 // loop_pre_header
    _
  $region3: #{globalstage_forward.3} parent=0 // loop_header
    %s21 = sphi 0, %s25
    %p22 = scmp.ge.s32.totalorder %s21, 4
    %s31 = sphi 0, %s33
    %s34 = sphi 0, %s31
    %s35 = sphi 0, %s34
    %s51 = sphi 0, %s35
    %s55 = sphi 0, %s55
    %s57 = sphi 0, %s55
    %s58 = sphi 0, %s57
    %s72 = sphi 0, %s58
    %s76 = sphi 0, %s76
    %s78 = sphi 0, %s76
    %s79 = sphi 0, %s78
    %s93 = sphi 0, %s79
    %s97 = sphi 0, %s97
    %s99 = sphi 0, %s97
    %s100 = sphi 0, %s99
    %s114 = sphi 0, %s100
    %s118 = sphi 0, %s118
    %s120 = sphi 0, %s118
    %s121 = sphi 0, %s120
    %s135 = sphi 0, %s121
    %s139 = sphi 0, %s139
    %s141 = sphi 0, %s139
    %s142 = sphi 0, %s141
    %s156 = sphi 0, %s142
    %s160 = sphi 0, %s160
    %s162 = sphi 0, %s160
    %s163 = sphi 0, %s162
    %s177 = sphi 0, %s163
    %s181 = sphi 0, %s181
    %s183 = sphi 0, %s181
    %s184 = sphi 0, %s183
    %s198 = sphi 0, %s184
    %s202 = sphi 0, %s202
    %s204 = sphi 0, %s202
    %s205 = sphi 0, %s204
    %s219 = sphi 0, %s205
    %s223 = sphi 0, %s223
    %s225 = sphi 0, %s223
    %s226 = sphi 0, %s225
    %s240 = sphi 0, %s226
    %s244 = sphi 0, %s244
    %s246 = sphi 0, %s244
    %s247 = sphi 0, %s246
    %s261 = sphi 0, %s247
    %s265 = sphi 0, %s265
    %s267 = sphi 0, %s265
    %s268 = sphi 0, %s267
    %s282 = sphi 0, %s268
    %s286 = sphi 0, %s286
    %s288 = sphi 0, %s286
    %s289 = sphi 0, %s288
    %s303 = sphi 0, %s289
    %s307 = sphi 0, %s307
    %s309 = sphi 0, %s307
    %s310 = sphi 0, %s309
    %s324 = sphi 0, %s310
    %s328 = sphi 0, %s328
    %s330 = sphi 0, %s328
    %s331 = sphi 0, %s330
    %s345 = sphi 0, %s331
    %s351 = sphi 0, %s353
    %s354 = sphi 0, %s351
    %s355 = sphi 0, %s354
    %s371 = sphi 0, %s355
  $region4: #{globalstage_forward.3} parent=0 // loop_header_branch
    %24 = sbr.rel (%p22) target = $region8
  $region5: #{globalstage_forward.3} parent=0 // loop_body
    %s26 = ssub.s32 %s21, 1
    %s27 = ssub.s32 %s21, 2
    %s28 = sadd.s32 %s21, 1
    %s29 = ssub.s32 %s21, %s28
    %p30 = scmp.eq.s32.totalorder %s29, 0
    %s32 = sadd.s32 %s31, 1
    %s33 = scalar_select %p30, %s31, %s32
    %p36 = pneg %p30
    %p37 = scmp.eq.s32.totalorder %s21, 1
    %p38 = por %p36, %p37
    %p39 = scmp.ne.s32.totalorder %s31, %s34
    %p40 = scmp.eq.s32.totalorder %s21, 0
    %p41 = por %p39, %p40
    %p42 = scmp.ne.s32.totalorder %s31, %s34
    %p43 = scmp.eq.s32.totalorder %s26, 1
    %p44 = por %p42, %p43
    %p45 = scmp.ne.s32.totalorder %s34, %s35
    %p46 = scmp.eq.s32.totalorder %s26, 0
    %p47 = por %p45, %p46
    %p48 = scmp.ne.s32.totalorder %s34, %s35
    %p49 = scmp.eq.s32.totalorder %s27, 1
    %p50 = por %p48, %p49
    %p52 = scmp.ne.s32.totalorder %s35, %s51
    %p53 = scmp.eq.s32.totalorder %s27, 0
    %p54 = por %p52, %p53
    %s56 = sadd.s32 %s55, 1
    %p59 = scmp.eq.s32.totalorder %s21, 1
    %p60 = scmp.ne.s32.totalorder %s55, %s57
    %p61 = scmp.eq.s32.totalorder %s21, 0
    %p62 = por %p60, %p61
    %p63 = scmp.ne.s32.totalorder %s55, %s57
    %p64 = scmp.eq.s32.totalorder %s26, 1
    %p65 = por %p63, %p64
    %p66 = scmp.ne.s32.totalorder %s57, %s58
    %p67 = scmp.eq.s32.totalorder %s26, 0
    %p68 = por %p66, %p67
    %p69 = scmp.ne.s32.totalorder %s57, %s58
    %p70 = scmp.eq.s32.totalorder %s27, 1
    %p71 = por %p69, %p70
    %p73 = scmp.ne.s32.totalorder %s58, %s72
    %p74 = scmp.eq.s32.totalorder %s27, 0
    %p75 = por %p73, %p74
    %s77 = sadd.s32 %s76, 1
    %p80 = scmp.eq.s32.totalorder %s21, 1
    %p81 = scmp.ne.s32.totalorder %s76, %s78
    %p82 = scmp.eq.s32.totalorder %s21, 0
    %p83 = por %p81, %p82
    %p84 = scmp.ne.s32.totalorder %s76, %s78
    %p85 = scmp.eq.s32.totalorder %s26, 1
    %p86 = por %p84, %p85
    %p87 = scmp.ne.s32.totalorder %s78, %s79
    %p88 = scmp.eq.s32.totalorder %s26, 0
    %p89 = por %p87, %p88
    %p90 = scmp.ne.s32.totalorder %s78, %s79
    %p91 = scmp.eq.s32.totalorder %s27, 1
    %p92 = por %p90, %p91
    %p94 = scmp.ne.s32.totalorder %s79, %s93
    %p95 = scmp.eq.s32.totalorder %s27, 0
    %p96 = por %p94, %p95
    %s98 = sadd.s32 %s97, 1
    %p101 = scmp.eq.s32.totalorder %s21, 1
    %p102 = scmp.ne.s32.totalorder %s97, %s99
    %p103 = scmp.eq.s32.totalorder %s21, 0
    %p104 = por %p102, %p103
    %p105 = scmp.ne.s32.totalorder %s97, %s99
    %p106 = scmp.eq.s32.totalorder %s26, 1
    %p107 = por %p105, %p106
    %p108 = scmp.ne.s32.totalorder %s99, %s100
    %p109 = scmp.eq.s32.totalorder %s26, 0
    %p110 = por %p108, %p109
    %p111 = scmp.ne.s32.totalorder %s99, %s100
    %p112 = scmp.eq.s32.totalorder %s27, 1
    %p113 = por %p111, %p112
    %p115 = scmp.ne.s32.totalorder %s100, %s114
    %p116 = scmp.eq.s32.totalorder %s27, 0
    %p117 = por %p115, %p116
    %s119 = sadd.s32 %s118, 1
    %p122 = scmp.eq.s32.totalorder %s21, 1
    %p123 = scmp.ne.s32.totalorder %s118, %s120
    %p124 = scmp.eq.s32.totalorder %s21, 0
    %p125 = por %p123, %p124
    %p126 = scmp.ne.s32.totalorder %s118, %s120
    %p127 = scmp.eq.s32.totalorder %s26, 1
    %p128 = por %p126, %p127
    %p129 = scmp.ne.s32.totalorder %s120, %s121
    %p130 = scmp.eq.s32.totalorder %s26, 0
    %p131 = por %p129, %p130
    %p132 = scmp.ne.s32.totalorder %s120, %s121
    %p133 = scmp.eq.s32.totalorder %s27, 1
    %p134 = por %p132, %p133
    %p136 = scmp.ne.s32.totalorder %s121, %s135
    %p137 = scmp.eq.s32.totalorder %s27, 0
    %p138 = por %p136, %p137
    %s140 = sadd.s32 %s139, 1
    %p143 = scmp.eq.s32.totalorder %s21, 1
    %p144 = scmp.ne.s32.totalorder %s139, %s141
    %p145 = scmp.eq.s32.totalorder %s21, 0
    %p146 = por %p144, %p145
    %p147 = scmp.ne.s32.totalorder %s139, %s141
    %p148 = scmp.eq.s32.totalorder %s26, 1
    %p149 = por %p147, %p148
    %p150 = scmp.ne.s32.totalorder %s141, %s142
    %p151 = scmp.eq.s32.totalorder %s26, 0
    %p152 = por %p150, %p151
    %p153 = scmp.ne.s32.totalorder %s141, %s142
    %p154 = scmp.eq.s32.totalorder %s27, 1
    %p155 = por %p153, %p154
    %p157 = scmp.ne.s32.totalorder %s142, %s156
    %p158 = scmp.eq.s32.totalorder %s27, 0
    %p159 = por %p157, %p158
    %s161 = sadd.s32 %s160, 1
    %p164 = scmp.eq.s32.totalorder %s21, 1
    %p165 = scmp.ne.s32.totalorder %s160, %s162
    %p166 = scmp.eq.s32.totalorder %s21, 0
    %p167 = por %p165, %p166
    %p168 = scmp.ne.s32.totalorder %s160, %s162
    %p169 = scmp.eq.s32.totalorder %s26, 1
    %p170 = por %p168, %p169
    %p171 = scmp.ne.s32.totalorder %s162, %s163
    %p172 = scmp.eq.s32.totalorder %s26, 0
    %p173 = por %p171, %p172
    %p174 = scmp.ne.s32.totalorder %s162, %s163
    %p175 = scmp.eq.s32.totalorder %s27, 1
    %p176 = por %p174, %p175
    %p178 = scmp.ne.s32.totalorder %s163, %s177
    %p179 = scmp.eq.s32.totalorder %s27, 0
    %p180 = por %p178, %p179
    %s182 = sadd.s32 %s181, 1
    %p185 = scmp.eq.s32.totalorder %s21, 1
    %p186 = scmp.ne.s32.totalorder %s181, %s183
    %p187 = scmp.eq.s32.totalorder %s21, 0
    %p188 = por %p186, %p187
    %p189 = scmp.ne.s32.totalorder %s181, %s183
    %p190 = scmp.eq.s32.totalorder %s26, 1
    %p191 = por %p189, %p190
    %p192 = scmp.ne.s32.totalorder %s183, %s184
    %p193 = scmp.eq.s32.totalorder %s26, 0
    %p194 = por %p192, %p193
    %p195 = scmp.ne.s32.totalorder %s183, %s184
    %p196 = scmp.eq.s32.totalorder %s27, 1
    %p197 = por %p195, %p196
    %p199 = scmp.ne.s32.totalorder %s184, %s198
    %p200 = scmp.eq.s32.totalorder %s27, 0
    %p201 = por %p199, %p200
    %s203 = sadd.s32 %s202, 1
    %p206 = scmp.eq.s32.totalorder %s21, 1
    %p207 = scmp.ne.s32.totalorder %s202, %s204
    %p208 = scmp.eq.s32.totalorder %s21, 0
    %p209 = por %p207, %p208
    %p210 = scmp.ne.s32.totalorder %s202, %s204
    %p211 = scmp.eq.s32.totalorder %s26, 1
    %p212 = por %p210, %p211
    %p213 = scmp.ne.s32.totalorder %s204, %s205
    %p214 = scmp.eq.s32.totalorder %s26, 0
    %p215 = por %p213, %p214
    %p216 = scmp.ne.s32.totalorder %s204, %s205
    %p217 = scmp.eq.s32.totalorder %s27, 1
    %p218 = por %p216, %p217
    %p220 = scmp.ne.s32.totalorder %s205, %s219
    %p221 = scmp.eq.s32.totalorder %s27, 0
    %p222 = por %p220, %p221
    %s224 = sadd.s32 %s223, 1
    %p227 = scmp.eq.s32.totalorder %s21, 1
    %p228 = scmp.ne.s32.totalorder %s223, %s225
    %p229 = scmp.eq.s32.totalorder %s21, 0
    %p230 = por %p228, %p229
    %p231 = scmp.ne.s32.totalorder %s223, %s225
    %p232 = scmp.eq.s32.totalorder %s26, 1
    %p233 = por %p231, %p232
    %p234 = scmp.ne.s32.totalorder %s225, %s226
    %p235 = scmp.eq.s32.totalorder %s26, 0
    %p236 = por %p234, %p235
    %p237 = scmp.ne.s32.totalorder %s225, %s226
    %p238 = scmp.eq.s32.totalorder %s27, 1
    %p239 = por %p237, %p238
    %p241 = scmp.ne.s32.totalorder %s226, %s240
    %p242 = scmp.eq.s32.totalorder %s27, 0
    %p243 = por %p241, %p242
    %s245 = sadd.s32 %s244, 1
    %p248 = scmp.eq.s32.totalorder %s21, 1
    %p249 = scmp.ne.s32.totalorder %s244, %s246
    %p250 = scmp.eq.s32.totalorder %s21, 0
    %p251 = por %p249, %p250
    %p252 = scmp.ne.s32.totalorder %s244, %s246
    %p253 = scmp.eq.s32.totalorder %s26, 1
    %p254 = por %p252, %p253
    %p255 = scmp.ne.s32.totalorder %s246, %s247
    %p256 = scmp.eq.s32.totalorder %s26, 0
    %p257 = por %p255, %p256
    %p258 = scmp.ne.s32.totalorder %s246, %s247
    %p259 = scmp.eq.s32.totalorder %s27, 1
    %p260 = por %p258, %p259
    %p262 = scmp.ne.s32.totalorder %s247, %s261
    %p263 = scmp.eq.s32.totalorder %s27, 0
    %p264 = por %p262, %p263
    %s266 = sadd.s32 %s265, 1
    %p269 = scmp.eq.s32.totalorder %s21, 1
    %p270 = scmp.ne.s32.totalorder %s265, %s267
    %p271 = scmp.eq.s32.totalorder %s21, 0
    %p272 = por %p270, %p271
    %p273 = scmp.ne.s32.totalorder %s265, %s267
    %p274 = scmp.eq.s32.totalorder %s26, 1
    %p275 = por %p273, %p274
    %p276 = scmp.ne.s32.totalorder %s267, %s268
    %p277 = scmp.eq.s32.totalorder %s26, 0
    %p278 = por %p276, %p277
    %p279 = scmp.ne.s32.totalorder %s267, %s268
    %p280 = scmp.eq.s32.totalorder %s27, 1
    %p281 = por %p279, %p280
    %p283 = scmp.ne.s32.totalorder %s268, %s282
    %p284 = scmp.eq.s32.totalorder %s27, 0
    %p285 = por %p283, %p284
    %s287 = sadd.s32 %s286, 1
    %p290 = scmp.eq.s32.totalorder %s21, 1
    %p291 = scmp.ne.s32.totalorder %s286, %s288
    %p292 = scmp.eq.s32.totalorder %s21, 0
    %p293 = por %p291, %p292
    %p294 = scmp.ne.s32.totalorder %s286, %s288
    %p295 = scmp.eq.s32.totalorder %s26, 1
    %p296 = por %p294, %p295
    %p297 = scmp.ne.s32.totalorder %s288, %s289
    %p298 = scmp.eq.s32.totalorder %s26, 0
    %p299 = por %p297, %p298
    %p300 = scmp.ne.s32.totalorder %s288, %s289
    %p301 = scmp.eq.s32.totalorder %s27, 1
    %p302 = por %p300, %p301
    %p304 = scmp.ne.s32.totalorder %s289, %s303
    %p305 = scmp.eq.s32.totalorder %s27, 0
    %p306 = por %p304, %p305
    %s308 = sadd.s32 %s307, 1
    %p311 = scmp.eq.s32.totalorder %s21, 1
    %p312 = scmp.ne.s32.totalorder %s307, %s309
    %p313 = scmp.eq.s32.totalorder %s21, 0
    %p314 = por %p312, %p313
    %p315 = scmp.ne.s32.totalorder %s307, %s309
    %p316 = scmp.eq.s32.totalorder %s26, 1
    %p317 = por %p315, %p316
    %p318 = scmp.ne.s32.totalorder %s309, %s310
    %p319 = scmp.eq.s32.totalorder %s26, 0
    %p320 = por %p318, %p319
    %p321 = scmp.ne.s32.totalorder %s309, %s310
    %p322 = scmp.eq.s32.totalorder %s27, 1
    %p323 = por %p321, %p322
    %p325 = scmp.ne.s32.totalorder %s310, %s324
    %p326 = scmp.eq.s32.totalorder %s27, 0
    %p327 = por %p325, %p326
    %s329 = sadd.s32 %s328, 1
    %p332 = scmp.eq.s32.totalorder %s21, 1
    %p333 = scmp.ne.s32.totalorder %s328, %s330
    %p334 = scmp.eq.s32.totalorder %s21, 0
    %p335 = por %p333, %p334
    %p336 = scmp.ne.s32.totalorder %s328, %s330
    %p337 = scmp.eq.s32.totalorder %s26, 1
    %p338 = por %p336, %p337
    %p339 = scmp.ne.s32.totalorder %s330, %s331
    %p340 = scmp.eq.s32.totalorder %s26, 0
    %p341 = por %p339, %p340
    %p342 = scmp.ne.s32.totalorder %s330, %s331
    %p343 = scmp.eq.s32.totalorder %s27, 1
    %p344 = por %p342, %p343
    %p346 = scmp.ne.s32.totalorder %s331, %s345
    %p347 = scmp.eq.s32.totalorder %s27, 0
    %p348 = por %p346, %p347
    %s349 = ssub.s32 %s21, %s28
    %p350 = scmp.eq.s32.totalorder %s349, 0
    %s352 = sadd.s32 %s351, 1
    %s353 = scalar_select %p350, %s351, %s352
    %p356 = pneg %p350
    %p357 = scmp.eq.s32.totalorder %s21, 1
    %p358 = por %p356, %p357
    %p359 = scmp.ne.s32.totalorder %s351, %s354
    %p360 = scmp.eq.s32.totalorder %s21, 0
    %p361 = por %p359, %p360
    %p362 = scmp.ne.s32.totalorder %s351, %s354
    %p363 = scmp.eq.s32.totalorder %s26, 1
    %p364 = por %p362, %p363
    %p365 = scmp.ne.s32.totalorder %s354, %s355
    %p366 = scmp.eq.s32.totalorder %s26, 0
    %p367 = por %p365, %p366
    %p368 = scmp.ne.s32.totalorder %s354, %s355
    %p369 = scmp.eq.s32.totalorder %s27, 1
    %p370 = por %p368, %p369
    %p372 = scmp.ne.s32.totalorder %s355, %s371
    %p373 = scmp.eq.s32.totalorder %s27, 0
    %p374 = por %p372, %p373
    %p375 = scmp.le.s32.totalorder 1, %s21
    %p376 = scmp.lt.s32.totalorder %s21, 3
    %p377 = pnand %p375, %p376
    %p378 = pneg %p377
    // Predicated region
    $region9: #{globalstage_forward.3} parent=5 // pred_check
      _
    $region10: #{globalstage_forward.3} parent=5 // pred_check_branch
      %380 = sbr.rel (%p377) target = $region12
    $region11: #{globalstage_forward.3} parent=5 // pred_region
      %s381 = ssub.s32 %s21, 1
      // Predicated region
      $region13: #{globalstage_forward.3} parent=11 // pred_check
        %p382 = pneg %p68
      $region14: #{globalstage_forward.3} parent=11 // pred_check_branch
        %384 = sbr.rel (%p382) target = $region16
      $region15: #{globalstage_forward.3} parent=11 // pred_region
        _
      $region16: #{globalstage_forward.3} parent=11 // pred_fallthru
        _
      // Predicated region
      $region17: #{globalstage_forward.3} parent=11 // pred_check
        %p385 = pneg %p89
      $region18: #{globalstage_forward.3} parent=11 // pred_check_branch
        %387 = sbr.rel (%p385) target = $region20
      $region19: #{globalstage_forward.3} parent=11 // pred_region
        _
      $region20: #{globalstage_forward.3} parent=11 // pred_fallthru
        _
      // Predicated region
      $region21: #{globalstage_forward.3} parent=11 // pred_check
        %p388 = pneg %p110
      $region22: #{globalstage_forward.3} parent=11 // pred_check_branch
        %390 = sbr.rel (%p388) target = $region24
      $region23: #{globalstage_forward.3} parent=11 // pred_region
        _
      $region24: #{globalstage_forward.3} parent=11 // pred_fallthru
        _
      // Predicated region
      $region25: #{globalstage_forward.3} parent=11 // pred_check
        %p391 = pneg %p131
      $region26: #{globalstage_forward.3} parent=11 // pred_check_branch
        %393 = sbr.rel (%p391) target = $region28
      $region27: #{globalstage_forward.3} parent=11 // pred_region
        _
      $region28: #{globalstage_forward.3} parent=11 // pred_fallthru
        _
      // Predicated region
      $region29: #{globalstage_forward.3} parent=11 // pred_check
        %p394 = pneg %p152
      $region30: #{globalstage_forward.3} parent=11 // pred_check_branch
        %396 = sbr.rel (%p394) target = $region32
      $region31: #{globalstage_forward.3} parent=11 // pred_region
        _
      $region32: #{globalstage_forward.3} parent=11 // pred_fallthru
        _
      // Predicated region
      $region33: #{globalstage_forward.3} parent=11 // pred_check
        %p397 = pneg %p173
      $region34: #{globalstage_forward.3} parent=11 // pred_check_branch
        %399 = sbr.rel (%p397) target = $region36
      $region35: #{globalstage_forward.3} parent=11 // pred_region
        _
      $region36: #{globalstage_forward.3} parent=11 // pred_fallthru
        _
      // Predicated region
      $region37: #{globalstage_forward.3} parent=11 // pred_check
        %p400 = pneg %p194
      $region38: #{globalstage_forward.3} parent=11 // pred_check_branch
        %402 = sbr.rel (%p400) target = $region40
      $region39: #{globalstage_forward.3} parent=11 // pred_region
        _
      $region40: #{globalstage_forward.3} parent=11 // pred_fallthru
        _
      // Predicated region
      $region41: #{globalstage_forward.3} parent=11 // pred_check
        %p403 = pneg %p215
      $region42: #{globalstage_forward.3} parent=11 // pred_check_branch
        %405 = sbr.rel (%p403) target = $region44
      $region43: #{globalstage_forward.3} parent=11 // pred_region
        _
      $region44: #{globalstage_forward.3} parent=11 // pred_fallthru
        _
      // Predicated region
      $region45: #{globalstage_forward.3} parent=11 // pred_check
        %p406 = pneg %p236
      $region46: #{globalstage_forward.3} parent=11 // pred_check_branch
        %408 = sbr.rel (%p406) target = $region48
      $region47: #{globalstage_forward.3} parent=11 // pred_region
        _
      $region48: #{globalstage_forward.3} parent=11 // pred_fallthru
        _
      // Predicated region
      $region49: #{globalstage_forward.3} parent=11 // pred_check
        %p409 = pneg %p257
      $region50: #{globalstage_forward.3} parent=11 // pred_check_branch
        %411 = sbr.rel (%p409) target = $region52
      $region51: #{globalstage_forward.3} parent=11 // pred_region
        _
      $region52: #{globalstage_forward.3} parent=11 // pred_fallthru
        _
      // Predicated region
      $region53: #{globalstage_forward.3} parent=11 // pred_check
        %p412 = pneg %p278
      $region54: #{globalstage_forward.3} parent=11 // pred_check_branch
        %414 = sbr.rel (%p412) target = $region56
      $region55: #{globalstage_forward.3} parent=11 // pred_region
        _
      $region56: #{globalstage_forward.3} parent=11 // pred_fallthru
        _
      // Predicated region
      $region57: #{globalstage_forward.3} parent=11 // pred_check
        %p415 = pneg %p299
      $region58: #{globalstage_forward.3} parent=11 // pred_check_branch
        %417 = sbr.rel (%p415) target = $region60
      $region59: #{globalstage_forward.3} parent=11 // pred_region
        _
      $region60: #{globalstage_forward.3} parent=11 // pred_fallthru
        _
      // Predicated region
      $region61: #{globalstage_forward.3} parent=11 // pred_check
        %p418 = pneg %p320
      $region62: #{globalstage_forward.3} parent=11 // pred_check_branch
        %420 = sbr.rel (%p418) target = $region64
      $region63: #{globalstage_forward.3} parent=11 // pred_region
        _
      $region64: #{globalstage_forward.3} parent=11 // pred_fallthru
        _
      // Predicated region
      $region65: #{globalstage_forward.3} parent=11 // pred_check
        %p421 = pneg %p341
      $region66: #{globalstage_forward.3} parent=11 // pred_check_branch
        %423 = sbr.rel (%p421) target = $region68
      $region67: #{globalstage_forward.3} parent=11 // pred_region
        _
      $region68: #{globalstage_forward.3} parent=11 // pred_fallthru
        _
    $region12: #{globalstage_forward.3} parent=5 // pred_fallthru
      _
    %p424 = scmp.lt.s32.totalorder %s21, 2
    // Predicated region
    $region69: #{globalstage_forward.3} parent=5 // pred_check
      %p425 = pneg %p424
    $region70: #{globalstage_forward.3} parent=5 // pred_check_branch
      %427 = sbr.rel (%p425) target = $region72
    $region71: #{globalstage_forward.3} parent=5 // pred_region
      // Predicated region
      $region73: #{globalstage_forward.3} parent=71 // pred_check
        %p428 = pneg %p41
      $region74: #{globalstage_forward.3} parent=71 // pred_check_branch
        %430 = sbr.rel (%p428) target = $region76
      $region75: #{globalstage_forward.3} parent=71 // pred_region
        %p431 = scmp.lt.s32.totalorder %s21, 1
        %s432 = scalar_select %p431, %s21, 1
        %s433 = smul.addr %s432, 8
        %s434 = smul.addr %s433, 4
        %s435 = scalar_lea.vmem %s0, %s434
      $region76: #{globalstage_forward.3} parent=71 // pred_fallthru
        _
    $region72: #{globalstage_forward.3} parent=5 // pred_fallthru
      _
    %p436 = scmp.le.s32.totalorder 1, %s21
    %p437 = scmp.lt.s32.totalorder %s21, 3
    %p438 = pnand %p436, %p437
    %p439 = pneg %p438
    // Predicated region
    $region77: #{globalstage_forward.3} parent=5 // pred_check
      _
    $region78: #{globalstage_forward.3} parent=5 // pred_check_branch
      %441 = sbr.rel (%p438) target = $region80
    $region79: #{globalstage_forward.3} parent=5 // pred_region
      %s442 = ssub.s32 %s21, 1
      %p443 = scmp.lt.s32.totalorder %s26, 1
      %s444 = scalar_select %p443, %s26, 1
      %s445 = smul.addr %s444, 8
      %s446 = smul.addr %s445, 4
      %s447 = scalar_lea.vmem %s0, %s446
      %p448 = pneg %p47
      %p449 = pneg %p44
      %p450 = pneg %p68
      %p451 = pneg %p65
      %p452 = pneg %p89
      %p453 = pneg %p86
      %p454 = pneg %p110
      %p455 = pneg %p107
      %p456 = pneg %p131
      %p457 = pneg %p128
      %p458 = pneg %p152
      %p459 = pneg %p149
      %p460 = pneg %p173
      %p461 = pneg %p170
      %p462 = pneg %p194
      %p463 = pneg %p191
      %p464 = pneg %p215
      %p465 = pneg %p212
      %p466 = pneg %p236
      %p467 = pneg %p233
      %p468 = pneg %p257
      %p469 = pneg %p254
      %p470 = pneg %p278
      %p471 = pneg %p275
      %p472 = pneg %p299
      %p473 = pneg %p296
      %p474 = pneg %p320
      %p475 = pneg %p317
      %p476 = pneg %p341
      %p477 = pneg %p338
      %p478 = pneg %p367
      %p479 = pneg %p364
      %p480 = scmp.lt.s32.totalorder %s26, 1
      %s481 = scalar_select %p480, %s26, 1
      %s482 = smul.addr %s481, 8
      %s483 = smul.addr %s482, 4
      %s484 = scalar_lea.vmem %s15, %s483
      %p485 = scmp.lt.s32.totalorder %s26, 1
      %s486 = scalar_select %p485, %s26, 1
      %s487 = smul.addr %s486, 8
      %s488 = smul.addr %s487, 4
      %s489 = scalar_lea.vmem %s0, %s488
      %p490 = scmp.lt.s32.totalorder %s26, 1
      %s491 = scalar_select %p490, %s26, 1
      %s492 = smul.addr %s491, 8
      %s493 = smul.addr %s492, 4
      %s494 = scalar_lea.vmem %s15, %s493
      %v496 = vld [vmem:[%s489] sm:$0xf]
      %v497 = vld [vmem:[%s489 + $0x4] sm:$0xf]
      %v498 = vld [vmem:[%s489 + $0x8] sm:$0xf]
      %v499 = vld [vmem:[%s489 + $0xc] sm:$0xf]
      %v500 = vld [vmem:[%s489 + $0x10] sm:$0xf]
      %v501 = vld [vmem:[%s489 + $0x14] sm:$0xf]
      %v502 = vld [vmem:[%s489 + $0x18] sm:$0xf]
      %v503 = vld [vmem:[%s489 + $0x1c] sm:$0xf]
      %v504 = vunpack.c.l.bf16 %v496
      %v505 = vunpack.c.l.bf16 %v497
      %v506 = vunpack.c.l.bf16 %v498
      %v507 = vunpack.c.l.bf16 %v499
      %v508 = vunpack.c.l.bf16 %v500
      %v509 = vunpack.c.l.bf16 %v501
      %v510 = vunpack.c.l.bf16 %v502
      %v511 = vunpack.c.l.bf16 %v503
      %v512 = vld [vmem:[%s1] sm:$0x7]
      %v513 = vld [vmem:[%s1 + $0x4] sm:$0x7]
      %v514 = vld [vmem:[%s1 + $0x8] sm:$0x7]
      %v515 = vld [vmem:[%s2] sm:$0x1]
      %v524 = vrot.slane 0.0, 7
      %v525 = vrot.slane %v504, 7
      %v526 = vrot.slane %v505, 7
      %v527 = vrot.slane %v506, 7
      %v528 = vrot.slane %v507, 7
      %v529 = vrot.slane %v508, 7
      %v530 = vrot.slane %v509, 7
      %v531 = vrot.slane %v510, 7
      %vm540 = vcmask 1040384
      %v541 = vsel %vm540, 0.0, %v524
      %v542 = vsel %vm540, 0.0, %v525
      %v543 = vsel %vm540, 0.0, %v526
      %v544 = vsel %vm540, 0.0, %v527
      %v545 = vsel %vm540, 0.0, %v528
      %v546 = vsel %vm540, 0.0, %v529
      %v547 = vsel %vm540, 0.0, %v530
      %v548 = vsel %vm540, 0.0, %v531
      %v549 = vlaneseq
      %v550 = vshrl.u32 %v549, 7
      %v551 = vsub.s32 0, %v550
      %v552 = vrot.slane %v512, %v551
      %v553 = vmul.f32 %v541, %v552
      %v554 = vmul.f32 %v542, %v552
      %v555 = vmul.f32 %v543, %v552
      %v556 = vmul.f32 %v544, %v552
      %v557 = vmul.f32 %v545, %v552
      %v558 = vmul.f32 %v546, %v552
      %v559 = vmul.f32 %v547, %v552
      %v560 = vmul.f32 %v548, %v552
      %v561 = vadd.f32 %v553, 0.0
      %v562 = vadd.f32 %v554, 0.0
      %v563 = vadd.f32 %v555, 0.0
      %v564 = vadd.f32 %v556, 0.0
      %v565 = vadd.f32 %v557, 0.0
      %v566 = vadd.f32 %v558, 0.0
      %v567 = vadd.f32 %v559, 0.0
      %v568 = vadd.f32 %v560, 0.0
      %v569 = vlaneseq
      %v570 = vshrl.u32 %v569, 7
      %v571 = vsub.s32 1, %v570
      %v572 = vrot.slane %v512, %v571
      %v573 = vmul.f32 %v572, 0.0
      %v574 = vmul.f32 %v504, %v572
      %v575 = vmul.f32 %v505, %v572
      %v576 = vmul.f32 %v506, %v572
      %v577 = vmul.f32 %v507, %v572
      %v578 = vmul.f32 %v508, %v572
      %v579 = vmul.f32 %v509, %v572
      %v580 = vmul.f32 %v510, %v572
      %v581 = vadd.f32 %v561, %v573
      %v582 = vadd.f32 %v562, %v574
      %v583 = vadd.f32 %v563, %v575
      %v584 = vadd.f32 %v564, %v576
      %v585 = vadd.f32 %v565, %v577
      %v586 = vadd.f32 %v566, %v578
      %v587 = vadd.f32 %v567, %v579
      %v588 = vadd.f32 %v568, %v580
      %v589 = vrot.slane 0.0, 1
      %v590 = vrot.slane %v504, 1
      %v591 = vrot.slane %v505, 1
      %v592 = vrot.slane %v506, 1
      %v593 = vrot.slane %v507, 1
      %v594 = vrot.slane %v508, 1
      %v595 = vrot.slane %v509, 1
      %v596 = vrot.slane %v510, 1
      %vm605 = vcmask 1046528
      %v606 = vsel %vm605, %v589, 0.0
      %v607 = vsel %vm605, %v590, 0.0
      %v608 = vsel %vm605, %v591, 0.0
      %v609 = vsel %vm605, %v592, 0.0
      %v610 = vsel %vm605, %v593, 0.0
      %v611 = vsel %vm605, %v594, 0.0
      %v612 = vsel %vm605, %v595, 0.0
      %v613 = vsel %vm605, %v596, 0.0
      %v614 = vlaneseq
      %v615 = vshrl.u32 %v614, 7
      %v616 = vsub.s32 2, %v615
      %v617 = vrot.slane %v512, %v616
      %v618 = vmul.f32 %v606, %v617
      %v619 = vmul.f32 %v607, %v617
      %v620 = vmul.f32 %v608, %v617
      %v621 = vmul.f32 %v609, %v617
      %v622 = vmul.f32 %v610, %v617
      %v623 = vmul.f32 %v611, %v617
      %v624 = vmul.f32 %v612, %v617
      %v625 = vmul.f32 %v613, %v617
      %v626 = vadd.f32 %v581, %v618
      %v627 = vadd.f32 %v582, %v619
      %v628 = vadd.f32 %v583, %v620
      %v629 = vadd.f32 %v584, %v621
      %v630 = vadd.f32 %v585, %v622
      %v631 = vadd.f32 %v586, %v623
      %v632 = vadd.f32 %v587, %v624
      %v633 = vadd.f32 %v588, %v625
      %v635 = vrot.slane %v511, 7
      %v637 = vsel %vm540, 0.0, %v635
      %v638 = vlaneseq
      %v639 = vshrl.u32 %v638, 7
      %v640 = vsub.s32 0, %v639
      %v641 = vrot.slane %v513, %v640
      %v642 = vmul.f32 %v542, %v641
      %v643 = vmul.f32 %v543, %v641
      %v644 = vmul.f32 %v544, %v641
      %v645 = vmul.f32 %v545, %v641
      %v646 = vmul.f32 %v546, %v641
      %v647 = vmul.f32 %v547, %v641
      %v648 = vmul.f32 %v548, %v641
      %v649 = vmul.f32 %v637, %v641
      %v650 = vadd.f32 %v626, %v642
      %v651 = vadd.f32 %v627, %v643
      %v652 = vadd.f32 %v628, %v644
      %v653 = vadd.f32 %v629, %v645
      %v654 = vadd.f32 %v630, %v646
      %v655 = vadd.f32 %v631, %v647
      %v656 = vadd.f32 %v632, %v648
      %v657 = vadd.f32 %v633, %v649
      %v658 = vlaneseq
      %v659 = vshrl.u32 %v658, 7
      %v660 = vsub.s32 1, %v659
      %v661 = vrot.slane %v513, %v660
      %v662 = vmul.f32 %v504, %v661
      %v663 = vmul.f32 %v505, %v661
      %v664 = vmul.f32 %v506, %v661
      %v665 = vmul.f32 %v507, %v661
      %v666 = vmul.f32 %v508, %v661
      %v667 = vmul.f32 %v509, %v661
      %v668 = vmul.f32 %v510, %v661
      %v669 = vmul.f32 %v511, %v661
      %v670 = vadd.f32 %v650, %v662
      %v671 = vadd.f32 %v651, %v663
      %v672 = vadd.f32 %v652, %v664
      %v673 = vadd.f32 %v653, %v665
      %v674 = vadd.f32 %v654, %v666
      %v675 = vadd.f32 %v655, %v667
      %v676 = vadd.f32 %v656, %v668
      %v677 = vadd.f32 %v657, %v669
      %v678 = vrot.slane %v511, 1
      %v680 = vsel %vm605, %v678, 0.0
      %v681 = vlaneseq
      %v682 = vshrl.u32 %v681, 7
      %v683 = vsub.s32 2, %v682
      %v684 = vrot.slane %v513, %v683
      %v685 = vmul.f32 %v607, %v684
      %v686 = vmul.f32 %v608, %v684
      %v687 = vmul.f32 %v609, %v684
      %v688 = vmul.f32 %v610, %v684
      %v689 = vmul.f32 %v611, %v684
      %v690 = vmul.f32 %v612, %v684
      %v691 = vmul.f32 %v613, %v684
      %v692 = vmul.f32 %v680, %v684
      %v693 = vadd.f32 %v670, %v685
      %v694 = vadd.f32 %v671, %v686
      %v695 = vadd.f32 %v672, %v687
      %v696 = vadd.f32 %v673, %v688
      %v697 = vadd.f32 %v674, %v689
      %v698 = vadd.f32 %v675, %v690
      %v699 = vadd.f32 %v676, %v691
      %v700 = vadd.f32 %v677, %v692
      %v701 = vlaneseq
      %v702 = vshrl.u32 %v701, 7
      %v703 = vsub.s32 0, %v702
      %v704 = vrot.slane %v514, %v703
      %v705 = vmul.f32 %v543, %v704
      %v706 = vmul.f32 %v544, %v704
      %v707 = vmul.f32 %v545, %v704
      %v708 = vmul.f32 %v546, %v704
      %v709 = vmul.f32 %v547, %v704
      %v710 = vmul.f32 %v548, %v704
      %v711 = vmul.f32 %v637, %v704
      %v712 = vmul.f32 %v541, %v704
      %v713 = vadd.f32 %v693, %v705
      %v714 = vadd.f32 %v694, %v706
      %v715 = vadd.f32 %v695, %v707
      %v716 = vadd.f32 %v696, %v708
      %v717 = vadd.f32 %v697, %v709
      %v718 = vadd.f32 %v698, %v710
      %v719 = vadd.f32 %v699, %v711
      %v720 = vadd.f32 %v700, %v712
      %v721 = vlaneseq
      %v722 = vshrl.u32 %v721, 7
      %v723 = vsub.s32 1, %v722
      %v724 = vrot.slane %v514, %v723
      %v725 = vmul.f32 %v505, %v724
      %v726 = vmul.f32 %v506, %v724
      %v727 = vmul.f32 %v507, %v724
      %v728 = vmul.f32 %v508, %v724
      %v729 = vmul.f32 %v509, %v724
      %v730 = vmul.f32 %v510, %v724
      %v731 = vmul.f32 %v511, %v724
      %v732 = vmul.f32 %v724, 0.0
      %v733 = vadd.f32 %v713, %v725
      %v734 = vadd.f32 %v714, %v726
      %v735 = vadd.f32 %v715, %v727
      %v736 = vadd.f32 %v716, %v728
      %v737 = vadd.f32 %v717, %v729
      %v738 = vadd.f32 %v718, %v730
      %v739 = vadd.f32 %v719, %v731
      %v740 = vadd.f32 %v720, %v732
      %v741 = vlaneseq
      %v742 = vshrl.u32 %v741, 7
      %v743 = vsub.s32 2, %v742
      %v744 = vrot.slane %v514, %v743
      %v745 = vmul.f32 %v608, %v744
      %v746 = vmul.f32 %v609, %v744
      %v747 = vmul.f32 %v610, %v744
      %v748 = vmul.f32 %v611, %v744
      %v749 = vmul.f32 %v612, %v744
      %v750 = vmul.f32 %v613, %v744
      %v751 = vmul.f32 %v680, %v744
      %v752 = vmul.f32 %v606, %v744
      %v753 = vadd.f32 %v733, %v745
      %v754 = vadd.f32 %v734, %v746
      %v755 = vadd.f32 %v735, %v747
      %v756 = vadd.f32 %v736, %v748
      %v757 = vadd.f32 %v737, %v749
      %v758 = vadd.f32 %v738, %v750
      %v759 = vadd.f32 %v739, %v751
      %v760 = vadd.f32 %v740, %v752
      %v761 = vadd.f32 %v504, %v753
      %v762 = vadd.f32 %v505, %v754
      %v763 = vadd.f32 %v506, %v755
      %v764 = vadd.f32 %v507, %v756
      %v765 = vadd.f32 %v508, %v757
      %v766 = vadd.f32 %v509, %v758
      %v767 = vadd.f32 %v510, %v759
      %v768 = vadd.f32 %v511, %v760
      %v770 = vlaneseq
      %v771 = vshrl.u32 %v770, 7
      %v772 = vsub.s32 0, %v771
      %v773 = vrot.slane %v515, %v772
      %v775 = vadd.f32 %v761, %v773
      %v776 = vadd.f32 %v762, %v773
      %v777 = vadd.f32 %v763, %v773
      %v778 = vadd.f32 %v764, %v773
      %v779 = vadd.f32 %v765, %v773
      %v780 = vadd.f32 %v766, %v773
      %v781 = vadd.f32 %v767, %v773
      %v782 = vadd.f32 %v768, %v773
      %v783 = vld [vmem:[%s3] sm:$0x1]
      %v784 = vld [vmem:[%s4] sm:$0x1]
      %vm785 = vcmask 261120
      %v786 = vsel %vm785, %v775, 0.0
      %787 = vadd.xlane.f32.xlu0 %v786
      %v788 = vpop.xlane.xlu0 %787
      %v789 = vsel %vm785, %v776, 0.0
      %790 = vadd.xlane.f32.xlu0 %v789
      %v791 = vpop.xlane.xlu0 %790
      %v792 = vsel %vm785, %v777, 0.0
      %793 = vadd.xlane.f32.xlu0 %v792
      %v794 = vpop.xlane.xlu0 %793
      %v795 = vsel %vm785, %v778, 0.0
      %796 = vadd.xlane.f32.xlu0 %v795
      %v797 = vpop.xlane.xlu0 %796
      %v798 = vsel %vm785, %v779, 0.0
      %799 = vadd.xlane.f32.xlu0 %v798
      %v800 = vpop.xlane.xlu0 %799
      %v801 = vsel %vm785, %v780, 0.0
      %802 = vadd.xlane.f32.xlu0 %v801
      %v803 = vpop.xlane.xlu0 %802
      %v804 = vsel %vm785, %v781, 0.0
      %805 = vadd.xlane.f32.xlu0 %v804
      %v806 = vpop.xlane.xlu0 %805
      %v807 = vsel %vm785, %v782, 0.0
      %808 = vadd.xlane.f32.xlu0 %v807
      %v809 = vpop.xlane.xlu0 %808
      %v810 = vrcp.pop 32.0
      %v811 = vmul.f32 %v788, %v810
      %v812 = vmul.f32 %v791, %v810
      %v813 = vmul.f32 %v794, %v810
      %v814 = vmul.f32 %v797, %v810
      %v815 = vmul.f32 %v800, %v810
      %v816 = vmul.f32 %v803, %v810
      %v817 = vmul.f32 %v806, %v810
      %v818 = vmul.f32 %v809, %v810
      %v819 = vsub.f32 %v775, %v811
      %v820 = vsub.f32 %v776, %v812
      %v821 = vsub.f32 %v777, %v813
      %v822 = vsub.f32 %v778, %v814
      %v823 = vsub.f32 %v779, %v815
      %v824 = vsub.f32 %v780, %v816
      %v825 = vsub.f32 %v781, %v817
      %v826 = vsub.f32 %v782, %v818
      %v827 = vmul.f32 %v819, %v819
      %v828 = vmul.f32 %v820, %v820
      %v829 = vmul.f32 %v821, %v821
      %v830 = vmul.f32 %v822, %v822
      %v831 = vmul.f32 %v823, %v823
      %v832 = vmul.f32 %v824, %v824
      %v833 = vmul.f32 %v825, %v825
      %v834 = vmul.f32 %v826, %v826
      %v835 = vsel %vm785, %v827, 0.0
      %836 = vadd.xlane.f32.xlu0 %v835
      %v837 = vpop.xlane.xlu0 %836
      %v838 = vsel %vm785, %v828, 0.0
      %839 = vadd.xlane.f32.xlu0 %v838
      %v840 = vpop.xlane.xlu0 %839
      %v841 = vsel %vm785, %v829, 0.0
      %842 = vadd.xlane.f32.xlu0 %v841
      %v843 = vpop.xlane.xlu0 %842
      %v844 = vsel %vm785, %v830, 0.0
      %845 = vadd.xlane.f32.xlu0 %v844
      %v846 = vpop.xlane.xlu0 %845
      %v847 = vsel %vm785, %v831, 0.0
      %848 = vadd.xlane.f32.xlu0 %v847
      %v849 = vpop.xlane.xlu0 %848
      %v850 = vsel %vm785, %v832, 0.0
      %851 = vadd.xlane.f32.xlu0 %v850
      %v852 = vpop.xlane.xlu0 %851
      %v853 = vsel %vm785, %v833, 0.0
      %854 = vadd.xlane.f32.xlu0 %v853
      %v855 = vpop.xlane.xlu0 %854
      %v856 = vsel %vm785, %v834, 0.0
      %857 = vadd.xlane.f32.xlu0 %v856
      %v858 = vpop.xlane.xlu0 %857
      %v859 = vmul.f32 %v837, %v810
      %v860 = vmul.f32 %v840, %v810
      %v861 = vmul.f32 %v843, %v810
      %v862 = vmul.f32 %v846, %v810
      %v863 = vmul.f32 %v849, %v810
      %v864 = vmul.f32 %v852, %v810
      %v865 = vmul.f32 %v855, %v810
      %v866 = vmul.f32 %v858, %v810
      %v867 = vadd.f32 %v859, 1e-05
      %v868 = vadd.f32 %v860, 1e-05
      %v869 = vadd.f32 %v861, 1e-05
      %v870 = vadd.f32 %v862, 1e-05
      %v871 = vadd.f32 %v863, 1e-05
      %v872 = vadd.f32 %v864, 1e-05
      %v873 = vadd.f32 %v865, 1e-05
      %v874 = vadd.f32 %v866, 1e-05
      %v875 = vrsqrt.pop %v867
      %v876 = vrsqrt.pop %v868
      %v877 = vrsqrt.pop %v869
      %v878 = vrsqrt.pop %v870
      %v879 = vrsqrt.pop %v871
      %v880 = vrsqrt.pop %v872
      %v881 = vrsqrt.pop %v873
      %v882 = vrsqrt.pop %v874
      %v883 = vmul.f32 %v819, %v875
      %v884 = vmul.f32 %v820, %v876
      %v885 = vmul.f32 %v821, %v877
      %v886 = vmul.f32 %v822, %v878
      %v887 = vmul.f32 %v823, %v879
      %v888 = vmul.f32 %v824, %v880
      %v889 = vmul.f32 %v825, %v881
      %v890 = vmul.f32 %v826, %v882
      %v892 = vlaneseq
      %v893 = vshrl.u32 %v892, 7
      %v894 = vsub.s32 0, %v893
      %v895 = vrot.slane %v783, %v894
      %v897 = vmul.f32 %v883, %v895
      %v898 = vmul.f32 %v884, %v895
      %v899 = vmul.f32 %v885, %v895
      %v900 = vmul.f32 %v886, %v895
      %v901 = vmul.f32 %v887, %v895
      %v902 = vmul.f32 %v888, %v895
      %v903 = vmul.f32 %v889, %v895
      %v904 = vmul.f32 %v890, %v895
      %v906 = vlaneseq
      %v907 = vshrl.u32 %v906, 7
      %v908 = vsub.s32 0, %v907
      %v909 = vrot.slane %v784, %v908
      %v911 = vadd.f32 %v897, %v909
      %v912 = vadd.f32 %v898, %v909
      %v913 = vadd.f32 %v899, %v909
      %v914 = vadd.f32 %v900, %v909
      %v915 = vadd.f32 %v901, %v909
      %v916 = vadd.f32 %v902, %v909
      %v917 = vadd.f32 %v903, %v909
      %v918 = vadd.f32 %v904, %v909
      %v919 = vpack.c.bf16 %v912, %v911
      %v920 = vpack.c.bf16 %v914, %v913
      %v921 = vpack.c.bf16 %v916, %v915
      %v922 = vpack.c.bf16 %v918, %v917
      %v923 = vld [vmem:[%s5] sm:$0xf]
      %v924 = vld [vmem:[%s5 + $0x4] sm:$0xf]
      %v925 = vld [vmem:[%s5 + $0x8] sm:$0xf]
      %v926 = vld [vmem:[%s5 + $0xc] sm:$0xf]
      %v927 = vld [vmem:[%s6] sm:$0x1]
      %v929 = vlaneseq
      %v930 = vshrl.u32 %v929, 7
      %v931 = vsub.s32 0, %v930
      %v932 = vrot.slane %v927, %v931
      %v938 = vunpack.c.l.b16 %v923
      %v939 = vunpack.c.l.b16 %v924
      %v940 = vunpack.c.l.b16 %v925
      %v941 = vunpack.c.l.b16 %v926
      %v942 = vpack.c.b16 %v939, %v938
      %v943 = vpack.c.b16 %v941, %v940
      %v947 = vsel %vm785, %v919, 0
      %v950 = vsel %vm785, %v920, 0
      %v953 = vsel %vm785, %v921, 0
      %v956 = vsel %vm785, %v922, 0
      %958 = vmatprep.subr.bf16.mxu0 0
      %959 = vmatpush1.bf16.msra.mxu0 %v942
      %960 = vmatprep.subr.bf16.mxu0 0
      %961 = vmatpush1.bf16.msra.mxu0 %v943
      %962 = vmatprep.subr.bf16.mxu0 0
      %963 = vmatpush1.bf16.msra.mxu0 0
      %964 = vmatprep.subr.bf16.mxu0 0
      %965 = vmatpush1.bf16.msra.mxu0 0
      %966 = vmatprep.subr.bf16.mxu0 0
      %967 = vmatpush1.bf16.msra.mxu0 0
      %968 = vmatprep.subr.bf16.mxu0 0
      %969 = vmatpush1.bf16.msra.mxu0 0
      %970 = vmatprep.subr.bf16.mxu0 0
      %971 = vmatpush1.bf16.msra.mxu0 0
      %972 = vmatprep.subr.bf16.mxu0 0
      %973 = vmatpush1.bf16.msra.mxu0 0
      %974 = vmatprep.subr.bf16.mxu0 0
      %975 = vmatpush1.bf16.msra.mxu0 0
      %976 = vmatprep.subr.bf16.mxu0 0
      %977 = vmatpush1.bf16.msra.mxu0 0
      %978 = vmatprep.subr.bf16.mxu0 0
      %979 = vmatpush1.bf16.msra.mxu0 0
      %980 = vmatprep.subr.bf16.mxu0 0
      %981 = vmatpush1.bf16.msra.mxu0 0
      %982 = vmatprep.subr.bf16.mxu0 0
      %983 = vmatpush1.bf16.msra.mxu0 0
      %984 = vmatprep.subr.bf16.mxu0 0
      %985 = vmatpush1.bf16.msra.mxu0 0
      %986 = vmatprep.subr.bf16.mxu0 0
      %987 = vmatpush1.bf16.msra.mxu0 0
      %988 = vmatprep.subr.bf16.mxu0 0
      %989 = vmatpush1.bf16.msra.mxu0 0
      %990 = vmatprep.mubr.bf16.mxu0 0
      %991 = vmatmul.mubr.bf16.gmra.mrb[0].mxu0 %v947
      %v992 = vpop.f32.mrb[0].mxu0
      %v993 = vadd.f32 %v932, %v992
      %v994 = vpop.f32.mrb[0].mxu0
      %v995 = vpop.f32.mrb[0].mxu0
      %v996 = vadd.f32 %v932, %v995
      %v997 = vpop.f32.mrb[0].mxu0
      %998 = vmatprep.mubr.bf16.mxu0 0
      %999 = vmatmul.mubr.bf16.gmra.mrb[0].mxu0 %v950
      %v1000 = vpop.f32.mrb[0].mxu0
      %v1001 = vadd.f32 %v932, %v1000
      %v1002 = vpop.f32.mrb[0].mxu0
      %v1003 = vpop.f32.mrb[0].mxu0
      %v1004 = vadd.f32 %v932, %v1003
      %v1005 = vpop.f32.mrb[0].mxu0
      %1006 = vmatprep.mubr.bf16.mxu0 0
      %1007 = vmatmul.mubr.bf16.gmra.mrb[0].mxu0 %v953
      %v1008 = vpop.f32.mrb[0].mxu0
      %v1009 = vadd.f32 %v932, %v1008
      %v1010 = vpop.f32.mrb[0].mxu0
      %v1011 = vpop.f32.mrb[0].mxu0
      %v1012 = vadd.f32 %v932, %v1011
      %v1013 = vpop.f32.mrb[0].mxu0
      %1014 = vmatprep.mubr.bf16.mxu0 0
      %1015 = vmatmul.mubr.bf16.gmra.mrb[0].mxu0 %v956
      %v1016 = vpop.f32.mrb[0].mxu0
      %v1017 = vadd.f32 %v932, %v1016
      %v1018 = vpop.f32.mrb[0].mxu0
      %v1019 = vpop.f32.mrb[0].mxu0
      %v1020 = vadd.f32 %v932, %v1019
      %v1021 = vpop.f32.mrb[0].mxu0
      %1022 = vdwg.mxu0
      %v1023 = vmul.f32 %v993, 0.35355338
      %v1024 = vmul.f32 %v996, 0.35355338
      %v1025 = vmul.f32 %v1001, 0.35355338
      %v1026 = vmul.f32 %v1004, 0.35355338
      %v1027 = vmul.f32 %v1009, 0.35355338
      %v1028 = vmul.f32 %v1012, 0.35355338
      %v1029 = vmul.f32 %v1017, 0.35355338
      %v1030 = vmul.f32 %v1020, 0.35355338
      %1039 = vrot.lane.b32.xlu0 %v1023, 120
      %v1040 = vpop.permute.xlu0 %1039
      %1041 = vrot.lane.b32.xlu0 %v1024, 120
      %v1042 = vpop.permute.xlu0 %1041
      %1043 = vrot.lane.b32.xlu0 %v1025, 120
      %v1044 = vpop.permute.xlu0 %1043
      %1045 = vrot.lane.b32.xlu0 %v1026, 120
      %v1046 = vpop.permute.xlu0 %1045
      %1047 = vrot.lane.b32.xlu0 %v1027, 120
      %v1048 = vpop.permute.xlu0 %1047
      %1049 = vrot.lane.b32.xlu0 %v1028, 120
      %v1050 = vpop.permute.xlu0 %1049
      %1051 = vrot.lane.b32.xlu0 %v1029, 120
      %v1052 = vpop.permute.xlu0 %1051
      %1053 = vrot.lane.b32.xlu0 %v1030, 120
      %v1054 = vpop.permute.xlu0 %1053
      %1063 = vrot.lane.b32.xlu0 %v1023, 112
      %v1064 = vpop.permute.xlu0 %1063
      %1065 = vrot.lane.b32.xlu0 %v1024, 112
      %v1066 = vpop.permute.xlu0 %1065
      %1067 = vrot.lane.b32.xlu0 %v1025, 112
      %v1068 = vpop.permute.xlu0 %1067
      %1069 = vrot.lane.b32.xlu0 %v1026, 112
      %v1070 = vpop.permute.xlu0 %1069
      %1071 = vrot.lane.b32.xlu0 %v1027, 112
      %v1072 = vpop.permute.xlu0 %1071
      %1073 = vrot.lane.b32.xlu0 %v1028, 112
      %v1074 = vpop.permute.xlu0 %1073
      %1075 = vrot.lane.b32.xlu0 %v1029, 112
      %v1076 = vpop.permute.xlu0 %1075
      %1077 = vrot.lane.b32.xlu0 %v1030, 112
      %v1078 = vpop.permute.xlu0 %1077
      %1087 = vrot.lane.b32.xlu0 %v1023, 104
      %v1088 = vpop.permute.xlu0 %1087
      %1089 = vrot.lane.b32.xlu0 %v1024, 104
      %v1090 = vpop.permute.xlu0 %1089
      %1091 = vrot.lane.b32.xlu0 %v1025, 104
      %v1092 = vpop.permute.xlu0 %1091
      %1093 = vrot.lane.b32.xlu0 %v1026, 104
      %v1094 = vpop.permute.xlu0 %1093
      %1095 = vrot.lane.b32.xlu0 %v1027, 104
      %v1096 = vpop.permute.xlu0 %1095
      %1097 = vrot.lane.b32.xlu0 %v1028, 104
      %v1098 = vpop.permute.xlu0 %1097
      %1099 = vrot.lane.b32.xlu0 %v1029, 104
      %v1100 = vpop.permute.xlu0 %1099
      %1101 = vrot.lane.b32.xlu0 %v1030, 104
      %v1102 = vpop.permute.xlu0 %1101
      %v1111 = vpack.c.bf16 %v1024, %v1023
      %v1112 = vpack.c.bf16 %v1026, %v1025
      %v1113 = vpack.c.bf16 %v1028, %v1027
      %v1114 = vpack.c.bf16 %v1030, %v1029
      %v1115 = vpack.c.bf16 %v1042, %v1040
      %v1116 = vpack.c.bf16 %v1046, %v1044
      %v1117 = vpack.c.bf16 %v1050, %v1048
      %v1118 = vpack.c.bf16 %v1054, %v1052
      %v1119 = vpack.c.bf16 %v1066, %v1064
      %v1120 = vpack.c.bf16 %v1070, %v1068
      %v1121 = vpack.c.bf16 %v1074, %v1072
      %v1122 = vpack.c.bf16 %v1078, %v1076
      %v1123 = vpack.c.bf16 %v1090, %v1088
      %v1124 = vpack.c.bf16 %v1094, %v1092
      %v1125 = vpack.c.bf16 %v1098, %v1096
      %v1126 = vpack.c.bf16 %v1102, %v1100
      %1135 = vrot.lane.b32.xlu0 %v993, 120
      %v1136 = vpop.permute.xlu0 %1135
      %1137 = vrot.lane.b32.xlu0 %v996, 120
      %v1138 = vpop.permute.xlu0 %1137
      %1139 = vrot.lane.b32.xlu0 %v1001, 120
      %v1140 = vpop.permute.xlu0 %1139
      %1141 = vrot.lane.b32.xlu0 %v1004, 120
      %v1142 = vpop.permute.xlu0 %1141
      %1143 = vrot.lane.b32.xlu0 %v1009, 120
      %v1144 = vpop.permute.xlu0 %1143
      %1145 = vrot.lane.b32.xlu0 %v1012, 120
      %v1146 = vpop.permute.xlu0 %1145
      %1147 = vrot.lane.b32.xlu0 %v1017, 120
      %v1148 = vpop.permute.xlu0 %1147
      %1149 = vrot.lane.b32.xlu0 %v1020, 120
      %v1150 = vpop.permute.xlu0 %1149
      %1159 = vrot.lane.b32.xlu0 %v993, 112
      %v1160 = vpop.permute.xlu0 %1159
      %1161 = vrot.lane.b32.xlu0 %v996, 112
      %v1162 = vpop.permute.xlu0 %1161
      %1163 = vrot.lane.b32.xlu0 %v1001, 112
      %v1164 = vpop.permute.xlu0 %1163
      %1165 = vrot.lane.b32.xlu0 %v1004, 112
      %v1166 = vpop.permute.xlu0 %1165
      %1167 = vrot.lane.b32.xlu0 %v1009, 112
      %v1168 = vpop.permute.xlu0 %1167
      %1169 = vrot.lane.b32.xlu0 %v1012, 112
      %v1170 = vpop.permute.xlu0 %1169
      %1171 = vrot.lane.b32.xlu0 %v1017, 112
      %v1172 = vpop.permute.xlu0 %1171
      %1173 = vrot.lane.b32.xlu0 %v1020, 112
      %v1174 = vpop.permute.xlu0 %1173
      %1183 = vrot.lane.b32.xlu0 %v993, 104
      %v1184 = vpop.permute.xlu0 %1183
      %1185 = vrot.lane.b32.xlu0 %v996, 104
      %v1186 = vpop.permute.xlu0 %1185
      %1187 = vrot.lane.b32.xlu0 %v1001, 104
      %v1188 = vpop.permute.xlu0 %1187
      %1189 = vrot.lane.b32.xlu0 %v1004, 104
      %v1190 = vpop.permute.xlu0 %1189
      %1191 = vrot.lane.b32.xlu0 %v1009, 104
      %v1192 = vpop.permute.xlu0 %1191
      %1193 = vrot.lane.b32.xlu0 %v1012, 104
      %v1194 = vpop.permute.xlu0 %1193
      %1195 = vrot.lane.b32.xlu0 %v1017, 104
      %v1196 = vpop.permute.xlu0 %1195
      %1197 = vrot.lane.b32.xlu0 %v1020, 104
      %v1198 = vpop.permute.xlu0 %1197
      %v1207 = vpack.c.bf16 %v996, %v993
      %v1208 = vpack.c.bf16 %v1004, %v1001
      %v1209 = vpack.c.bf16 %v1012, %v1009
      %v1210 = vpack.c.bf16 %v1020, %v1017
      %v1211 = vpack.c.bf16 %v1138, %v1136
      %v1212 = vpack.c.bf16 %v1142, %v1140
      %v1213 = vpack.c.bf16 %v1146, %v1144
      %v1214 = vpack.c.bf16 %v1150, %v1148
      %v1215 = vpack.c.bf16 %v1162, %v1160
      %v1216 = vpack.c.bf16 %v1166, %v1164
      %v1217 = vpack.c.bf16 %v1170, %v1168
      %v1218 = vpack.c.bf16 %v1174, %v1172
      %v1219 = vpack.c.bf16 %v1186, %v1184
      %v1220 = vpack.c.bf16 %v1190, %v1188
      %v1221 = vpack.c.bf16 %v1194, %v1192
      %v1222 = vpack.c.bf16 %v1198, %v1196
      %1227 = vrot.lane.b32.xlu0 %v1207, 96
      %v1228 = vpop.permute.xlu0 %1227
      %1229 = vrot.lane.b32.xlu0 %v1208, 96
      %v1230 = vpop.permute.xlu0 %1229
      %1231 = vrot.lane.b32.xlu0 %v1209, 96
      %v1232 = vpop.permute.xlu0 %1231
      %1233 = vrot.lane.b32.xlu0 %v1210, 96
      %v1234 = vpop.permute.xlu0 %1233
      %vm1235 = vcmask 64512
      %v1237 = vsel %vm1235, %v1111, 0
      %v1240 = vsel %vm1235, %v1112, 0
      %v1243 = vsel %vm1235, %v1113, 0
      %v1246 = vsel %vm1235, %v1114, 0
      %v1249 = vsel %vm1235, %v1228, 0
      %v1252 = vsel %vm1235, %v1230, 0
      %v1255 = vsel %vm1235, %v1232, 0
      %v1258 = vsel %vm1235, %v1234, 0
      %1260 = vmatprep.subr.bf16.mxu0 0
      %1261 = vmatpush1.bf16.xpose.msra.mxu0 %v1249
      %1262 = vmatprep.subr.bf16.mxu0 0
      %1263 = vmatpush1.bf16.xpose.msra.mxu0 %v1252
      %1264 = vmatprep.subr.bf16.mxu0 0
      %1265 = vmatpush1.bf16.xpose.msra.mxu0 %v1255
      %1266 = vmatprep.subr.bf16.mxu0 0
      %1267 = vmatpush1.bf16.xpose.msra.mxu0 %v1258
      %1268 = vmatprep.subr.bf16.mxu0 0
      %1269 = vmatpush1.bf16.xpose.msra.mxu0 0
      %1270 = vmatprep.subr.bf16.mxu0 0
      %1271 = vmatpush1.bf16.xpose.msra.mxu0 0
      %1272 = vmatprep.subr.bf16.mxu0 0
      %1273 = vmatpush1.bf16.xpose.msra.mxu0 0
      %1274 = vmatprep.subr.bf16.mxu0 0
      %1275 = vmatpush1.bf16.xpose.msra.mxu0 0
      %1276 = vmatprep.subr.bf16.mxu0 0
      %1277 = vmatpush1.bf16.xpose.msra.mxu0 0
      %1278 = vmatprep.subr.bf16.mxu0 0
      %1279 = vmatpush1.bf16.xpose.msra.mxu0 0
      %1280 = vmatprep.subr.bf16.mxu0 0
      %1281 = vmatpush1.bf16.xpose.msra.mxu0 0
      %1282 = vmatprep.subr.bf16.mxu0 0
      %1283 = vmatpush1.bf16.xpose.msra.mxu0 0
      %1284 = vmatprep.subr.bf16.mxu0 0
      %1285 = vmatpush1.bf16.xpose.msra.mxu0 0
      %1286 = vmatprep.subr.bf16.mxu0 0
      %1287 = vmatpush1.bf16.xpose.msra.mxu0 0
      %1288 = vmatprep.subr.bf16.mxu0 0
      %1289 = vmatpush1.bf16.xpose.msra.mxu0 0
      %1290 = vmatprep.subr.bf16.mxu0 0
      %1291 = vmatpush1.bf16.xpose.msra.mxu0 0
      %1292 = vmatprep.mubr.bf16.mxu0 0
      %1293 = vmatmul.mubr.bf16.gmra.mrb[0].mxu0 %v1237
      %v1294 = vpop.f32.mrb[0].mxu0
      %v1295 = vadd.f32 0.0, %v1294
      %v1296 = vpop.f32.mrb[0].mxu0
      %v1297 = vpop.f32.mrb[0].mxu0
      %v1298 = vadd.f32 0.0, %v1297
      %v1299 = vpop.f32.mrb[0].mxu0
      %1300 = vmatprep.mubr.bf16.mxu0 0
      %1301 = vmatmul.mubr.bf16.gmra.mrb[0].mxu0 %v1240
      %v1302 = vpop.f32.mrb[0].mxu0
      %v1303 = vadd.f32 0.0, %v1302
      %v1304 = vpop.f32.mrb[0].mxu0
      %v1305 = vpop.f32.mrb[0].mxu0
      %v1306 = vadd.f32 0.0, %v1305
      %v1307 = vpop.f32.mrb[0].mxu0
      %1308 = vmatprep.mubr.bf16.mxu0 0
      %1309 = vmatmul.mubr.bf16.gmra.mrb[0].mxu0 %v1243
      %v1310 = vpop.f32.mrb[0].mxu0
      %v1311 = vadd.f32 0.0, %v1310
      %v1312 = vpop.f32.mrb[0].mxu0
      %v1313 = vpop.f32.mrb[0].mxu0
      %v1314 = vadd.f32 0.0, %v1313
      %v1315 = vpop.f32.mrb[0].mxu0
      %1316 = vmatprep.mubr.bf16.mxu0 0
      %1317 = vmatmul.mubr.bf16.gmra.mrb[0].mxu0 %v1246
      %v1318 = vpop.f32.mrb[0].mxu0
      %v1319 = vadd.f32 0.0, %v1318
      %v1320 = vpop.f32.mrb[0].mxu0
      %v1321 = vpop.f32.mrb[0].mxu0
      %v1322 = vadd.f32 0.0, %v1321
      %v1323 = vpop.f32.mrb[0].mxu0
      %1324 = vdwg.mxu0
      %1329 = vrot.lane.b32.xlu0 %v1211, 96
      %v1330 = vpop.permute.xlu0 %1329
      %1331 = vrot.lane.b32.xlu0 %v1212, 96
      %v1332 = vpop.permute.xlu0 %1331
      %1333 = vrot.lane.b32.xlu0 %v1213, 96
      %v1334 = vpop.permute.xlu0 %1333
      %1335 = vrot.lane.b32.xlu0 %v1214, 96
      %v1336 = vpop.permute.xlu0 %1335
      %v1338 = vsel %vm1235, %v1115, 0
      %v1341 = vsel %vm1235, %v1116, 0
      %v1344 = vsel %vm1235, %v1117, 0
      %v1347 = vsel %vm1235, %v1118, 0
      %v1350 = vsel %vm1235, %v1330, 0
      %v1353 = vsel %vm1235, %v1332, 0
      %v1356 = vsel %vm1235, %v1334, 0
      %v1359 = vsel %vm1235, %v1336, 0
      %1361 = vmatprep.subr.bf16.mxu0 0
      %1362 = vmatpush1.bf16.xpose.msra.mxu0 %v1350
      %1363 = vmatprep.subr.bf16.mxu0 0
      %1364 = vmatpush1.bf16.xpose.msra.mxu0 %v1353
      %1365 = vmatprep.subr.bf16.mxu0 0
      %1366 = vmatpush1.bf16.xpose.msra.mxu0 %v1356
      %1367 = vmatprep.subr.bf16.mxu0 0
      %1368 = vmatpush1.bf16.xpose.msra.mxu0 %v1359
      %1369 = vmatprep.subr.bf16.mxu0 0
      %1370 = vmatpush1.bf16.xpose.msra.mxu0 0
      %1371 = vmatprep.subr.bf16.mxu0 0
      %1372 = vmatpush1.bf16.xpose.msra.mxu0 0
      %1373 = vmatprep.subr.bf16.mxu0 0
      %1374 = vmatpush1.bf16.xpose.msra.mxu0 0
      %1375 = vmatprep.subr.bf16.mxu0 0
      %1376 = vmatpush1.bf16.xpose.msra.mxu0 0
      %1377 = vmatprep.subr.bf16.mxu0 0
      %1378 = vmatpush1.bf16.xpose.msra.mxu0 0
      %1379 = vmatprep.subr.bf16.mxu0 0
      %1380 = vmatpush1.bf16.xpose.msra.mxu0 0
      %1381 = vmatprep.subr.bf16.mxu0 0
      %1382 = vmatpush1.bf16.xpose.msra.mxu0 0
      %1383 = vmatprep.subr.bf16.mxu0 0
      %1384 = vmatpush1.bf16.xpose.msra.mxu0 0
      %1385 = vmatprep.subr.bf16.mxu0 0
      %1386 = vmatpush1.bf16.xpose.msra.mxu0 0
      %1387 = vmatprep.subr.bf16.mxu0 0
      %1388 = vmatpush1.bf16.xpose.msra.mxu0 0
      %1389 = vmatprep.subr.bf16.mxu0 0
      %1390 = vmatpush1.bf16.xpose.msra.mxu0 0
      %1391 = vmatprep.subr.bf16.mxu0 0
      %1392 = vmatpush1.bf16.xpose.msra.mxu0 0
      %1393 = vmatprep.mubr.bf16.mxu0 0
      %1394 = vmatmul.mubr.bf16.gmra.mrb[0].mxu0 %v1338
      %v1395 = vpop.f32.mrb[0].mxu0
      %v1396 = vadd.f32 0.0, %v1395
      %v1397 = vpop.f32.mrb[0].mxu0
      %v1398 = vpop.f32.mrb[0].mxu0
      %v1399 = vadd.f32 0.0, %v1398
      %v1400 = vpop.f32.mrb[0].mxu0
      %1401 = vmatprep.mubr.bf16.mxu0 0
      %1402 = vmatmul.mubr.bf16.gmra.mrb[0].mxu0 %v1341
      %v1403 = vpop.f32.mrb[0].mxu0
      %v1404 = vadd.f32 0.0, %v1403
      %v1405 = vpop.f32.mrb[0].mxu0
      %v1406 = vpop.f32.mrb[0].mxu0
      %v1407 = vadd.f32 0.0, %v1406
      %v1408 = vpop.f32.mrb[0].mxu0
      %1409 = vmatprep.mubr.bf16.mxu0 0
      %1410 = vmatmul.mubr.bf16.gmra.mrb[0].mxu0 %v1344
      %v1411 = vpop.f32.mrb[0].mxu0
      %v1412 = vadd.f32 0.0, %v1411
      %v1413 = vpop.f32.mrb[0].mxu0
      %v1414 = vpop.f32.mrb[0].mxu0
      %v1415 = vadd.f32 0.0, %v1414
      %v1416 = vpop.f32.mrb[0].mxu0
      %1417 = vmatprep.mubr.bf16.mxu0 0
      %1418 = vmatmul.mubr.bf16.gmra.mrb[0].mxu0 %v1347
      %v1419 = vpop.f32.mrb[0].mxu0
      %v1420 = vadd.f32 0.0, %v1419
      %v1421 = vpop.f32.mrb[0].mxu0
      %v1422 = vpop.f32.mrb[0].mxu0
      %v1423 = vadd.f32 0.0, %v1422
      %v1424 = vpop.f32.mrb[0].mxu0
      %1425 = vdwg.mxu0
      %1430 = vrot.lane.b32.xlu0 %v1215, 96
      %v1431 = vpop.permute.xlu0 %1430
      %1432 = vrot.lane.b32.xlu0 %v1216, 96
      %v1433 = vpop.permute.xlu0 %1432
      %1434 = vrot.lane.b32.xlu0 %v1217, 96
      %v1435 = vpop.permute.xlu0 %1434
      %1436 = vrot.lane.b32.xlu0 %v1218, 96
      %v1437 = vpop.permute.xlu0 %1436
      %v1439 = vsel %vm1235, %v1119, 0
      %v1442 = vsel %vm1235, %v1120, 0
      %v1445 = vsel %vm1235, %v1121, 0
      %v1448 = vsel %vm1235, %v1122, 0
      %v1451 = vsel %vm1235, %v1431, 0
      %v1454 = vsel %vm1235, %v1433, 0
      %v1457 = vsel %vm1235, %v1435, 0
      %v1460 = vsel %vm1235, %v1437, 0
      %1462 = vmatprep.subr.bf16.mxu0 0
      %1463 = vmatpush1.bf16.xpose.msra.mxu0 %v1451
      %1464 = vmatprep.subr.bf16.mxu0 0
      %1465 = vmatpush1.bf16.xpose.msra.mxu0 %v1454
      %1466 = vmatprep.subr.bf16.mxu0 0
      %1467 = vmatpush1.bf16.xpose.msra.mxu0 %v1457
      %1468 = vmatprep.subr.bf16.mxu0 0
      %1469 = vmatpush1.bf16.xpose.msra.mxu0 %v1460
      %1470 = vmatprep.subr.bf16.mxu0 0
      %1471 = vmatpush1.bf16.xpose.msra.mxu0 0
      %1472 = vmatprep.subr.bf16.mxu0 0
      %1473 = vmatpush1.bf16.xpose.msra.mxu0 0
      %1474 = vmatprep.subr.bf16.mxu0 0
      %1475 = vmatpush1.bf16.xpose.msra.mxu0 0
      %1476 = vmatprep.subr.bf16.mxu0 0
      %1477 = vmatpush1.bf16.xpose.msra.mxu0 0
      %1478 = vmatprep.subr.bf16.mxu0 0
      %1479 = vmatpush1.bf16.xpose.msra.mxu0 0
      %1480 = vmatprep.subr.bf16.mxu0 0
      %1481 = vmatpush1.bf16.xpose.msra.mxu0 0
      %1482 = vmatprep.subr.bf16.mxu0 0
      %1483 = vmatpush1.bf16.xpose.msra.mxu0 0
      %1484 = vmatprep.subr.bf16.mxu0 0
      %1485 = vmatpush1.bf16.xpose.msra.mxu0 0
      %1486 = vmatprep.subr.bf16.mxu0 0
      %1487 = vmatpush1.bf16.xpose.msra.mxu0 0
      %1488 = vmatprep.subr.bf16.mxu0 0
      %1489 = vmatpush1.bf16.xpose.msra.mxu0 0
      %1490 = vmatprep.subr.bf16.mxu0 0
      %1491 = vmatpush1.bf16.xpose.msra.mxu0 0
      %1492 = vmatprep.subr.bf16.mxu0 0
      %1493 = vmatpush1.bf16.xpose.msra.mxu0 0
      %1494 = vmatprep.mubr.bf16.mxu0 0
      %1495 = vmatmul.mubr.bf16.gmra.mrb[0].mxu0 %v1439
      %v1496 = vpop.f32.mrb[0].mxu0
      %v1497 = vadd.f32 0.0, %v1496
      %v1498 = vpop.f32.mrb[0].mxu0
      %v1499 = vpop.f32.mrb[0].mxu0
      %v1500 = vadd.f32 0.0, %v1499
      %v1501 = vpop.f32.mrb[0].mxu0
      %1502 = vmatprep.mubr.bf16.mxu0 0
      %1503 = vmatmul.mubr.bf16.gmra.mrb[0].mxu0 %v1442
      %v1504 = vpop.f32.mrb[0].mxu0
      %v1505 = vadd.f32 0.0, %v1504
      %v1506 = vpop.f32.mrb[0].mxu0
      %v1507 = vpop.f32.mrb[0].mxu0
      %v1508 = vadd.f32 0.0, %v1507
      %v1509 = vpop.f32.mrb[0].mxu0
      %1510 = vmatprep.mubr.bf16.mxu0 0
      %1511 = vmatmul.mubr.bf16.gmra.mrb[0].mxu0 %v1445
      %v1512 = vpop.f32.mrb[0].mxu0
      %v1513 = vadd.f32 0.0, %v1512
      %v1514 = vpop.f32.mrb[0].mxu0
      %v1515 = vpop.f32.mrb[0].mxu0
      %v1516 = vadd.f32 0.0, %v1515
      %v1517 = vpop.f32.mrb[0].mxu0
      %1518 = vmatprep.mubr.bf16.mxu0 0
      %1519 = vmatmul.mubr.bf16.gmra.mrb[0].mxu0 %v1448
      %v1520 = vpop.f32.mrb[0].mxu0
      %v1521 = vadd.f32 0.0, %v1520
      %v1522 = vpop.f32.mrb[0].mxu0
      %v1523 = vpop.f32.mrb[0].mxu0
      %v1524 = vadd.f32 0.0, %v1523
      %v1525 = vpop.f32.mrb[0].mxu0
      %1526 = vdwg.mxu0
      %1531 = vrot.lane.b32.xlu0 %v1219, 96
      %v1532 = vpop.permute.xlu0 %1531
      %1533 = vrot.lane.b32.xlu0 %v1220, 96
      %v1534 = vpop.permute.xlu0 %1533
      %1535 = vrot.lane.b32.xlu0 %v1221, 96
      %v1536 = vpop.permute.xlu0 %1535
      %1537 = vrot.lane.b32.xlu0 %v1222, 96
      %v1538 = vpop.permute.xlu0 %1537
      %v1540 = vsel %vm1235, %v1123, 0
      %v1543 = vsel %vm1235, %v1124, 0
      %v1546 = vsel %vm1235, %v1125, 0
      %v1549 = vsel %vm1235, %v1126, 0
      %v1552 = vsel %vm1235, %v1532, 0
      %v1555 = vsel %vm1235, %v1534, 0
      %v1558 = vsel %vm1235, %v1536, 0
      %v1561 = vsel %vm1235, %v1538, 0
      %1563 = vmatprep.subr.bf16.mxu0 0
      %1564 = vmatpush1.bf16.xpose.msra.mxu0 %v1552
      %1565 = vmatprep.subr.bf16.mxu0 0
      %1566 = vmatpush1.bf16.xpose.msra.mxu0 %v1555
      %1567 = vmatprep.subr.bf16.mxu0 0
      %1568 = vmatpush1.bf16.xpose.msra.mxu0 %v1558
      %1569 = vmatprep.subr.bf16.mxu0 0
      %1570 = vmatpush1.bf16.xpose.msra.mxu0 %v1561
      %1571 = vmatprep.subr.bf16.mxu0 0
      %1572 = vmatpush1.bf16.xpose.msra.mxu0 0
      %1573 = vmatprep.subr.bf16.mxu0 0
      %1574 = vmatpush1.bf16.xpose.msra.mxu0 0
      %1575 = vmatprep.subr.bf16.mxu0 0
      %1576 = vmatpush1.bf16.xpose.msra.mxu0 0
      %1577 = vmatprep.subr.bf16.mxu0 0
      %1578 = vmatpush1.bf16.xpose.msra.mxu0 0
      %1579 = vmatprep.subr.bf16.mxu0 0
      %1580 = vmatpush1.bf16.xpose.msra.mxu0 0
      %1581 = vmatprep.subr.bf16.mxu0 0
      %1582 = vmatpush1.bf16.xpose.msra.mxu0 0
      %1583 = vmatprep.subr.bf16.mxu0 0
      %1584 = vmatpush1.bf16.xpose.msra.mxu0 0
      %1585 = vmatprep.subr.bf16.mxu0 0
      %1586 = vmatpush1.bf16.xpose.msra.mxu0 0
      %1587 = vmatprep.subr.bf16.mxu0 0
      %1588 = vmatpush1.bf16.xpose.msra.mxu0 0
      %1589 = vmatprep.subr.bf16.mxu0 0
      %1590 = vmatpush1.bf16.xpose.msra.mxu0 0
      %1591 = vmatprep.subr.bf16.mxu0 0
      %1592 = vmatpush1.bf16.xpose.msra.mxu0 0
      %1593 = vmatprep.subr.bf16.mxu0 0
      %1594 = vmatpush1.bf16.xpose.msra.mxu0 0
      %1595 = vmatprep.mubr.bf16.mxu0 0
      %1596 = vmatmul.mubr.bf16.gmra.mrb[0].mxu0 %v1540
      %v1597 = vpop.f32.mrb[0].mxu0
      %v1598 = vadd.f32 0.0, %v1597
      %v1599 = vpop.f32.mrb[0].mxu0
      %v1600 = vpop.f32.mrb[0].mxu0
      %v1601 = vadd.f32 0.0, %v1600
      %v1602 = vpop.f32.mrb[0].mxu0
      %1603 = vmatprep.mubr.bf16.mxu0 0
      %1604 = vmatmul.mubr.bf16.gmra.mrb[0].mxu0 %v1543
      %v1605 = vpop.f32.mrb[0].mxu0
      %v1606 = vadd.f32 0.0, %v1605
      %v1607 = vpop.f32.mrb[0].mxu0
      %v1608 = vpop.f32.mrb[0].mxu0
      %v1609 = vadd.f32 0.0, %v1608
      %v1610 = vpop.f32.mrb[0].mxu0
      %1611 = vmatprep.mubr.bf16.mxu0 0
      %1612 = vmatmul.mubr.bf16.gmra.mrb[0].mxu0 %v1546
      %v1613 = vpop.f32.mrb[0].mxu0
      %v1614 = vadd.f32 0.0, %v1613
      %v1615 = vpop.f32.mrb[0].mxu0
      %v1616 = vpop.f32.mrb[0].mxu0
      %v1617 = vadd.f32 0.0, %v1616
      %v1618 = vpop.f32.mrb[0].mxu0
      %1619 = vmatprep.mubr.bf16.mxu0 0
      %1620 = vmatmul.mubr.bf16.gmra.mrb[0].mxu0 %v1549
      %v1621 = vpop.f32.mrb[0].mxu0
      %v1622 = vadd.f32 0.0, %v1621
      %v1623 = vpop.f32.mrb[0].mxu0
      %v1624 = vpop.f32.mrb[0].mxu0
      %v1625 = vadd.f32 0.0, %v1624
      %v1626 = vpop.f32.mrb[0].mxu0
      %1627 = vdwg.mxu0
      %vm1628 = vcmask 523264
      %v1629 = vsel %vm1628, %v1295, -inf
      %1630 = vmax.xlane.f32.xlu0 %v1629
      %v1631 = vpop.xlane.xlu0 %1630
      %v1632 = vsel %vm1628, %v1298, -inf
      %1633 = vmax.xlane.f32.xlu0 %v1632
      %v1634 = vpop.xlane.xlu0 %1633
      %v1635 = vsel %vm1628, %v1303, -inf
      %1636 = vmax.xlane.f32.xlu0 %v1635
      %v1637 = vpop.xlane.xlu0 %1636
      %v1638 = vsel %vm1628, %v1306, -inf
      %1639 = vmax.xlane.f32.xlu0 %v1638
      %v1640 = vpop.xlane.xlu0 %1639
      %v1641 = vsel %vm1628, %v1311, -inf
      %1642 = vmax.xlane.f32.xlu0 %v1641
      %v1643 = vpop.xlane.xlu0 %1642
      %v1644 = vsel %vm1628, %v1314, -inf
      %1645 = vmax.xlane.f32.xlu0 %v1644
      %v1646 = vpop.xlane.xlu0 %1645
      %v1647 = vsel %vm1628, %v1319, -inf
      %1648 = vmax.xlane.f32.xlu0 %v1647
      %v1649 = vpop.xlane.xlu0 %1648
      %v1650 = vsel %vm1628, %v1322, -inf
      %1651 = vmax.xlane.f32.xlu0 %v1650
      %v1652 = vpop.xlane.xlu0 %1651
      %v1653 = vsel %vm1628, %v1396, -inf
      %1654 = vmax.xlane.f32.xlu0 %v1653
      %v1655 = vpop.xlane.xlu0 %1654
      %v1656 = vsel %vm1628, %v1399, -inf
      %1657 = vmax.xlane.f32.xlu0 %v1656
      %v1658 = vpop.xlane.xlu0 %1657
      %v1659 = vsel %vm1628, %v1404, -inf
      %1660 = vmax.xlane.f32.xlu0 %v1659
      %v1661 = vpop.xlane.xlu0 %1660
      %v1662 = vsel %vm1628, %v1407, -inf
      %1663 = vmax.xlane.f32.xlu0 %v1662
      %v1664 = vpop.xlane.xlu0 %1663
      %v1665 = vsel %vm1628, %v1412, -inf
      %1666 = vmax.xlane.f32.xlu0 %v1665
      %v1667 = vpop.xlane.xlu0 %1666
      %v1668 = vsel %vm1628, %v1415, -inf
      %1669 = vmax.xlane.f32.xlu0 %v1668
      %v1670 = vpop.xlane.xlu0 %1669
      %v1671 = vsel %vm1628, %v1420, -inf
      %1672 = vmax.xlane.f32.xlu0 %v1671
      %v1673 = vpop.xlane.xlu0 %1672
      %v1674 = vsel %vm1628, %v1423, -inf
      %1675 = vmax.xlane.f32.xlu0 %v1674
      %v1676 = vpop.xlane.xlu0 %1675
      %v1677 = vsel %vm1628, %v1497, -inf
      %1678 = vmax.xlane.f32.xlu0 %v1677
      %v1679 = vpop.xlane.xlu0 %1678
      %v1680 = vsel %vm1628, %v1500, -inf
      %1681 = vmax.xlane.f32.xlu0 %v1680
      %v1682 = vpop.xlane.xlu0 %1681
      %v1683 = vsel %vm1628, %v1505, -inf
      %1684 = vmax.xlane.f32.xlu0 %v1683
      %v1685 = vpop.xlane.xlu0 %1684
      %v1686 = vsel %vm1628, %v1508, -inf
      %1687 = vmax.xlane.f32.xlu0 %v1686
      %v1688 = vpop.xlane.xlu0 %1687
      %v1689 = vsel %vm1628, %v1513, -inf
      %1690 = vmax.xlane.f32.xlu0 %v1689
      %v1691 = vpop.xlane.xlu0 %1690
      %v1692 = vsel %vm1628, %v1516, -inf
      %1693 = vmax.xlane.f32.xlu0 %v1692
      %v1694 = vpop.xlane.xlu0 %1693
      %v1695 = vsel %vm1628, %v1521, -inf
      %1696 = vmax.xlane.f32.xlu0 %v1695
      %v1697 = vpop.xlane.xlu0 %1696
      %v1698 = vsel %vm1628, %v1524, -inf
      %1699 = vmax.xlane.f32.xlu0 %v1698
      %v1700 = vpop.xlane.xlu0 %1699
      %v1701 = vsel %vm1628, %v1598, -inf
      %1702 = vmax.xlane.f32.xlu0 %v1701
      %v1703 = vpop.xlane.xlu0 %1702
      %v1704 = vsel %vm1628, %v1601, -inf
      %1705 = vmax.xlane.f32.xlu0 %v1704
      %v1706 = vpop.xlane.xlu0 %1705
      %v1707 = vsel %vm1628, %v1606, -inf
      %1708 = vmax.xlane.f32.xlu0 %v1707
      %v1709 = vpop.xlane.xlu0 %1708
      %v1710 = vsel %vm1628, %v1609, -inf
      %1711 = vmax.xlane.f32.xlu0 %v1710
      %v1712 = vpop.xlane.xlu0 %1711
      %v1713 = vsel %vm1628, %v1614, -inf
      %1714 = vmax.xlane.f32.xlu0 %v1713
      %v1715 = vpop.xlane.xlu0 %1714
      %v1716 = vsel %vm1628, %v1617, -inf
      %1717 = vmax.xlane.f32.xlu0 %v1716
      %v1718 = vpop.xlane.xlu0 %1717
      %v1719 = vsel %vm1628, %v1622, -inf
      %1720 = vmax.xlane.f32.xlu0 %v1719
      %v1721 = vpop.xlane.xlu0 %1720
      %v1722 = vsel %vm1628, %v1625, -inf
      %1723 = vmax.xlane.f32.xlu0 %v1722
      %v1724 = vpop.xlane.xlu0 %1723
      %v1725 = vsub.f32 %v1295, %v1631
      %v1726 = vsub.f32 %v1298, %v1634
      %v1727 = vsub.f32 %v1303, %v1637
      %v1728 = vsub.f32 %v1306, %v1640
      %v1729 = vsub.f32 %v1311, %v1643
      %v1730 = vsub.f32 %v1314, %v1646
      %v1731 = vsub.f32 %v1319, %v1649
      %v1732 = vsub.f32 %v1322, %v1652
      %v1733 = vsub.f32 %v1396, %v1655
      %v1734 = vsub.f32 %v1399, %v1658
      %v1735 = vsub.f32 %v1404, %v1661
      %v1736 = vsub.f32 %v1407, %v1664
      %v1737 = vsub.f32 %v1412, %v1667
      %v1738 = vsub.f32 %v1415, %v1670
      %v1739 = vsub.f32 %v1420, %v1673
      %v1740 = vsub.f32 %v1423, %v1676
      %v1741 = vsub.f32 %v1497, %v1679
      %v1742 = vsub.f32 %v1500, %v1682
      %v1743 = vsub.f32 %v1505, %v1685
      %v1744 = vsub.f32 %v1508, %v1688
      %v1745 = vsub.f32 %v1513, %v1691
      %v1746 = vsub.f32 %v1516, %v1694
      %v1747 = vsub.f32 %v1521, %v1697
      %v1748 = vsub.f32 %v1524, %v1700
      %v1749 = vsub.f32 %v1598, %v1703
      %v1750 = vsub.f32 %v1601, %v1706
      %v1751 = vsub.f32 %v1606, %v1709
      %v1752 = vsub.f32 %v1609, %v1712
      %v1753 = vsub.f32 %v1614, %v1715
      %v1754 = vsub.f32 %v1617, %v1718
      %v1755 = vsub.f32 %v1622, %v1721
      %v1756 = vsub.f32 %v1625, %v1724
      %v1757 = vmul.f32 %v1725, 1.442695
      %v1758 = vpow.pop %v1757
      %v1759 = vmul.f32 %v1726, 1.442695
      %v1760 = vpow.pop %v1759
      %v1761 = vmul.f32 %v1727, 1.442695
      %v1762 = vpow.pop %v1761
      %v1763 = vmul.f32 %v1728, 1.442695
      %v1764 = vpow.pop %v1763
      %v1765 = vmul.f32 %v1729, 1.442695
      %v1766 = vpow.pop %v1765
      %v1767 = vmul.f32 %v1730, 1.442695
      %v1768 = vpow.pop %v1767
      %v1769 = vmul.f32 %v1731, 1.442695
      %v1770 = vpow.pop %v1769
      %v1771 = vmul.f32 %v1732, 1.442695
      %v1772 = vpow.pop %v1771
      %v1773 = vmul.f32 %v1733, 1.442695
      %v1774 = vpow.pop %v1773
      %v1775 = vmul.f32 %v1734, 1.442695
      %v1776 = vpow.pop %v1775
      %v1777 = vmul.f32 %v1735, 1.442695
      %v1778 = vpow.pop %v1777
      %v1779 = vmul.f32 %v1736, 1.442695
      %v1780 = vpow.pop %v1779
      %v1781 = vmul.f32 %v1737, 1.442695
      %v1782 = vpow.pop %v1781
      %v1783 = vmul.f32 %v1738, 1.442695
      %v1784 = vpow.pop %v1783
      %v1785 = vmul.f32 %v1739, 1.442695
      %v1786 = vpow.pop %v1785
      %v1787 = vmul.f32 %v1740, 1.442695
      %v1788 = vpow.pop %v1787
      %v1789 = vmul.f32 %v1741, 1.442695
      %v1790 = vpow.pop %v1789
      %v1791 = vmul.f32 %v1742, 1.442695
      %v1792 = vpow.pop %v1791
      %v1793 = vmul.f32 %v1743, 1.442695
      %v1794 = vpow.pop %v1793
      %v1795 = vmul.f32 %v1744, 1.442695
      %v1796 = vpow.pop %v1795
      %v1797 = vmul.f32 %v1745, 1.442695
      %v1798 = vpow.pop %v1797
      %v1799 = vmul.f32 %v1746, 1.442695
      %v1800 = vpow.pop %v1799
      %v1801 = vmul.f32 %v1747, 1.442695
      %v1802 = vpow.pop %v1801
      %v1803 = vmul.f32 %v1748, 1.442695
      %v1804 = vpow.pop %v1803
      %v1805 = vmul.f32 %v1749, 1.442695
      %v1806 = vpow.pop %v1805
      %v1807 = vmul.f32 %v1750, 1.442695
      %v1808 = vpow.pop %v1807
      %v1809 = vmul.f32 %v1751, 1.442695
      %v1810 = vpow.pop %v1809
      %v1811 = vmul.f32 %v1752, 1.442695
      %v1812 = vpow.pop %v1811
      %v1813 = vmul.f32 %v1753, 1.442695
      %v1814 = vpow.pop %v1813
      %v1815 = vmul.f32 %v1754, 1.442695
      %v1816 = vpow.pop %v1815
      %v1817 = vmul.f32 %v1755, 1.442695
      %v1818 = vpow.pop %v1817
      %v1819 = vmul.f32 %v1756, 1.442695
      %v1820 = vpow.pop %v1819
      %v1821 = vsel %vm1628, %v1758, 0.0
      %1822 = vadd.xlane.f32.xlu0 %v1821
      %v1823 = vpop.xlane.xlu0 %1822
      %v1824 = vsel %vm1628, %v1760, 0.0
      %1825 = vadd.xlane.f32.xlu0 %v1824
      %v1826 = vpop.xlane.xlu0 %1825
      %v1827 = vsel %vm1628, %v1762, 0.0
      %1828 = vadd.xlane.f32.xlu0 %v1827
      %v1829 = vpop.xlane.xlu0 %1828
      %v1830 = vsel %vm1628, %v1764, 0.0
      %1831 = vadd.xlane.f32.xlu0 %v1830
      %v1832 = vpop.xlane.xlu0 %1831
      %v1833 = vsel %vm1628, %v1766, 0.0
      %1834 = vadd.xlane.f32.xlu0 %v1833
      %v1835 = vpop.xlane.xlu0 %1834
      %v1836 = vsel %vm1628, %v1768, 0.0
      %1837 = vadd.xlane.f32.xlu0 %v1836
      %v1838 = vpop.xlane.xlu0 %1837
      %v1839 = vsel %vm1628, %v1770, 0.0
      %1840 = vadd.xlane.f32.xlu0 %v1839
      %v1841 = vpop.xlane.xlu0 %1840
      %v1842 = vsel %vm1628, %v1772, 0.0
      %1843 = vadd.xlane.f32.xlu0 %v1842
      %v1844 = vpop.xlane.xlu0 %1843
      %v1845 = vsel %vm1628, %v1774, 0.0
      %1846 = vadd.xlane.f32.xlu0 %v1845
      %v1847 = vpop.xlane.xlu0 %1846
      %v1848 = vsel %vm1628, %v1776, 0.0
      %1849 = vadd.xlane.f32.xlu0 %v1848
      %v1850 = vpop.xlane.xlu0 %1849
      %v1851 = vsel %vm1628, %v1778, 0.0
      %1852 = vadd.xlane.f32.xlu0 %v1851
      %v1853 = vpop.xlane.xlu0 %1852
      %v1854 = vsel %vm1628, %v1780, 0.0
      %1855 = vadd.xlane.f32.xlu0 %v1854
      %v1856 = vpop.xlane.xlu0 %1855
      %v1857 = vsel %vm1628, %v1782, 0.0
      %1858 = vadd.xlane.f32.xlu0 %v1857
      %v1859 = vpop.xlane.xlu0 %1858
      %v1860 = vsel %vm1628, %v1784, 0.0
      %1861 = vadd.xlane.f32.xlu0 %v1860
      %v1862 = vpop.xlane.xlu0 %1861
      %v1863 = vsel %vm1628, %v1786, 0.0
      %1864 = vadd.xlane.f32.xlu0 %v1863
      %v1865 = vpop.xlane.xlu0 %1864
      %v1866 = vsel %vm1628, %v1788, 0.0
      %1867 = vadd.xlane.f32.xlu0 %v1866
      %v1868 = vpop.xlane.xlu0 %1867
      %v1869 = vsel %vm1628, %v1790, 0.0
      %1870 = vadd.xlane.f32.xlu0 %v1869
      %v1871 = vpop.xlane.xlu0 %1870
      %v1872 = vsel %vm1628, %v1792, 0.0
      %1873 = vadd.xlane.f32.xlu0 %v1872
      %v1874 = vpop.xlane.xlu0 %1873
      %v1875 = vsel %vm1628, %v1794, 0.0
      %1876 = vadd.xlane.f32.xlu0 %v1875
      %v1877 = vpop.xlane.xlu0 %1876
      %v1878 = vsel %vm1628, %v1796, 0.0
      %1879 = vadd.xlane.f32.xlu0 %v1878
      %v1880 = vpop.xlane.xlu0 %1879
      %v1881 = vsel %vm1628, %v1798, 0.0
      %1882 = vadd.xlane.f32.xlu0 %v1881
      %v1883 = vpop.xlane.xlu0 %1882
      %v1884 = vsel %vm1628, %v1800, 0.0
      %1885 = vadd.xlane.f32.xlu0 %v1884
      %v1886 = vpop.xlane.xlu0 %1885
      %v1887 = vsel %vm1628, %v1802, 0.0
      %1888 = vadd.xlane.f32.xlu0 %v1887
      %v1889 = vpop.xlane.xlu0 %1888
      %v1890 = vsel %vm1628, %v1804, 0.0
      %1891 = vadd.xlane.f32.xlu0 %v1890
      %v1892 = vpop.xlane.xlu0 %1891
      %v1893 = vsel %vm1628, %v1806, 0.0
      %1894 = vadd.xlane.f32.xlu0 %v1893
      %v1895 = vpop.xlane.xlu0 %1894
      %v1896 = vsel %vm1628, %v1808, 0.0
      %1897 = vadd.xlane.f32.xlu0 %v1896
      %v1898 = vpop.xlane.xlu0 %1897
      %v1899 = vsel %vm1628, %v1810, 0.0
      %1900 = vadd.xlane.f32.xlu0 %v1899
      %v1901 = vpop.xlane.xlu0 %1900
      %v1902 = vsel %vm1628, %v1812, 0.0
      %1903 = vadd.xlane.f32.xlu0 %v1902
      %v1904 = vpop.xlane.xlu0 %1903
      %v1905 = vsel %vm1628, %v1814, 0.0
      %1906 = vadd.xlane.f32.xlu0 %v1905
      %v1907 = vpop.xlane.xlu0 %1906
      %v1908 = vsel %vm1628, %v1816, 0.0
      %1909 = vadd.xlane.f32.xlu0 %v1908
      %v1910 = vpop.xlane.xlu0 %1909
      %v1911 = vsel %vm1628, %v1818, 0.0
      %1912 = vadd.xlane.f32.xlu0 %v1911
      %v1913 = vpop.xlane.xlu0 %1912
      %v1914 = vsel %vm1628, %v1820, 0.0
      %1915 = vadd.xlane.f32.xlu0 %v1914
      %v1916 = vpop.xlane.xlu0 %1915
      %v1917 = vrcp.pop %v1823
      %v1918 = vmul.f32 %v1758, %v1917
      %v1919 = vrcp.pop %v1826
      %v1920 = vmul.f32 %v1760, %v1919
      %v1921 = vrcp.pop %v1829
      %v1922 = vmul.f32 %v1762, %v1921
      %v1923 = vrcp.pop %v1832
      %v1924 = vmul.f32 %v1764, %v1923
      %v1925 = vrcp.pop %v1835
      %v1926 = vmul.f32 %v1766, %v1925
      %v1927 = vrcp.pop %v1838
      %v1928 = vmul.f32 %v1768, %v1927
      %v1929 = vrcp.pop %v1841
      %v1930 = vmul.f32 %v1770, %v1929
      %v1931 = vrcp.pop %v1844
      %v1932 = vmul.f32 %v1772, %v1931
      %v1933 = vrcp.pop %v1847
      %v1934 = vmul.f32 %v1774, %v1933
      %v1935 = vrcp.pop %v1850
      %v1936 = vmul.f32 %v1776, %v1935
      %v1937 = vrcp.pop %v1853
      %v1938 = vmul.f32 %v1778, %v1937
      %v1939 = vrcp.pop %v1856
      %v1940 = vmul.f32 %v1780, %v1939
      %v1941 = vrcp.pop %v1859
      %v1942 = vmul.f32 %v1782, %v1941
      %v1943 = vrcp.pop %v1862
      %v1944 = vmul.f32 %v1784, %v1943
      %v1945 = vrcp.pop %v1865
      %v1946 = vmul.f32 %v1786, %v1945
      %v1947 = vrcp.pop %v1868
      %v1948 = vmul.f32 %v1788, %v1947
      %v1949 = vrcp.pop %v1871
      %v1950 = vmul.f32 %v1790, %v1949
      %v1951 = vrcp.pop %v1874
      %v1952 = vmul.f32 %v1792, %v1951
      %v1953 = vrcp.pop %v1877
      %v1954 = vmul.f32 %v1794, %v1953
      %v1955 = vrcp.pop %v1880
      %v1956 = vmul.f32 %v1796, %v1955
      %v1957 = vrcp.pop %v1883
      %v1958 = vmul.f32 %v1798, %v1957
      %v1959 = vrcp.pop %v1886
      %v1960 = vmul.f32 %v1800, %v1959
      %v1961 = vrcp.pop %v1889
      %v1962 = vmul.f32 %v1802, %v1961
      %v1963 = vrcp.pop %v1892
      %v1964 = vmul.f32 %v1804, %v1963
      %v1965 = vrcp.pop %v1895
      %v1966 = vmul.f32 %v1806, %v1965
      %v1967 = vrcp.pop %v1898
      %v1968 = vmul.f32 %v1808, %v1967
      %v1969 = vrcp.pop %v1901
      %v1970 = vmul.f32 %v1810, %v1969
      %v1971 = vrcp.pop %v1904
      %v1972 = vmul.f32 %v1812, %v1971
      %v1973 = vrcp.pop %v1907
      %v1974 = vmul.f32 %v1814, %v1973
      %v1975 = vrcp.pop %v1910
      %v1976 = vmul.f32 %v1816, %v1975
      %v1977 = vrcp.pop %v1913
      %v1978 = vmul.f32 %v1818, %v1977
      %v1979 = vrcp.pop %v1916
      %v1980 = vmul.f32 %v1820, %v1979
      %v1981 = vpack.c.bf16 %v1920, %v1918
      %v1982 = vpack.c.bf16 %v1924, %v1922
      %v1983 = vpack.c.bf16 %v1928, %v1926
      %v1984 = vpack.c.bf16 %v1932, %v1930
      %v1985 = vpack.c.bf16 %v1936, %v1934
      %v1986 = vpack.c.bf16 %v1940, %v1938
      %v1987 = vpack.c.bf16 %v1944, %v1942
      %v1988 = vpack.c.bf16 %v1948, %v1946
      %v1989 = vpack.c.bf16 %v1952, %v1950
      %v1990 = vpack.c.bf16 %v1956, %v1954
      %v1991 = vpack.c.bf16 %v1960, %v1958
      %v1992 = vpack.c.bf16 %v1964, %v1962
      %v1993 = vpack.c.bf16 %v1968, %v1966
      %v1994 = vpack.c.bf16 %v1972, %v1970
      %v1995 = vpack.c.bf16 %v1976, %v1974
      %v1996 = vpack.c.bf16 %v1980, %v1978
      %1997 = vrot.lane.b32.xlu0 %v1207, 64
      %v1998 = vpop.permute.xlu0 %1997
      %1999 = vrot.lane.b32.xlu0 %v1208, 64
      %v2000 = vpop.permute.xlu0 %1999
      %2001 = vrot.lane.b32.xlu0 %v1209, 64
      %v2002 = vpop.permute.xlu0 %2001
      %2003 = vrot.lane.b32.xlu0 %v1210, 64
      %v2004 = vpop.permute.xlu0 %2003
      %v2010 = vsel %vm1628, %v1981, 0
      %v2013 = vsel %vm1628, %v1982, 0
      %v2016 = vsel %vm1628, %v1983, 0
      %v2019 = vsel %vm1628, %v1984, 0
      %2021 = vmatprep.subr.bf16.mxu0 0
      %2022 = vmatpush1.bf16.msra.mxu0 %v1998
      %2023 = vmatprep.subr.bf16.mxu0 0
      %2024 = vmatpush1.bf16.msra.mxu0 %v2000
      %2025 = vmatprep.subr.bf16.mxu0 0
      %2026 = vmatpush1.bf16.msra.mxu0 %v2002
      %2027 = vmatprep.subr.bf16.mxu0 0
      %2028 = vmatpush1.bf16.msra.mxu0 %v2004
      %2029 = vmatprep.subr.bf16.mxu0 0
      %2030 = vmatpush1.bf16.msra.mxu0 0
      %2031 = vmatprep.subr.bf16.mxu0 0
      %2032 = vmatpush1.bf16.msra.mxu0 0
      %2033 = vmatprep.subr.bf16.mxu0 0
      %2034 = vmatpush1.bf16.msra.mxu0 0
      %2035 = vmatprep.subr.bf16.mxu0 0
      %2036 = vmatpush1.bf16.msra.mxu0 0
      %2037 = vmatprep.subr.bf16.mxu0 0
      %2038 = vmatpush1.bf16.msra.mxu0 0
      %2039 = vmatprep.subr.bf16.mxu0 0
      %2040 = vmatpush1.bf16.msra.mxu0 0
      %2041 = vmatprep.subr.bf16.mxu0 0
      %2042 = vmatpush1.bf16.msra.mxu0 0
      %2043 = vmatprep.subr.bf16.mxu0 0
      %2044 = vmatpush1.bf16.msra.mxu0 0
      %2045 = vmatprep.subr.bf16.mxu0 0
      %2046 = vmatpush1.bf16.msra.mxu0 0
      %2047 = vmatprep.subr.bf16.mxu0 0
      %2048 = vmatpush1.bf16.msra.mxu0 0
      %2049 = vmatprep.subr.bf16.mxu0 0
      %2050 = vmatpush1.bf16.msra.mxu0 0
      %2051 = vmatprep.subr.bf16.mxu0 0
      %2052 = vmatpush1.bf16.msra.mxu0 0
      %2053 = vmatprep.mubr.bf16.mxu0 0
      %2054 = vmatmul.mubr.bf16.gmra.mrb[0].mxu0 %v2010
      %v2055 = vpop.f32.mrb[0].mxu0
      %v2056 = vadd.f32 0.0, %v2055
      %v2057 = vpop.f32.mrb[0].mxu0
      %v2058 = vpop.f32.mrb[0].mxu0
      %v2059 = vadd.f32 0.0, %v2058
      %v2060 = vpop.f32.mrb[0].mxu0
      %2061 = vmatprep.mubr.bf16.mxu0 0
      %2062 = vmatmul.mubr.bf16.gmra.mrb[0].mxu0 %v2013
      %v2063 = vpop.f32.mrb[0].mxu0
      %v2064 = vadd.f32 0.0, %v2063
      %v2065 = vpop.f32.mrb[0].mxu0
      %v2066 = vpop.f32.mrb[0].mxu0
      %v2067 = vadd.f32 0.0, %v2066
      %v2068 = vpop.f32.mrb[0].mxu0
      %2069 = vmatprep.mubr.bf16.mxu0 0
      %2070 = vmatmul.mubr.bf16.gmra.mrb[0].mxu0 %v2016
      %v2071 = vpop.f32.mrb[0].mxu0
      %v2072 = vadd.f32 0.0, %v2071
      %v2073 = vpop.f32.mrb[0].mxu0
      %v2074 = vpop.f32.mrb[0].mxu0
      %v2075 = vadd.f32 0.0, %v2074
      %v2076 = vpop.f32.mrb[0].mxu0
      %2077 = vmatprep.mubr.bf16.mxu0 0
      %2078 = vmatmul.mubr.bf16.gmra.mrb[0].mxu0 %v2019
      %v2079 = vpop.f32.mrb[0].mxu0
      %v2080 = vadd.f32 0.0, %v2079
      %v2081 = vpop.f32.mrb[0].mxu0
      %v2082 = vpop.f32.mrb[0].mxu0
      %v2083 = vadd.f32 0.0, %v2082
      %v2084 = vpop.f32.mrb[0].mxu0
      %2085 = vdwg.mxu0
      %2086 = vrot.lane.b32.xlu0 %v1211, 64
      %v2087 = vpop.permute.xlu0 %2086
      %2088 = vrot.lane.b32.xlu0 %v1212, 64
      %v2089 = vpop.permute.xlu0 %2088
      %2090 = vrot.lane.b32.xlu0 %v1213, 64
      %v2091 = vpop.permute.xlu0 %2090
      %2092 = vrot.lane.b32.xlu0 %v1214, 64
      %v2093 = vpop.permute.xlu0 %2092
      %v2099 = vsel %vm1628, %v1985, 0
      %v2102 = vsel %vm1628, %v1986, 0
      %v2105 = vsel %vm1628, %v1987, 0
      %v2108 = vsel %vm1628, %v1988, 0
      %2110 = vmatprep.subr.bf16.mxu0 0
      %2111 = vmatpush1.bf16.msra.mxu0 %v2087
      %2112 = vmatprep.subr.bf16.mxu0 0
      %2113 = vmatpush1.bf16.msra.mxu0 %v2089
      %2114 = vmatprep.subr.bf16.mxu0 0
      %2115 = vmatpush1.bf16.msra.mxu0 %v2091
      %2116 = vmatprep.subr.bf16.mxu0 0
      %2117 = vmatpush1.bf16.msra.mxu0 %v2093
      %2118 = vmatprep.subr.bf16.mxu0 0
      %2119 = vmatpush1.bf16.msra.mxu0 0
      %2120 = vmatprep.subr.bf16.mxu0 0
      %2121 = vmatpush1.bf16.msra.mxu0 0
      %2122 = vmatprep.subr.bf16.mxu0 0
      %2123 = vmatpush1.bf16.msra.mxu0 0
      %2124 = vmatprep.subr.bf16.mxu0 0
      %2125 = vmatpush1.bf16.msra.mxu0 0
      %2126 = vmatprep.subr.bf16.mxu0 0
      %2127 = vmatpush1.bf16.msra.mxu0 0
      %2128 = vmatprep.subr.bf16.mxu0 0
      %2129 = vmatpush1.bf16.msra.mxu0 0
      %2130 = vmatprep.subr.bf16.mxu0 0
      %2131 = vmatpush1.bf16.msra.mxu0 0
      %2132 = vmatprep.subr.bf16.mxu0 0
      %2133 = vmatpush1.bf16.msra.mxu0 0
      %2134 = vmatprep.subr.bf16.mxu0 0
      %2135 = vmatpush1.bf16.msra.mxu0 0
      %2136 = vmatprep.subr.bf16.mxu0 0
      %2137 = vmatpush1.bf16.msra.mxu0 0
      %2138 = vmatprep.subr.bf16.mxu0 0
      %2139 = vmatpush1.bf16.msra.mxu0 0
      %2140 = vmatprep.subr.bf16.mxu0 0
      %2141 = vmatpush1.bf16.msra.mxu0 0
      %2142 = vmatprep.mubr.bf16.mxu0 0
      %2143 = vmatmul.mubr.bf16.gmra.mrb[0].mxu0 %v2099
      %v2144 = vpop.f32.mrb[0].mxu0
      %v2145 = vadd.f32 0.0, %v2144
      %v2146 = vpop.f32.mrb[0].mxu0
      %v2147 = vpop.f32.mrb[0].mxu0
      %v2148 = vadd.f32 0.0, %v2147
      %v2149 = vpop.f32.mrb[0].mxu0
      %2150 = vmatprep.mubr.bf16.mxu0 0
      %2151 = vmatmul.mubr.bf16.gmra.mrb[0].mxu0 %v2102
      %v2152 = vpop.f32.mrb[0].mxu0
      %v2153 = vadd.f32 0.0, %v2152
      %v2154 = vpop.f32.mrb[0].mxu0
      %v2155 = vpop.f32.mrb[0].mxu0
      %v2156 = vadd.f32 0.0, %v2155
      %v2157 = vpop.f32.mrb[0].mxu0
      %2158 = vmatprep.mubr.bf16.mxu0 0
      %2159 = vmatmul.mubr.bf16.gmra.mrb[0].mxu0 %v2105
      %v2160 = vpop.f32.mrb[0].mxu0
      %v2161 = vadd.f32 0.0, %v2160
      %v2162 = vpop.f32.mrb[0].mxu0
      %v2163 = vpop.f32.mrb[0].mxu0
      %v2164 = vadd.f32 0.0, %v2163
      %v2165 = vpop.f32.mrb[0].mxu0
      %2166 = vmatprep.mubr.bf16.mxu0 0
      %2167 = vmatmul.mubr.bf16.gmra.mrb[0].mxu0 %v2108
      %v2168 = vpop.f32.mrb[0].mxu0
      %v2169 = vadd.f32 0.0, %v2168
      %v2170 = vpop.f32.mrb[0].mxu0
      %v2171 = vpop.f32.mrb[0].mxu0
      %v2172 = vadd.f32 0.0, %v2171
      %v2173 = vpop.f32.mrb[0].mxu0
      %2174 = vdwg.mxu0
      %2175 = vrot.lane.b32.xlu0 %v1215, 64
      %v2176 = vpop.permute.xlu0 %2175
      %2177 = vrot.lane.b32.xlu0 %v1216, 64
      %v2178 = vpop.permute.xlu0 %2177
      %2179 = vrot.lane.b32.xlu0 %v1217, 64
      %v2180 = vpop.permute.xlu0 %2179
      %2181 = vrot.lane.b32.xlu0 %v1218, 64
      %v2182 = vpop.permute.xlu0 %2181
      %v2188 = vsel %vm1628, %v1989, 0
      %v2191 = vsel %vm1628, %v1990, 0
      %v2194 = vsel %vm1628, %v1991, 0
      %v2197 = vsel %vm1628, %v1992, 0
      %2199 = vmatprep.subr.bf16.mxu0 0
      %2200 = vmatpush1.bf16.msra.mxu0 %v2176
      %2201 = vmatprep.subr.bf16.mxu0 0
      %2202 = vmatpush1.bf16.msra.mxu0 %v2178
      %2203 = vmatprep.subr.bf16.mxu0 0
      %2204 = vmatpush1.bf16.msra.mxu0 %v2180
      %2205 = vmatprep.subr.bf16.mxu0 0
      %2206 = vmatpush1.bf16.msra.mxu0 %v2182
      %2207 = vmatprep.subr.bf16.mxu0 0
      %2208 = vmatpush1.bf16.msra.mxu0 0
      %2209 = vmatprep.subr.bf16.mxu0 0
      %2210 = vmatpush1.bf16.msra.mxu0 0
      %2211 = vmatprep.subr.bf16.mxu0 0
      %2212 = vmatpush1.bf16.msra.mxu0 0
      %2213 = vmatprep.subr.bf16.mxu0 0
      %2214 = vmatpush1.bf16.msra.mxu0 0
      %2215 = vmatprep.subr.bf16.mxu0 0
      %2216 = vmatpush1.bf16.msra.mxu0 0
      %2217 = vmatprep.subr.bf16.mxu0 0
      %2218 = vmatpush1.bf16.msra.mxu0 0
      %2219 = vmatprep.subr.bf16.mxu0 0
      %2220 = vmatpush1.bf16.msra.mxu0 0
      %2221 = vmatprep.subr.bf16.mxu0 0
      %2222 = vmatpush1.bf16.msra.mxu0 0
      %2223 = vmatprep.subr.bf16.mxu0 0
      %2224 = vmatpush1.bf16.msra.mxu0 0
      %2225 = vmatprep.subr.bf16.mxu0 0
      %2226 = vmatpush1.bf16.msra.mxu0 0
      %2227 = vmatprep.subr.bf16.mxu0 0
      %2228 = vmatpush1.bf16.msra.mxu0 0
      %2229 = vmatprep.subr.bf16.mxu0 0
      %2230 = vmatpush1.bf16.msra.mxu0 0
      %2231 = vmatprep.mubr.bf16.mxu0 0
      %2232 = vmatmul.mubr.bf16.gmra.mrb[0].mxu0 %v2188
      %v2233 = vpop.f32.mrb[0].mxu0
      %v2234 = vadd.f32 0.0, %v2233
      %v2235 = vpop.f32.mrb[0].mxu0
      %v2236 = vpop.f32.mrb[0].mxu0
      %v2237 = vadd.f32 0.0, %v2236
      %v2238 = vpop.f32.mrb[0].mxu0
      %2239 = vmatprep.mubr.bf16.mxu0 0
      %2240 = vmatmul.mubr.bf16.gmra.mrb[0].mxu0 %v2191
      %v2241 = vpop.f32.mrb[0].mxu0
      %v2242 = vadd.f32 0.0, %v2241
      %v2243 = vpop.f32.mrb[0].mxu0
      %v2244 = vpop.f32.mrb[0].mxu0
      %v2245 = vadd.f32 0.0, %v2244
      %v2246 = vpop.f32.mrb[0].mxu0
      %2247 = vmatprep.mubr.bf16.mxu0 0
      %2248 = vmatmul.mubr.bf16.gmra.mrb[0].mxu0 %v2194
      %v2249 = vpop.f32.mrb[0].mxu0
      %v2250 = vadd.f32 0.0, %v2249
      %v2251 = vpop.f32.mrb[0].mxu0
      %v2252 = vpop.f32.mrb[0].mxu0
      %v2253 = vadd.f32 0.0, %v2252
      %v2254 = vpop.f32.mrb[0].mxu0
      %2255 = vmatprep.mubr.bf16.mxu0 0
      %2256 = vmatmul.mubr.bf16.gmra.mrb[0].mxu0 %v2197
      %v2257 = vpop.f32.mrb[0].mxu0
      %v2258 = vadd.f32 0.0, %v2257
      %v2259 = vpop.f32.mrb[0].mxu0
      %v2260 = vpop.f32.mrb[0].mxu0
      %v2261 = vadd.f32 0.0, %v2260
      %v2262 = vpop.f32.mrb[0].mxu0
      %2263 = vdwg.mxu0
      %2264 = vrot.lane.b32.xlu0 %v1219, 64
      %v2265 = vpop.permute.xlu0 %2264
      %2266 = vrot.lane.b32.xlu0 %v1220, 64
      %v2267 = vpop.permute.xlu0 %2266
      %2268 = vrot.lane.b32.xlu0 %v1221, 64
      %v2269 = vpop.permute.xlu0 %2268
      %2270 = vrot.lane.b32.xlu0 %v1222, 64
      %v2271 = vpop.permute.xlu0 %2270
      %v2277 = vsel %vm1628, %v1993, 0
      %v2280 = vsel %vm1628, %v1994, 0
      %v2283 = vsel %vm1628, %v1995, 0
      %v2286 = vsel %vm1628, %v1996, 0
      %2288 = vmatprep.subr.bf16.mxu0 0
      %2289 = vmatpush1.bf16.msra.mxu0 %v2265
      %2290 = vmatprep.subr.bf16.mxu0 0
      %2291 = vmatpush1.bf16.msra.mxu0 %v2267
      %2292 = vmatprep.subr.bf16.mxu0 0
      %2293 = vmatpush1.bf16.msra.mxu0 %v2269
      %2294 = vmatprep.subr.bf16.mxu0 0
      %2295 = vmatpush1.bf16.msra.mxu0 %v2271
      %2296 = vmatprep.subr.bf16.mxu0 0
      %2297 = vmatpush1.bf16.msra.mxu0 0
      %2298 = vmatprep.subr.bf16.mxu0 0
      %2299 = vmatpush1.bf16.msra.mxu0 0
      %2300 = vmatprep.subr.bf16.mxu0 0
      %2301 = vmatpush1.bf16.msra.mxu0 0
      %2302 = vmatprep.subr.bf16.mxu0 0
      %2303 = vmatpush1.bf16.msra.mxu0 0
      %2304 = vmatprep.subr.bf16.mxu0 0
      %2305 = vmatpush1.bf16.msra.mxu0 0
      %2306 = vmatprep.subr.bf16.mxu0 0
      %2307 = vmatpush1.bf16.msra.mxu0 0
      %2308 = vmatprep.subr.bf16.mxu0 0
      %2309 = vmatpush1.bf16.msra.mxu0 0
      %2310 = vmatprep.subr.bf16.mxu0 0
      %2311 = vmatpush1.bf16.msra.mxu0 0
      %2312 = vmatprep.subr.bf16.mxu0 0
      %2313 = vmatpush1.bf16.msra.mxu0 0
      %2314 = vmatprep.subr.bf16.mxu0 0
      %2315 = vmatpush1.bf16.msra.mxu0 0
      %2316 = vmatprep.subr.bf16.mxu0 0
      %2317 = vmatpush1.bf16.msra.mxu0 0
      %2318 = vmatprep.subr.bf16.mxu0 0
      %2319 = vmatpush1.bf16.msra.mxu0 0
      %2320 = vmatprep.mubr.bf16.mxu0 0
      %2321 = vmatmul.mubr.bf16.gmra.mrb[0].mxu0 %v2277
      %v2322 = vpop.f32.mrb[0].mxu0
      %v2323 = vadd.f32 0.0, %v2322
      %v2324 = vpop.f32.mrb[0].mxu0
      %v2325 = vpop.f32.mrb[0].mxu0
      %v2326 = vadd.f32 0.0, %v2325
      %v2327 = vpop.f32.mrb[0].mxu0
      %2328 = vmatprep.mubr.bf16.mxu0 0
      %2329 = vmatmul.mubr.bf16.gmra.mrb[0].mxu0 %v2280
      %v2330 = vpop.f32.mrb[0].mxu0
      %v2331 = vadd.f32 0.0, %v2330
      %v2332 = vpop.f32.mrb[0].mxu0
      %v2333 = vpop.f32.mrb[0].mxu0
      %v2334 = vadd.f32 0.0, %v2333
      %v2335 = vpop.f32.mrb[0].mxu0
      %2336 = vmatprep.mubr.bf16.mxu0 0
      %2337 = vmatmul.mubr.bf16.gmra.mrb[0].mxu0 %v2283
      %v2338 = vpop.f32.mrb[0].mxu0
      %v2339 = vadd.f32 0.0, %v2338
      %v2340 = vpop.f32.mrb[0].mxu0
      %v2341 = vpop.f32.mrb[0].mxu0
      %v2342 = vadd.f32 0.0, %v2341
      %v2343 = vpop.f32.mrb[0].mxu0
      %2344 = vmatprep.mubr.bf16.mxu0 0
      %2345 = vmatmul.mubr.bf16.gmra.mrb[0].mxu0 %v2286
      %v2346 = vpop.f32.mrb[0].mxu0
      %v2347 = vadd.f32 0.0, %v2346
      %v2348 = vpop.f32.mrb[0].mxu0
      %v2349 = vpop.f32.mrb[0].mxu0
      %v2350 = vadd.f32 0.0, %v2349
      %v2351 = vpop.f32.mrb[0].mxu0
      %2352 = vdwg.mxu0
      %2361 = vrot.lane.b32.xlu0 %v2145, 8
      %v2362 = vpop.permute.xlu0 %2361
      %2363 = vrot.lane.b32.xlu0 %v2148, 8
      %v2364 = vpop.permute.xlu0 %2363
      %2365 = vrot.lane.b32.xlu0 %v2153, 8
      %v2366 = vpop.permute.xlu0 %2365
      %2367 = vrot.lane.b32.xlu0 %v2156, 8
      %v2368 = vpop.permute.xlu0 %2367
      %2369 = vrot.lane.b32.xlu0 %v2161, 8
      %v2370 = vpop.permute.xlu0 %2369
      %2371 = vrot.lane.b32.xlu0 %v2164, 8
      %v2372 = vpop.permute.xlu0 %2371
      %2373 = vrot.lane.b32.xlu0 %v2169, 8
      %v2374 = vpop.permute.xlu0 %2373
      %2375 = vrot.lane.b32.xlu0 %v2172, 8
      %v2376 = vpop.permute.xlu0 %2375
      %2393 = vrot.lane.b32.xlu0 %v2234, 16
      %v2394 = vpop.permute.xlu0 %2393
      %2395 = vrot.lane.b32.xlu0 %v2237, 16
      %v2396 = vpop.permute.xlu0 %2395
      %2397 = vrot.lane.b32.xlu0 %v2242, 16
      %v2398 = vpop.permute.xlu0 %2397
      %2399 = vrot.lane.b32.xlu0 %v2245, 16
      %v2400 = vpop.permute.xlu0 %2399
      %2401 = vrot.lane.b32.xlu0 %v2250, 16
      %v2402 = vpop.permute.xlu0 %2401
      %2403 = vrot.lane.b32.xlu0 %v2253, 16
      %v2404 = vpop.permute.xlu0 %2403
      %2405 = vrot.lane.b32.xlu0 %v2258, 16
      %v2406 = vpop.permute.xlu0 %2405
      %2407 = vrot.lane.b32.xlu0 %v2261, 16
      %v2408 = vpop.permute.xlu0 %2407
      %2425 = vrot.lane.b32.xlu0 %v2323, 24
      %v2426 = vpop.permute.xlu0 %2425
      %2427 = vrot.lane.b32.xlu0 %v2326, 24
      %v2428 = vpop.permute.xlu0 %2427
      %2429 = vrot.lane.b32.xlu0 %v2331, 24
      %v2430 = vpop.permute.xlu0 %2429
      %2431 = vrot.lane.b32.xlu0 %v2334, 24
      %v2432 = vpop.permute.xlu0 %2431
      %2433 = vrot.lane.b32.xlu0 %v2339, 24
      %v2434 = vpop.permute.xlu0 %2433
      %2435 = vrot.lane.b32.xlu0 %v2342, 24
      %v2436 = vpop.permute.xlu0 %2435
      %2437 = vrot.lane.b32.xlu0 %v2347, 24
      %v2438 = vpop.permute.xlu0 %2437
      %2439 = vrot.lane.b32.xlu0 %v2350, 24
      %v2440 = vpop.permute.xlu0 %2439
      %v2449 = vsel %vm1235, %v2056, %v2362
      %v2450 = vsel %vm1235, %v2059, %v2364
      %v2451 = vsel %vm1235, %v2064, %v2366
      %v2452 = vsel %vm1235, %v2067, %v2368
      %v2453 = vsel %vm1235, %v2072, %v2370
      %v2454 = vsel %vm1235, %v2075, %v2372
      %v2455 = vsel %vm1235, %v2080, %v2374
      %v2456 = vsel %vm1235, %v2083, %v2376
      %vm2457 = vcmask 130048
      %v2458 = vsel %vm2457, %v2449, %v2394
      %v2459 = vsel %vm2457, %v2450, %v2396
      %v2460 = vsel %vm2457, %v2451, %v2398
      %v2461 = vsel %vm2457, %v2452, %v2400
      %v2462 = vsel %vm2457, %v2453, %v2402
      %v2463 = vsel %vm2457, %v2454, %v2404
      %v2464 = vsel %vm2457, %v2455, %v2406
      %v2465 = vsel %vm2457, %v2456, %v2408
      %vm2466 = vcmask 195584
      %v2467 = vsel %vm2466, %v2458, %v2426
      %v2468 = vsel %vm2466, %v2459, %v2428
      %v2469 = vsel %vm2466, %v2460, %v2430
      %v2470 = vsel %vm2466, %v2461, %v2432
      %v2471 = vsel %vm2466, %v2462, %v2434
      %v2472 = vsel %vm2466, %v2463, %v2436
      %v2473 = vsel %vm2466, %v2464, %v2438
      %v2474 = vsel %vm2466, %v2465, %v2440
      %v2475 = vpack.c.bf16 %v2468, %v2467
      %v2476 = vpack.c.bf16 %v2470, %v2469
      %v2477 = vpack.c.bf16 %v2472, %v2471
      %v2478 = vpack.c.bf16 %v2474, %v2473
      %v2479 = vld [vmem:[%s7] sm:$0xf]
      %v2480 = vld [vmem:[%s7 + $0x4] sm:$0xf]
      %v2481 = vld [vmem:[%s7 + $0x8] sm:$0xf]
      %v2482 = vld [vmem:[%s7 + $0xc] sm:$0xf]
      %v2487 = vunpack.c.l.b16 %v2479
      %v2488 = vunpack.c.l.b16 %v2480
      %v2489 = vunpack.c.l.b16 %v2481
      %v2490 = vunpack.c.l.b16 %v2482
      %v2491 = vpack.c.b16 %v2488, %v2487
      %v2492 = vpack.c.b16 %v2490, %v2489
      %v2496 = vsel %vm785, %v2475, 0
      %v2499 = vsel %vm785, %v2476, 0
      %v2502 = vsel %vm785, %v2477, 0
      %v2505 = vsel %vm785, %v2478, 0
      %2507 = vmatprep.subr.bf16.mxu0 0
      %2508 = vmatpush1.bf16.msra.mxu0 %v2491
      %2509 = vmatprep.subr.bf16.mxu0 0
      %2510 = vmatpush1.bf16.msra.mxu0 %v2492
      %2511 = vmatprep.subr.bf16.mxu0 0
      %2512 = vmatpush1.bf16.msra.mxu0 0
      %2513 = vmatprep.subr.bf16.mxu0 0
      %2514 = vmatpush1.bf16.msra.mxu0 0
      %2515 = vmatprep.subr.bf16.mxu0 0
      %2516 = vmatpush1.bf16.msra.mxu0 0
      %2517 = vmatprep.subr.bf16.mxu0 0
      %2518 = vmatpush1.bf16.msra.mxu0 0
      %2519 = vmatprep.subr.bf16.mxu0 0
      %2520 = vmatpush1.bf16.msra.mxu0 0
      %2521 = vmatprep.subr.bf16.mxu0 0
      %2522 = vmatpush1.bf16.msra.mxu0 0
      %2523 = vmatprep.subr.bf16.mxu0 0
      %2524 = vmatpush1.bf16.msra.mxu0 0
      %2525 = vmatprep.subr.bf16.mxu0 0
      %2526 = vmatpush1.bf16.msra.mxu0 0
      %2527 = vmatprep.subr.bf16.mxu0 0
      %2528 = vmatpush1.bf16.msra.mxu0 0
      %2529 = vmatprep.subr.bf16.mxu0 0
      %2530 = vmatpush1.bf16.msra.mxu0 0
      %2531 = vmatprep.subr.bf16.mxu0 0
      %2532 = vmatpush1.bf16.msra.mxu0 0
      %2533 = vmatprep.subr.bf16.mxu0 0
      %2534 = vmatpush1.bf16.msra.mxu0 0
      %2535 = vmatprep.subr.bf16.mxu0 0
      %2536 = vmatpush1.bf16.msra.mxu0 0
      %2537 = vmatprep.subr.bf16.mxu0 0
      %2538 = vmatpush1.bf16.msra.mxu0 0
      %2539 = vmatprep.mubr.bf16.mxu0 0
      %2540 = vmatmul.mubr.bf16.gmra.mrb[0].mxu0 %v2496
      %v2541 = vpop.f32.mrb[0].mxu0
      %v2542 = vadd.f32 0.0, %v2541
      %v2543 = vpop.f32.mrb[0].mxu0
      %v2544 = vpop.f32.mrb[0].mxu0
      %v2545 = vadd.f32 0.0, %v2544
      %v2546 = vpop.f32.mrb[0].mxu0
      %2547 = vmatprep.mubr.bf16.mxu0 0
      %2548 = vmatmul.mubr.bf16.gmra.mrb[0].mxu0 %v2499
      %v2549 = vpop.f32.mrb[0].mxu0
      %v2550 = vadd.f32 0.0, %v2549
      %v2551 = vpop.f32.mrb[0].mxu0
      %v2552 = vpop.f32.mrb[0].mxu0
      %v2553 = vadd.f32 0.0, %v2552
      %v2554 = vpop.f32.mrb[0].mxu0
      %2555 = vmatprep.mubr.bf16.mxu0 0
      %2556 = vmatmul.mubr.bf16.gmra.mrb[0].mxu0 %v2502
      %v2557 = vpop.f32.mrb[0].mxu0
      %v2558 = vadd.f32 0.0, %v2557
      %v2559 = vpop.f32.mrb[0].mxu0
      %v2560 = vpop.f32.mrb[0].mxu0
      %v2561 = vadd.f32 0.0, %v2560
      %v2562 = vpop.f32.mrb[0].mxu0
      %2563 = vmatprep.mubr.bf16.mxu0 0
      %2564 = vmatmul.mubr.bf16.gmra.mrb[0].mxu0 %v2505
      %v2565 = vpop.f32.mrb[0].mxu0
      %v2566 = vadd.f32 0.0, %v2565
      %v2567 = vpop.f32.mrb[0].mxu0
      %v2568 = vpop.f32.mrb[0].mxu0
      %v2569 = vadd.f32 0.0, %v2568
      %v2570 = vpop.f32.mrb[0].mxu0
      %2571 = vdwg.mxu0
      %v2572 = vadd.f32 %v775, %v2542
      %v2573 = vadd.f32 %v776, %v2545
      %v2574 = vadd.f32 %v777, %v2550
      %v2575 = vadd.f32 %v778, %v2553
      %v2576 = vadd.f32 %v779, %v2558
      %v2577 = vadd.f32 %v780, %v2561
      %v2578 = vadd.f32 %v781, %v2566
      %v2579 = vadd.f32 %v782, %v2569
      %v2580 = vld [vmem:[%s8] sm:$0x1]
      %v2582 = vlaneseq
      %v2583 = vshrl.u32 %v2582, 7
      %v2584 = vsub.s32 0, %v2583
      %v2585 = vrot.slane %v2580, %v2584
      %v2587 = vadd.f32 %v2572, %v2585
      %v2588 = vadd.f32 %v2573, %v2585
      %v2589 = vadd.f32 %v2574, %v2585
      %v2590 = vadd.f32 %v2575, %v2585
      %v2591 = vadd.f32 %v2576, %v2585
      %v2592 = vadd.f32 %v2577, %v2585
      %v2593 = vadd.f32 %v2578, %v2585
      %v2594 = vadd.f32 %v2579, %v2585
      %v2595 = vld [vmem:[%s9] sm:$0x1]
      %v2596 = vld [vmem:[%s10] sm:$0x1]
      %v2597 = vsel %vm785, %v2587, 0.0
      %2598 = vadd.xlane.f32.xlu0 %v2597
      %v2599 = vpop.xlane.xlu0 %2598
      %v2600 = vsel %vm785, %v2588, 0.0
      %2601 = vadd.xlane.f32.xlu0 %v2600
      %v2602 = vpop.xlane.xlu0 %2601
      %v2603 = vsel %vm785, %v2589, 0.0
      %2604 = vadd.xlane.f32.xlu0 %v2603
      %v2605 = vpop.xlane.xlu0 %2604
      %v2606 = vsel %vm785, %v2590, 0.0
      %2607 = vadd.xlane.f32.xlu0 %v2606
      %v2608 = vpop.xlane.xlu0 %2607
      %v2609 = vsel %vm785, %v2591, 0.0
      %2610 = vadd.xlane.f32.xlu0 %v2609
      %v2611 = vpop.xlane.xlu0 %2610
      %v2612 = vsel %vm785, %v2592, 0.0
      %2613 = vadd.xlane.f32.xlu0 %v2612
      %v2614 = vpop.xlane.xlu0 %2613
      %v2615 = vsel %vm785, %v2593, 0.0
      %2616 = vadd.xlane.f32.xlu0 %v2615
      %v2617 = vpop.xlane.xlu0 %2616
      %v2618 = vsel %vm785, %v2594, 0.0
      %2619 = vadd.xlane.f32.xlu0 %v2618
      %v2620 = vpop.xlane.xlu0 %2619
      %v2621 = vmul.f32 %v2599, %v810
      %v2622 = vmul.f32 %v2602, %v810
      %v2623 = vmul.f32 %v2605, %v810
      %v2624 = vmul.f32 %v2608, %v810
      %v2625 = vmul.f32 %v2611, %v810
      %v2626 = vmul.f32 %v2614, %v810
      %v2627 = vmul.f32 %v2617, %v810
      %v2628 = vmul.f32 %v2620, %v810
      %v2629 = vsub.f32 %v2587, %v2621
      %v2630 = vsub.f32 %v2588, %v2622
      %v2631 = vsub.f32 %v2589, %v2623
      %v2632 = vsub.f32 %v2590, %v2624
      %v2633 = vsub.f32 %v2591, %v2625
      %v2634 = vsub.f32 %v2592, %v2626
      %v2635 = vsub.f32 %v2593, %v2627
      %v2636 = vsub.f32 %v2594, %v2628
      %v2637 = vmul.f32 %v2629, %v2629
      %v2638 = vmul.f32 %v2630, %v2630
      %v2639 = vmul.f32 %v2631, %v2631
      %v2640 = vmul.f32 %v2632, %v2632
      %v2641 = vmul.f32 %v2633, %v2633
      %v2642 = vmul.f32 %v2634, %v2634
      %v2643 = vmul.f32 %v2635, %v2635
      %v2644 = vmul.f32 %v2636, %v2636
      %v2645 = vsel %vm785, %v2637, 0.0
      %2646 = vadd.xlane.f32.xlu0 %v2645
      %v2647 = vpop.xlane.xlu0 %2646
      %v2648 = vsel %vm785, %v2638, 0.0
      %2649 = vadd.xlane.f32.xlu0 %v2648
      %v2650 = vpop.xlane.xlu0 %2649
      %v2651 = vsel %vm785, %v2639, 0.0
      %2652 = vadd.xlane.f32.xlu0 %v2651
      %v2653 = vpop.xlane.xlu0 %2652
      %v2654 = vsel %vm785, %v2640, 0.0
      %2655 = vadd.xlane.f32.xlu0 %v2654
      %v2656 = vpop.xlane.xlu0 %2655
      %v2657 = vsel %vm785, %v2641, 0.0
      %2658 = vadd.xlane.f32.xlu0 %v2657
      %v2659 = vpop.xlane.xlu0 %2658
      %v2660 = vsel %vm785, %v2642, 0.0
      %2661 = vadd.xlane.f32.xlu0 %v2660
      %v2662 = vpop.xlane.xlu0 %2661
      %v2663 = vsel %vm785, %v2643, 0.0
      %2664 = vadd.xlane.f32.xlu0 %v2663
      %v2665 = vpop.xlane.xlu0 %2664
      %v2666 = vsel %vm785, %v2644, 0.0
      %2667 = vadd.xlane.f32.xlu0 %v2666
      %v2668 = vpop.xlane.xlu0 %2667
      %v2669 = vmul.f32 %v2647, %v810
      %v2670 = vmul.f32 %v2650, %v810
      %v2671 = vmul.f32 %v2653, %v810
      %v2672 = vmul.f32 %v2656, %v810
      %v2673 = vmul.f32 %v2659, %v810
      %v2674 = vmul.f32 %v2662, %v810
      %v2675 = vmul.f32 %v2665, %v810
      %v2676 = vmul.f32 %v2668, %v810
      %v2677 = vadd.f32 %v2669, 1e-05
      %v2678 = vadd.f32 %v2670, 1e-05
      %v2679 = vadd.f32 %v2671, 1e-05
      %v2680 = vadd.f32 %v2672, 1e-05
      %v2681 = vadd.f32 %v2673, 1e-05
      %v2682 = vadd.f32 %v2674, 1e-05
      %v2683 = vadd.f32 %v2675, 1e-05
      %v2684 = vadd.f32 %v2676, 1e-05
      %v2685 = vrsqrt.pop %v2677
      %v2686 = vrsqrt.pop %v2678
      %v2687 = vrsqrt.pop %v2679
      %v2688 = vrsqrt.pop %v2680
      %v2689 = vrsqrt.pop %v2681
      %v2690 = vrsqrt.pop %v2682
      %v2691 = vrsqrt.pop %v2683
      %v2692 = vrsqrt.pop %v2684
      %v2693 = vmul.f32 %v2629, %v2685
      %v2694 = vmul.f32 %v2630, %v2686
      %v2695 = vmul.f32 %v2631, %v2687
      %v2696 = vmul.f32 %v2632, %v2688
      %v2697 = vmul.f32 %v2633, %v2689
      %v2698 = vmul.f32 %v2634, %v2690
      %v2699 = vmul.f32 %v2635, %v2691
      %v2700 = vmul.f32 %v2636, %v2692
      %v2702 = vlaneseq
      %v2703 = vshrl.u32 %v2702, 7
      %v2704 = vsub.s32 0, %v2703
      %v2705 = vrot.slane %v2595, %v2704
      %v2707 = vmul.f32 %v2693, %v2705
      %v2708 = vmul.f32 %v2694, %v2705
      %v2709 = vmul.f32 %v2695, %v2705
      %v2710 = vmul.f32 %v2696, %v2705
      %v2711 = vmul.f32 %v2697, %v2705
      %v2712 = vmul.f32 %v2698, %v2705
      %v2713 = vmul.f32 %v2699, %v2705
      %v2714 = vmul.f32 %v2700, %v2705
      %v2716 = vlaneseq
      %v2717 = vshrl.u32 %v2716, 7
      %v2718 = vsub.s32 0, %v2717
      %v2719 = vrot.slane %v2596, %v2718
      %v2721 = vadd.f32 %v2707, %v2719
      %v2722 = vadd.f32 %v2708, %v2719
      %v2723 = vadd.f32 %v2709, %v2719
      %v2724 = vadd.f32 %v2710, %v2719
      %v2725 = vadd.f32 %v2711, %v2719
      %v2726 = vadd.f32 %v2712, %v2719
      %v2727 = vadd.f32 %v2713, %v2719
      %v2728 = vadd.f32 %v2714, %v2719
      %v2729 = vpack.c.bf16 %v2722, %v2721
      %v2730 = vpack.c.bf16 %v2724, %v2723
      %v2731 = vpack.c.bf16 %v2726, %v2725
      %v2732 = vpack.c.bf16 %v2728, %v2727
      %v2733 = vld [vmem:[%s11] sm:$0xf]
      %v2734 = vld [vmem:[%s11 + $0x4] sm:$0xf]
      %v2735 = vld [vmem:[%s11 + $0x8] sm:$0xf]
      %v2736 = vld [vmem:[%s11 + $0xc] sm:$0xf]
      %v2737 = vld [vmem:[%s12] sm:$0x1]
      %v2739 = vlaneseq
      %v2740 = vshrl.u32 %v2739, 7
      %v2741 = vsub.s32 0, %v2740
      %v2742 = vrot.slane %v2737, %v2741
      %v2748 = vunpack.c.l.b16 %v2733
      %v2749 = vunpack.c.l.b16 %v2734
      %v2750 = vunpack.c.l.b16 %v2735
      %v2751 = vunpack.c.l.b16 %v2736
      %v2752 = vpack.c.b16 %v2749, %v2748
      %v2753 = vpack.c.b16 %v2751, %v2750
      %v2757 = vsel %vm785, %v2729, 0
      %v2760 = vsel %vm785, %v2730, 0
      %v2763 = vsel %vm785, %v2731, 0
      %v2766 = vsel %vm785, %v2732, 0
      %2768 = vmatprep.subr.bf16.mxu0 0
      %2769 = vmatpush1.bf16.msra.mxu0 %v2752
      %2770 = vmatprep.subr.bf16.mxu0 0
      %2771 = vmatpush1.bf16.msra.mxu0 %v2753
      %2772 = vmatprep.subr.bf16.mxu0 0
      %2773 = vmatpush1.bf16.msra.mxu0 0
      %2774 = vmatprep.subr.bf16.mxu0 0
      %2775 = vmatpush1.bf16.msra.mxu0 0
      %2776 = vmatprep.subr.bf16.mxu0 0
      %2777 = vmatpush1.bf16.msra.mxu0 0
      %2778 = vmatprep.subr.bf16.mxu0 0
      %2779 = vmatpush1.bf16.msra.mxu0 0
      %2780 = vmatprep.subr.bf16.mxu0 0
      %2781 = vmatpush1.bf16.msra.mxu0 0
      %2782 = vmatprep.subr.bf16.mxu0 0
      %2783 = vmatpush1.bf16.msra.mxu0 0
      %2784 = vmatprep.subr.bf16.mxu0 0
      %2785 = vmatpush1.bf16.msra.mxu0 0
      %2786 = vmatprep.subr.bf16.mxu0 0
      %2787 = vmatpush1.bf16.msra.mxu0 0
      %2788 = vmatprep.subr.bf16.mxu0 0
      %2789 = vmatpush1.bf16.msra.mxu0 0
      %2790 = vmatprep.subr.bf16.mxu0 0
      %2791 = vmatpush1.bf16.msra.mxu0 0
      %2792 = vmatprep.subr.bf16.mxu0 0
      %2793 = vmatpush1.bf16.msra.mxu0 0
      %2794 = vmatprep.subr.bf16.mxu0 0
      %2795 = vmatpush1.bf16.msra.mxu0 0
      %2796 = vmatprep.subr.bf16.mxu0 0
      %2797 = vmatpush1.bf16.msra.mxu0 0
      %2798 = vmatprep.subr.bf16.mxu0 0
      %2799 = vmatpush1.bf16.msra.mxu0 0
      %2800 = vmatprep.mubr.bf16.mxu0 0
      %2801 = vmatmul.mubr.bf16.gmra.mrb[0].mxu0 %v2757
      %v2802 = vpop.f32.mrb[0].mxu0
      %v2803 = vadd.f32 %v2742, %v2802
      %v2804 = vpop.f32.mrb[0].mxu0
      %v2805 = vpop.f32.mrb[0].mxu0
      %v2806 = vadd.f32 %v2742, %v2805
      %v2807 = vpop.f32.mrb[0].mxu0
      %2808 = vmatprep.mubr.bf16.mxu0 0
      %2809 = vmatmul.mubr.bf16.gmra.mrb[0].mxu0 %v2760
      %v2810 = vpop.f32.mrb[0].mxu0
      %v2811 = vadd.f32 %v2742, %v2810
      %v2812 = vpop.f32.mrb[0].mxu0
      %v2813 = vpop.f32.mrb[0].mxu0
      %v2814 = vadd.f32 %v2742, %v2813
      %v2815 = vpop.f32.mrb[0].mxu0
      %2816 = vmatprep.mubr.bf16.mxu0 0
      %2817 = vmatmul.mubr.bf16.gmra.mrb[0].mxu0 %v2763
      %v2818 = vpop.f32.mrb[0].mxu0
      %v2819 = vadd.f32 %v2742, %v2818
      %v2820 = vpop.f32.mrb[0].mxu0
      %v2821 = vpop.f32.mrb[0].mxu0
      %v2822 = vadd.f32 %v2742, %v2821
      %v2823 = vpop.f32.mrb[0].mxu0
      %2824 = vmatprep.mubr.bf16.mxu0 0
      %2825 = vmatmul.mubr.bf16.gmra.mrb[0].mxu0 %v2766
      %v2826 = vpop.f32.mrb[0].mxu0
      %v2827 = vadd.f32 %v2742, %v2826
      %v2828 = vpop.f32.mrb[0].mxu0
      %v2829 = vpop.f32.mrb[0].mxu0
      %v2830 = vadd.f32 %v2742, %v2829
      %v2831 = vpop.f32.mrb[0].mxu0
      %2832 = vdwg.mxu0
      %v2833 = vmul.f32 %v2803, 0.5
      %v2834 = vmul.f32 %v2806, 0.5
      %v2835 = vmul.f32 %v2811, 0.5
      %v2836 = vmul.f32 %v2814, 0.5
      %v2837 = vmul.f32 %v2819, 0.5
      %v2838 = vmul.f32 %v2822, 0.5
      %v2839 = vmul.f32 %v2827, 0.5
      %v2840 = vmul.f32 %v2830, 0.5
      %v2841 = vmul.f32 %v2803, 0.044715
      %v2842 = vmul.f32 %v2806, 0.044715
      %v2843 = vmul.f32 %v2811, 0.044715
      %v2844 = vmul.f32 %v2814, 0.044715
      %v2845 = vmul.f32 %v2819, 0.044715
      %v2846 = vmul.f32 %v2822, 0.044715
      %v2847 = vmul.f32 %v2827, 0.044715
      %v2848 = vmul.f32 %v2830, 0.044715
      %v2849 = vmul.f32 %v2841, %v2803
      %v2850 = vmul.f32 %v2842, %v2806
      %v2851 = vmul.f32 %v2843, %v2811
      %v2852 = vmul.f32 %v2844, %v2814
      %v2853 = vmul.f32 %v2845, %v2819
      %v2854 = vmul.f32 %v2846, %v2822
      %v2855 = vmul.f32 %v2847, %v2827
      %v2856 = vmul.f32 %v2848, %v2830
      %v2857 = vmul.f32 %v2849, %v2803
      %v2858 = vmul.f32 %v2850, %v2806
      %v2859 = vmul.f32 %v2851, %v2811
      %v2860 = vmul.f32 %v2852, %v2814
      %v2861 = vmul.f32 %v2853, %v2819
      %v2862 = vmul.f32 %v2854, %v2822
      %v2863 = vmul.f32 %v2855, %v2827
      %v2864 = vmul.f32 %v2856, %v2830
      %v2865 = vadd.f32 %v2803, %v2857
      %v2866 = vadd.f32 %v2806, %v2858
      %v2867 = vadd.f32 %v2811, %v2859
      %v2868 = vadd.f32 %v2814, %v2860
      %v2869 = vadd.f32 %v2819, %v2861
      %v2870 = vadd.f32 %v2822, %v2862
      %v2871 = vadd.f32 %v2827, %v2863
      %v2872 = vadd.f32 %v2830, %v2864
      %v2873 = vmul.f32 %v2865, 0.7978846
      %v2874 = vmul.f32 %v2866, 0.7978846
      %v2875 = vmul.f32 %v2867, 0.7978846
      %v2876 = vmul.f32 %v2868, 0.7978846
      %v2877 = vmul.f32 %v2869, 0.7978846
      %v2878 = vmul.f32 %v2870, 0.7978846
      %v2879 = vmul.f32 %v2871, 0.7978846
      %v2880 = vmul.f32 %v2872, 0.7978846
      %v2881 = vtanh.pop %v2873
      %v2882 = vtanh.pop %v2874
      %v2883 = vtanh.pop %v2875
      %v2884 = vtanh.pop %v2876
      %v2885 = vtanh.pop %v2877
      %v2886 = vtanh.pop %v2878
      %v2887 = vtanh.pop %v2879
      %v2888 = vtanh.pop %v2880
      %v2889 = vadd.f32 %v2881, 1.0
      %v2890 = vadd.f32 %v2882, 1.0
      %v2891 = vadd.f32 %v2883, 1.0
      %v2892 = vadd.f32 %v2884, 1.0
      %v2893 = vadd.f32 %v2885, 1.0
      %v2894 = vadd.f32 %v2886, 1.0
      %v2895 = vadd.f32 %v2887, 1.0
      %v2896 = vadd.f32 %v2888, 1.0
      %v2897 = vmul.f32 %v2833, %v2889
      %v2898 = vmul.f32 %v2834, %v2890
      %v2899 = vmul.f32 %v2835, %v2891
      %v2900 = vmul.f32 %v2836, %v2892
      %v2901 = vmul.f32 %v2837, %v2893
      %v2902 = vmul.f32 %v2838, %v2894
      %v2903 = vmul.f32 %v2839, %v2895
      %v2904 = vmul.f32 %v2840, %v2896
      %v2905 = vpack.c.bf16 %v2898, %v2897
      %v2906 = vpack.c.bf16 %v2900, %v2899
      %v2907 = vpack.c.bf16 %v2902, %v2901
      %v2908 = vpack.c.bf16 %v2904, %v2903
      %v2909 = vld [vmem:[%s13] sm:$0xf]
      %v2910 = vld [vmem:[%s13 + $0x4] sm:$0xf]
      %v2911 = vld [vmem:[%s13 + $0x8] sm:$0xf]
      %v2912 = vld [vmem:[%s13 + $0xc] sm:$0xf]
      %v2913 = vld [vmem:[%s13 + $0x10] sm:$0xf]
      %v2914 = vld [vmem:[%s13 + $0x14] sm:$0xf]
      %v2915 = vld [vmem:[%s13 + $0x18] sm:$0xf]
      %v2916 = vld [vmem:[%s13 + $0x1c] sm:$0xf]
      %v2917 = vld [vmem:[%s13 + $0x20] sm:$0xf]
      %v2918 = vld [vmem:[%s13 + $0x24] sm:$0xf]
      %v2919 = vld [vmem:[%s13 + $0x28] sm:$0xf]
      %v2920 = vld [vmem:[%s13 + $0x2c] sm:$0xf]
      %v2921 = vld [vmem:[%s13 + $0x30] sm:$0xf]
      %v2922 = vld [vmem:[%s13 + $0x34] sm:$0xf]
      %v2923 = vld [vmem:[%s13 + $0x38] sm:$0xf]
      %v2924 = vld [vmem:[%s13 + $0x3c] sm:$0xf]
      %v2925 = vld [vmem:[%s14] sm:$0x1]
      %v2927 = vlaneseq
      %v2928 = vshrl.u32 %v2927, 7
      %v2929 = vsub.s32 0, %v2928
      %v2930 = vrot.slane %v2925, %v2929
      %v2948 = vunpack.c.l.b16 %v2909
      %v2949 = vunpack.c.l.b16 %v2910
      %v2950 = vunpack.c.l.b16 %v2911
      %v2951 = vunpack.c.l.b16 %v2912
      %v2952 = vunpack.c.l.b16 %v2913
      %v2953 = vunpack.c.l.b16 %v2914
      %v2954 = vunpack.c.l.b16 %v2915
      %v2955 = vunpack.c.l.b16 %v2916
      %v2956 = vunpack.c.l.b16 %v2917
      %v2957 = vunpack.c.l.b16 %v2918
      %v2958 = vunpack.c.l.b16 %v2919
      %v2959 = vunpack.c.l.b16 %v2920
      %v2960 = vunpack.c.l.b16 %v2921
      %v2961 = vunpack.c.l.b16 %v2922
      %v2962 = vunpack.c.l.b16 %v2923
      %v2963 = vunpack.c.l.b16 %v2924
      %v2964 = vpack.c.b16 %v2949, %v2948
      %v2965 = vpack.c.b16 %v2951, %v2950
      %v2966 = vpack.c.b16 %v2953, %v2952
      %v2967 = vpack.c.b16 %v2955, %v2954
      %v2968 = vpack.c.b16 %v2957, %v2956
      %v2969 = vpack.c.b16 %v2959, %v2958
      %v2970 = vpack.c.b16 %v2961, %v2960
      %v2971 = vpack.c.b16 %v2963, %v2962
      %2980 = vmatprep.subr.bf16.mxu0 0
      %2981 = vmatpush1.bf16.msra.mxu0 %v2964
      %2982 = vmatprep.subr.bf16.mxu0 0
      %2983 = vmatpush1.bf16.msra.mxu0 %v2965
      %2984 = vmatprep.subr.bf16.mxu0 0
      %2985 = vmatpush1.bf16.msra.mxu0 %v2966
      %2986 = vmatprep.subr.bf16.mxu0 0
      %2987 = vmatpush1.bf16.msra.mxu0 %v2967
      %2988 = vmatprep.subr.bf16.mxu0 0
      %2989 = vmatpush1.bf16.msra.mxu0 %v2968
      %2990 = vmatprep.subr.bf16.mxu0 0
      %2991 = vmatpush1.bf16.msra.mxu0 %v2969
      %2992 = vmatprep.subr.bf16.mxu0 0
      %2993 = vmatpush1.bf16.msra.mxu0 %v2970
      %2994 = vmatprep.subr.bf16.mxu0 0
      %2995 = vmatpush1.bf16.msra.mxu0 %v2971
      %2996 = vmatprep.subr.bf16.mxu0 0
      %2997 = vmatpush1.bf16.msra.mxu0 0
      %2998 = vmatprep.subr.bf16.mxu0 0
      %2999 = vmatpush1.bf16.msra.mxu0 0
      %3000 = vmatprep.subr.bf16.mxu0 0
      %3001 = vmatpush1.bf16.msra.mxu0 0
      %3002 = vmatprep.subr.bf16.mxu0 0
      %3003 = vmatpush1.bf16.msra.mxu0 0
      %3004 = vmatprep.subr.bf16.mxu0 0
      %3005 = vmatpush1.bf16.msra.mxu0 0
      %3006 = vmatprep.subr.bf16.mxu0 0
      %3007 = vmatpush1.bf16.msra.mxu0 0
      %3008 = vmatprep.subr.bf16.mxu0 0
      %3009 = vmatpush1.bf16.msra.mxu0 0
      %3010 = vmatprep.subr.bf16.mxu0 0
      %3011 = vmatpush1.bf16.msra.mxu0 0
      %3012 = vmatprep.mubr.bf16.mxu0 0
      %3013 = vmatmul.mubr.bf16.gmra.mrb[0].mxu0 %v2905
      %v3014 = vpop.f32.mrb[0].mxu0
      %v3015 = vadd.f32 %v2930, %v3014
      %v3016 = vpop.f32.mrb[0].mxu0
      %v3017 = vpop.f32.mrb[0].mxu0
      %v3018 = vadd.f32 %v2930, %v3017
      %v3019 = vpop.f32.mrb[0].mxu0
      %3020 = vmatprep.mubr.bf16.mxu0 0
      %3021 = vmatmul.mubr.bf16.gmra.mrb[0].mxu0 %v2906
      %v3022 = vpop.f32.mrb[0].mxu0
      %v3023 = vadd.f32 %v2930, %v3022
      %v3024 = vpop.f32.mrb[0].mxu0
      %v3025 = vpop.f32.mrb[0].mxu0
      %v3026 = vadd.f32 %v2930, %v3025
      %v3027 = vpop.f32.mrb[0].mxu0
      %3028 = vmatprep.mubr.bf16.mxu0 0
      %3029 = vmatmul.mubr.bf16.gmra.mrb[0].mxu0 %v2907
      %v3030 = vpop.f32.mrb[0].mxu0
      %v3031 = vadd.f32 %v2930, %v3030
      %v3032 = vpop.f32.mrb[0].mxu0
      %v3033 = vpop.f32.mrb[0].mxu0
      %v3034 = vadd.f32 %v2930, %v3033
      %v3035 = vpop.f32.mrb[0].mxu0
      %3036 = vmatprep.mubr.bf16.mxu0 0
      %3037 = vmatmul.mubr.bf16.gmra.mrb[0].mxu0 %v2908
      %v3038 = vpop.f32.mrb[0].mxu0
      %v3039 = vadd.f32 %v2930, %v3038
      %v3040 = vpop.f32.mrb[0].mxu0
      %v3041 = vpop.f32.mrb[0].mxu0
      %v3042 = vadd.f32 %v2930, %v3041
      %v3043 = vpop.f32.mrb[0].mxu0
      %3044 = vdwg.mxu0
      %v3045 = vadd.f32 %v2587, %v3015
      %v3046 = vadd.f32 %v2588, %v3018
      %v3047 = vadd.f32 %v2589, %v3023
      %v3048 = vadd.f32 %v2590, %v3026
      %v3049 = vadd.f32 %v2591, %v3031
      %v3050 = vadd.f32 %v2592, %v3034
      %v3051 = vadd.f32 %v2593, %v3039
      %v3052 = vadd.f32 %v2594, %v3042
      %v3053 = vpack.c.bf16 %v3046, %v3045
      %v3054 = vpack.c.bf16 %v3048, %v3047
      %v3055 = vpack.c.bf16 %v3050, %v3049
      %v3056 = vpack.c.bf16 %v3052, %v3051
      %v3061 = vunpack.c.l.b16 %v3053
      %v3062 = vunpack.c.h.b16 %v3053
      %v3063 = vunpack.c.l.b16 %v3054
      %v3064 = vunpack.c.h.b16 %v3054
      %v3065 = vunpack.c.l.b16 %v3055
      %v3066 = vunpack.c.h.b16 %v3055
      %v3067 = vunpack.c.l.b16 %v3056
      %v3068 = vunpack.c.h.b16 %v3056
      %v3069 = vpack.c.b16 %v3061, %v3061
      %v3070 = vpack.c.b16 %v3062, %v3062
      %v3071 = vpack.c.b16 %v3063, %v3063
      %v3072 = vpack.c.b16 %v3064, %v3064
      %v3073 = vpack.c.b16 %v3065, %v3065
      %v3074 = vpack.c.b16 %v3066, %v3066
      %v3075 = vpack.c.b16 %v3067, %v3067
      %v3076 = vpack.c.b16 %v3068, %v3068
      %vm3085 = vcmask 257024
      %3086 = vst.msk [vmem:[%s494] sm:$0xf] %vm3085, %v3069
      %3087 = vst.msk [vmem:[%s494 + $0x4] sm:$0xf] %vm3085, %v3070
      %3088 = vst.msk [vmem:[%s494 + $0x8] sm:$0xf] %vm3085, %v3071
      %3089 = vst.msk [vmem:[%s494 + $0xc] sm:$0xf] %vm3085, %v3072
      %3090 = vst.msk [vmem:[%s494 + $0x10] sm:$0xf] %vm3085, %v3073
      %3091 = vst.msk [vmem:[%s494 + $0x14] sm:$0xf] %vm3085, %v3074
      %3092 = vst.msk [vmem:[%s494 + $0x18] sm:$0xf] %vm3085, %v3075
      %3093 = vst.msk [vmem:[%s494 + $0x1c] sm:$0xf] %vm3085, %v3076
      %p3094 = scmp.lt.s32.totalorder %s26, 1
      %s3095 = scalar_select %p3094, %s26, 1
      %s3096 = smul.addr %s3095, 8
      %s3097 = smul.addr %s3096, 4
      %s3098 = scalar_lea.vmem %s15, %s3097
      // Predicated region
      $region81: #{globalstage_forward.3} parent=79 // pred_check
        %p3099 = pneg %p364
      $region82: #{globalstage_forward.3} parent=79 // pred_check_branch
        %3101 = sbr.rel (%p3099) target = $region84
      $region83: #{globalstage_forward.3} parent=79 // pred_region
        _
      $region84: #{globalstage_forward.3} parent=79 // pred_fallthru
        _
    $region80: #{globalstage_forward.3} parent=5 // pred_fallthru
      _
    %p3102 = scmp.le.s32.totalorder 2, %s21
    // Predicated region
    $region85: #{globalstage_forward.3} parent=5 // pred_check
      %p3103 = pneg %p3102
    $region86: #{globalstage_forward.3} parent=5 // pred_check_branch
      %3105 = sbr.rel (%p3103) target = $region88
    $region87: #{globalstage_forward.3} parent=5 // pred_region
      %s3106 = ssub.s32 %s21, 2
      // Predicated region
      $region89: #{globalstage_forward.3} parent=87 // pred_check
        %p3107 = pneg %p370
      $region90: #{globalstage_forward.3} parent=87 // pred_check_branch
        %3109 = sbr.rel (%p3107) target = $region92
      $region91: #{globalstage_forward.3} parent=87 // pred_region
        %p3110 = scmp.lt.s32.totalorder %s27, 1
        %s3111 = scalar_select %p3110, %s27, 1
        %s3112 = smul.addr %s3111, 8
        %s3113 = smul.addr %s3112, 4
        %s3114 = scalar_lea.vmem %s15, %s3113
      $region92: #{globalstage_forward.3} parent=87 // pred_fallthru
        _
    $region88: #{globalstage_forward.3} parent=5 // pred_fallthru
      _
  $region6: #{globalstage_forward.3} parent=0 // loop_footer
    %s25 = sadd.s32 1, %s21
  $region7: #{globalstage_forward.3} parent=0 // loop_footer_branch
    %20 = sbr.rel target = $region3
  $region8: #{globalstage_forward.3} parent=0 // loop_exit
    _

</llo_original>
